<compile_context>
chip_gen: v7x
topology: tpu7x:2x2x1
jax: 0.10.0
libtpu: 0.0.40
codegen_flags: <defaults>
</compile_context>

<pallas_src>
import functools

import jax
import jax.numpy as jnp
from jax.experimental import pallas as pl
from jax.experimental.pallas import tpu as pltpu


def _mul_conv1x1_kernel(x_ref, s_ref, w_ref, o_ref):
    """One Cout block of the gated 1x1 conv.

    x_ref : (C, HW)         full activation slab (resident across grid steps)
    s_ref : (C, 1)          per-input-channel gate (resident)
    w_ref : (cout_blk, C)   weight rows for this grid step (streamed)
    o_ref : (cout_blk, HW)  output rows for this grid step
    """
    xg = x_ref[...] * s_ref[...]                     # VPU, lane-broadcast of the gate
    o_ref[...] = jnp.dot(                            # MXU, f32 accumulate
        w_ref[...], xg, preferred_element_type=jnp.float32
    ).astype(o_ref.dtype)


def _pick_cout_block(cout):
    """Shape-based Cout block: ~96..128 rows, preferring an even block count so
    the blocks split evenly over two TensorCores on multi-TC chips."""
    for blk in (96, 128, 192, 64, 256):
        if cout % blk == 0 and (cout // blk) % 2 == 0:
            return blk
    for blk in (128, 96, 192, 64, 256):
        if cout % blk == 0:
            return blk
    return cout


@functools.partial(jax.jit, static_argnames=("cout_block",))
def mul_conv1x1(x662, x657, weight, *, cout_block=None):
    """x662: (1, C, 1, 1), x657: (1, C, H, W), weight: (Cout, C, 1, 1)."""
    n, c, h, w = x657.shape
    assert n == 1  # TODO(synk): fold N into HW for batched inputs
    cout = weight.shape[0]
    hw = h * w

    x2d = x657.reshape(c, hw)          # free reshape (contiguous NCHW, N == 1)
    s_col = x662.reshape(c, 1)         # free
    w2d = weight.reshape(cout, c)      # free -- no transpose / no HBM copy

    if cout_block is None:
        cout_block = _pick_cout_block(cout)
    assert cout % cout_block == 0
    grid = (cout // cout_block,)

    bytes_per_el = jnp.dtype(x657.dtype).itemsize
    cost = pl.CostEstimate(
        flops=2 * cout * c * hw,
        transcendentals=0,
        bytes_accessed=(c * hw + c + cout * c + cout * hw) * bytes_per_el,
    )

    out2d = pl.pallas_call(
        _mul_conv1x1_kernel,
        out_shape=jax.ShapeDtypeStruct((cout, hw), x657.dtype),
        grid=grid,
        in_specs=[
            pl.BlockSpec((c, hw), lambda j: (0, 0)),          # activations (resident)
            pl.BlockSpec((c, 1), lambda j: (0, 0)),           # channel gate (resident)
            pl.BlockSpec((cout_block, c), lambda j: (j, 0)),  # weight rows (streamed)
        ],
        out_specs=pl.BlockSpec((cout_block, hw), lambda j: (j, 0)),
        compiler_params=pltpu.CompilerParams(
            dimension_semantics=("parallel",),   # independent Cout blocks
            vmem_limit_bytes=16 << 20,
        ),
        cost_estimate=cost,
    )(x2d, s_col, w2d)

    # (Cout, HW) -> (1, Cout, H, W) : free reshape, no transpose needed.
    return out2d.reshape(1, cout, h, w)


if __name__ == "__main__":
    key = jax.random.PRNGKey(0)
    k1, k2, k3 = jax.random.split(key, 3)

    # Shapes implied by the module (already small: ~4 MB total traffic).
    C_IN, C_OUT, H, W = 2304, 384, 7, 7

    x657 = jax.random.normal(k1, (1, C_IN, H, W), dtype=jnp.float32)
    x662 = jax.random.normal(k2, (1, C_IN, 1, 1), dtype=jnp.float32)
    # Deterministic weight init (kaiming-uniform-ish bound, exact dist irrelevant)
    bound = 1.0 / (C_IN ** 0.5)
    weight = jax.random.uniform(
        k3, (C_OUT, C_IN, 1, 1), dtype=jnp.float32, minval=-bound, maxval=bound)

    out = mul_conv1x1(x662, x657, weight)
    out = jax.block_until_ready(out)

    # Pure-JAX reference: broadcast-mul then 1x1 conv as einsum (module semantics).
    gated = x662 * x657                                     # (1, C, H, W)
    ref = jnp.einsum("oc,nchw->nohw", weight.reshape(C_OUT, C_IN), gated)

    assert out.shape == (1, C_OUT, H, W), out.shape
    assert jnp.allclose(out, ref, atol=1e-3, rtol=1e-3), "mismatch vs reference"
    print("KERNEL_OK")
</pallas_src>

<mosaic_0001>
module attributes {stable_mosaic.version = 11 : i64} {
  func.func @_mul_conv1x1_kernel(%arg0: i32, %arg1: memref<2304x49xf32, #tpu.memory_space<vmem>>, %arg2: memref<2304x1xf32, #tpu.memory_space<vmem>>, %arg3: memref<96x2304xf32, #tpu.memory_space<vmem>>, %arg4: memref<96x49xf32, #tpu.memory_space<vmem>>) attributes {dimension_semantics = [#tpu.dimension_semantics<parallel>], iteration_bounds = array<i64: 4>, scalar_prefetch = 0 : i64, scratch_operands = 0 : i64, tpu.core_type = #tpu.core_type<tc>, window_params = [{pipeline_mode = #tpu.pipeline_mode<synchronous>, transform_indices = @transform_0, window_bounds = array<i64: 2304, 49>}, {pipeline_mode = #tpu.pipeline_mode<synchronous>, transform_indices = @transform_1, window_bounds = array<i64: 2304, 1>}, {transform_indices = @transform_2, window_bounds = array<i64: 96, 2304>}, {transform_indices = @transform_3, window_bounds = array<i64: 96, 49>}]} {
    %c0 = arith.constant 0 : index
    %c0_0 = arith.constant 0 : index
    %0 = vector.load %arg1[%c0, %c0_0] : memref<2304x49xf32, #tpu.memory_space<vmem>>, vector<2304x49xf32>
    %c0_1 = arith.constant 0 : index
    %c0_2 = arith.constant 0 : index
    %1 = vector.load %arg2[%c0_1, %c0_2] : memref<2304x1xf32, #tpu.memory_space<vmem>>, vector<2304x1xf32>
    %2 = vector.broadcast %1 : vector<2304x1xf32> to vector<2304x49xf32>
    %3 = arith.mulf %0, %2 : vector<2304x49xf32>
    %c0_3 = arith.constant 0 : index
    %c0_4 = arith.constant 0 : index
    %4 = vector.load %arg3[%c0_3, %c0_4] : memref<96x2304xf32, #tpu.memory_space<vmem>>, vector<96x2304xf32>
    %cst = arith.constant dense<0.000000e+00> : vector<96x49xf32>
    %5 = tpu.matmul %4, %3, %cst {dimension_numbers = #tpu.dot_dimension_numbers<[1], [0], [0], [1], [0, 0, 1, 1], [], []>} : vector<96x2304xf32>, vector<2304x49xf32>, vector<96x49xf32> -> vector<96x49xf32>
    %c0_5 = arith.constant 0 : index
    %c0_6 = arith.constant 0 : index
    %6 = vector.load %arg4[%c0_5, %c0_6] : memref<96x49xf32, #tpu.memory_space<vmem>>, vector<96x49xf32>
    tpu.vector_store %arg4[%c0_5, %c0_6], %5 {strides = array<i32>} : memref<96x49xf32, #tpu.memory_space<vmem>>, vector<96x49xf32>,
    return
  }
  func.func @transform_0(%arg0: i32) -> (i32, i32) {
    %c0_i32 = arith.constant 0 : i32
    %c0_i32_0 = arith.constant 0 : i32
    %c0_i32_1 = arith.constant 0 : i32
    return %c0_i32, %c0_i32_0 : i32, i32
  }
  func.func @transform_1(%arg0: i32) -> (i32, i32) {
    %c0_i32 = arith.constant 0 : i32
    %c0_i32_0 = arith.constant 0 : i32
    %c0_i32_1 = arith.constant 0 : i32
    return %c0_i32, %c0_i32_0 : i32, i32
  }
  func.func @transform_2(%arg0: i32) -> (i32, i32) {
    %c0_i32 = arith.constant 0 : i32
    %c0_i32_0 = arith.constant 0 : i32
    return %arg0, %c0_i32 : i32, i32
  }
  func.func @transform_3(%arg0: i32) -> (i32, i32) {
    %c0_i32 = arith.constant 0 : i32
    %c0_i32_0 = arith.constant 0 : i32
    return %arg0, %c0_i32 : i32, i32
  }
}

</mosaic_0001>

<llo_original>
// kernel: mul_conv1x1.1
$region0: #{mul_conv1x1.1}
  #allocation0 [shape = 'u32[]', space=smem, size = 0x4, offset = 0x4, fixed_abs, tag = 'smem constant byte address 0x4 - core index']
  #allocation1 [shape = 'u32[144,128]{1,0:T(1,128)}', space=vmem, size = 0x12000, scoped, tag = 'internal scratch']
  %s0 = inlined_call_operand.vmem [shape: f32[2304,49], index: 0, kind: input, shape index: {}]
  %s1 = inlined_call_operand.vmem [shape: f32[2304,1], index: 1, kind: input, shape index: {}]
  %s2 = inlined_call_operand.vmem [shape: f32[384,2304], index: 2, kind: input, shape index: {}]
  %s3 = inlined_call_operand.vmem [shape: f32[384,49], index: 3, kind: output, shape index: {}]
  %s4 = sld [smem:[#allocation0]]
  $region45: #{mul_conv1x1.1} parent=0
    _
  %s6 = ssub.s32 1, %s4
  %s7 = scalar_select 0, %s6, %s4
  loop: start=0, step=1, limit=6
  $region2: #{mul_conv1x1.1} parent=0 // loop_pre_header
    _
  $region3: #{mul_conv1x1.1} parent=0 // loop_header
    %s9 = sphi 0, %s13
    %p10 = scmp.ge.s32.totalorder %s9, 6
    %s17 = sphi 0, %s17
    %s19 = sphi 0, %s17
    %s20 = sphi 0, %s19
    %s34 = sphi 0, %s20
    %s38 = sphi 0, %s38
    %s40 = sphi 0, %s38
    %s41 = sphi 0, %s40
    %s55 = sphi 0, %s41
    %s61 = sphi 0, %s63
    %s64 = sphi 0, %s61
    %s65 = sphi 0, %s64
    %s81 = sphi 0, %s65
    %s87 = sphi 0, %s89
    %s90 = sphi 0, %s87
    %s91 = sphi 0, %s90
    %s107 = sphi 0, %s91
  $region4: #{mul_conv1x1.1} parent=0 // loop_header_branch
    %12 = sbr.rel (%p10) target = $region8
  $region5: #{mul_conv1x1.1} parent=0 // loop_body
    %s14 = ssub.s32 %s9, 1
    %s15 = ssub.s32 %s9, 2
    %s16 = sadd.s32 %s9, 1
    %s18 = sadd.s32 %s17, 1
    %p21 = scmp.eq.s32.totalorder %s9, 3
    %p22 = scmp.ne.s32.totalorder %s17, %s19
    %p23 = scmp.eq.s32.totalorder %s9, 0
    %p24 = por %p22, %p23
    %p25 = scmp.ne.s32.totalorder %s17, %s19
    %p26 = scmp.eq.s32.totalorder %s14, 3
    %p27 = por %p25, %p26
    %p28 = scmp.ne.s32.totalorder %s19, %s20
    %p29 = scmp.eq.s32.totalorder %s14, 0
    %p30 = por %p28, %p29
    %p31 = scmp.ne.s32.totalorder %s19, %s20
    %p32 = scmp.eq.s32.totalorder %s15, 3
    %p33 = por %p31, %p32
    %p35 = scmp.ne.s32.totalorder %s20, %s34
    %p36 = scmp.eq.s32.totalorder %s15, 0
    %p37 = por %p35, %p36
    %s39 = sadd.s32 %s38, 1
    %p42 = scmp.eq.s32.totalorder %s9, 3
    %p43 = scmp.ne.s32.totalorder %s38, %s40
    %p44 = scmp.eq.s32.totalorder %s9, 0
    %p45 = por %p43, %p44
    %p46 = scmp.ne.s32.totalorder %s38, %s40
    %p47 = scmp.eq.s32.totalorder %s14, 3
    %p48 = por %p46, %p47
    %p49 = scmp.ne.s32.totalorder %s40, %s41
    %p50 = scmp.eq.s32.totalorder %s14, 0
    %p51 = por %p49, %p50
    %p52 = scmp.ne.s32.totalorder %s40, %s41
    %p53 = scmp.eq.s32.totalorder %s15, 3
    %p54 = por %p52, %p53
    %p56 = scmp.ne.s32.totalorder %s41, %s55
    %p57 = scmp.eq.s32.totalorder %s15, 0
    %p58 = por %p56, %p57
    %s59 = ssub.s32 %s9, %s16
    %p60 = scmp.eq.s32.totalorder %s59, 0
    %s62 = sadd.s32 %s61, 1
    %s63 = scalar_select %p60, %s61, %s62
    %p66 = pneg %p60
    %p67 = scmp.eq.s32.totalorder %s9, 3
    %p68 = por %p66, %p67
    %p69 = scmp.ne.s32.totalorder %s61, %s64
    %p70 = scmp.eq.s32.totalorder %s9, 0
    %p71 = por %p69, %p70
    %p72 = scmp.ne.s32.totalorder %s61, %s64
    %p73 = scmp.eq.s32.totalorder %s14, 3
    %p74 = por %p72, %p73
    %p75 = scmp.ne.s32.totalorder %s64, %s65
    %p76 = scmp.eq.s32.totalorder %s14, 0
    %p77 = por %p75, %p76
    %p78 = scmp.ne.s32.totalorder %s64, %s65
    %p79 = scmp.eq.s32.totalorder %s15, 3
    %p80 = por %p78, %p79
    %p82 = scmp.ne.s32.totalorder %s65, %s81
    %p83 = scmp.eq.s32.totalorder %s15, 0
    %p84 = por %p82, %p83
    %s85 = ssub.s32 %s9, %s16
    %p86 = scmp.eq.s32.totalorder %s85, 0
    %s88 = sadd.s32 %s87, 1
    %s89 = scalar_select %p86, %s87, %s88
    %p92 = pneg %p86
    %p93 = scmp.eq.s32.totalorder %s9, 3
    %p94 = por %p92, %p93
    %p95 = scmp.ne.s32.totalorder %s87, %s90
    %p96 = scmp.eq.s32.totalorder %s9, 0
    %p97 = por %p95, %p96
    %p98 = scmp.ne.s32.totalorder %s87, %s90
    %p99 = scmp.eq.s32.totalorder %s14, 3
    %p100 = por %p98, %p99
    %p101 = scmp.ne.s32.totalorder %s90, %s91
    %p102 = scmp.eq.s32.totalorder %s14, 0
    %p103 = por %p101, %p102
    %p104 = scmp.ne.s32.totalorder %s90, %s91
    %p105 = scmp.eq.s32.totalorder %s15, 3
    %p106 = por %p104, %p105
    %p108 = scmp.ne.s32.totalorder %s91, %s107
    %p109 = scmp.eq.s32.totalorder %s15, 0
    %p110 = por %p108, %p109
    %p111 = scmp.le.s32.totalorder 1, %s9
    %p112 = scmp.lt.s32.totalorder %s9, 5
    %p113 = pnand %p111, %p112
    %p114 = pneg %p113
    // Predicated region
    $region9: #{mul_conv1x1.1} parent=5 // pred_check
      _
    $region10: #{mul_conv1x1.1} parent=5 // pred_check_branch
      %116 = sbr.rel (%p113) target = $region12
    $region11: #{mul_conv1x1.1} parent=5 // pred_region
      %s117 = ssub.s32 %s9, 1
      // Predicated region
      $region13: #{mul_conv1x1.1} parent=11 // pred_check
        %p118 = pneg %p30
      $region14: #{mul_conv1x1.1} parent=11 // pred_check_branch
        %120 = sbr.rel (%p118) target = $region16
      $region15: #{mul_conv1x1.1} parent=11 // pred_region
        _
      $region16: #{mul_conv1x1.1} parent=11 // pred_fallthru
        _
      // Predicated region
      $region17: #{mul_conv1x1.1} parent=11 // pred_check
        %p121 = pneg %p51
      $region18: #{mul_conv1x1.1} parent=11 // pred_check_branch
        %123 = sbr.rel (%p121) target = $region20
      $region19: #{mul_conv1x1.1} parent=11 // pred_region
        _
      $region20: #{mul_conv1x1.1} parent=11 // pred_fallthru
        _
    $region12: #{mul_conv1x1.1} parent=5 // pred_fallthru
      _
    %p124 = scmp.lt.s32.totalorder %s9, 4
    // Predicated region
    $region21: #{mul_conv1x1.1} parent=5 // pred_check
      %p125 = pneg %p124
    $region22: #{mul_conv1x1.1} parent=5 // pred_check_branch
      %127 = sbr.rel (%p125) target = $region24
    $region23: #{mul_conv1x1.1} parent=5 // pred_region
      // Predicated region
      $region25: #{mul_conv1x1.1} parent=23 // pred_check
        %p128 = pneg %p71
      $region26: #{mul_conv1x1.1} parent=23 // pred_check_branch
        %130 = sbr.rel (%p128) target = $region28
      $region27: #{mul_conv1x1.1} parent=23 // pred_region
        %s131 = smul.u32 12, %s9
        %p132 = scmp.lt.s32.totalorder %s131, 47
        %s133 = scalar_select %p132, %s131, 47
        %s134 = smul.addr %s133, 18
        %s135 = smul.addr %s134, 8
        %s136 = scalar_lea.vmem %s2, %s135
        %s137 = smul.u32 12, %s9
      $region28: #{mul_conv1x1.1} parent=23 // pred_fallthru
        _
    $region24: #{mul_conv1x1.1} parent=5 // pred_fallthru
      _
    %p138 = scmp.le.s32.totalorder 1, %s9
    %p139 = scmp.lt.s32.totalorder %s9, 5
    %p140 = pnand %p138, %p139
    %p141 = pneg %p140
    // Predicated region
    $region29: #{mul_conv1x1.1} parent=5 // pred_check
      _
    $region30: #{mul_conv1x1.1} parent=5 // pred_check_branch
      %143 = sbr.rel (%p140) target = $region32
    $region31: #{mul_conv1x1.1} parent=5 // pred_region
      %s144 = ssub.s32 %s9, 1
      %p145 = pneg %p30
      %p146 = pneg %p27
      %p147 = pneg %p51
      %p148 = pneg %p48
      %s149 = smul.u32 12, %s14
      %p150 = scmp.lt.s32.totalorder %s149, 47
      %s151 = scalar_select %p150, %s149, 47
      %s152 = smul.addr %s151, 18
      %s153 = smul.addr %s152, 8
      %s154 = scalar_lea.vmem %s2, %s153
      %p155 = pneg %p77
      %p156 = pneg %p74
      %p157 = pneg %p103
      %p158 = pneg %p100
      %s159 = smul.u32 12, %s14
      %p160 = scmp.lt.s32.totalorder %s159, 47
      %s161 = scalar_select %p160, %s159, 47
      %s162 = smul.addr %s161, 8
      %s163 = scalar_lea.vmem %s3, %s162
      %s164 = smul.u32 12, %s14
      %p165 = scmp.lt.s32.totalorder %s164, 47
      %s166 = scalar_select %p165, %s164, 47
      %s167 = smul.addr %s166, 18
      %s168 = smul.addr %s167, 8
      %s169 = scalar_lea.vmem %s2, %s168
      %s170 = smul.u32 12, %s14
      %s171 = smul.u32 12, %s14
      %p172 = scmp.lt.s32.totalorder %s171, 47
      %s173 = scalar_select %p172, %s171, 47
      %s174 = smul.addr %s173, 8
      %s175 = scalar_lea.vmem %s3, %s174
      %s176 = smul.u32 12, %s14
      %v177 = vld [vmem:[%s0] sm:$0xff]
      %v178 = vld [vmem:[%s0 + $0x8] sm:$0xff]
      %v179 = vld [vmem:[%s0 + $0x10] sm:$0xff]
      %v180 = vld [vmem:[%s0 + $0x18] sm:$0xff]
      %v181 = vld [vmem:[%s0 + $0x20] sm:$0xff]
      %v182 = vld [vmem:[%s0 + $0x28] sm:$0xff]
      %v183 = vld [vmem:[%s0 + $0x30] sm:$0xff]
      %v184 = vld [vmem:[%s0 + $0x38] sm:$0xff]
      %v185 = vld [vmem:[%s0 + $0x40] sm:$0xff]
      %v186 = vld [vmem:[%s0 + $0x48] sm:$0xff]
      %v187 = vld [vmem:[%s0 + $0x50] sm:$0xff]
      %v188 = vld [vmem:[%s0 + $0x58] sm:$0xff]
      %v189 = vld [vmem:[%s0 + $0x60] sm:$0xff]
      %v190 = vld [vmem:[%s0 + $0x68] sm:$0xff]
      %v191 = vld [vmem:[%s0 + $0x70] sm:$0xff]
      %v192 = vld [vmem:[%s0 + $0x78] sm:$0xff]
      %v193 = vld [vmem:[%s0 + $0x80] sm:$0xff]
      %v194 = vld [vmem:[%s0 + $0x88] sm:$0xff]
      %v195 = vld [vmem:[%s0 + $0x90] sm:$0xff]
      %v196 = vld [vmem:[%s0 + $0x98] sm:$0xff]
      %v197 = vld [vmem:[%s0 + $0xa0] sm:$0xff]
      %v198 = vld [vmem:[%s0 + $0xa8] sm:$0xff]
      %v199 = vld [vmem:[%s0 + $0xb0] sm:$0xff]
      %v200 = vld [vmem:[%s0 + $0xb8] sm:$0xff]
      %v201 = vld [vmem:[%s0 + $0xc0] sm:$0xff]
      %v202 = vld [vmem:[%s0 + $0xc8] sm:$0xff]
      %v203 = vld [vmem:[%s0 + $0xd0] sm:$0xff]
      %v204 = vld [vmem:[%s0 + $0xd8] sm:$0xff]
      %v205 = vld [vmem:[%s0 + $0xe0] sm:$0xff]
      %v206 = vld [vmem:[%s0 + $0xe8] sm:$0xff]
      %v207 = vld [vmem:[%s0 + $0xf0] sm:$0xff]
      %v208 = vld [vmem:[%s0 + $0xf8] sm:$0xff]
      %v209 = vld [vmem:[%s0 + $0x100] sm:$0xff]
      %v210 = vld [vmem:[%s0 + $0x108] sm:$0xff]
      %v211 = vld [vmem:[%s0 + $0x110] sm:$0xff]
      %v212 = vld [vmem:[%s0 + $0x118] sm:$0xff]
      %v213 = vld [vmem:[%s0 + $0x120] sm:$0xff]
      %v214 = vld [vmem:[%s0 + $0x128] sm:$0xff]
      %v215 = vld [vmem:[%s0 + $0x130] sm:$0xff]
      %v216 = vld [vmem:[%s0 + $0x138] sm:$0xff]
      %v217 = vld [vmem:[%s0 + $0x140] sm:$0xff]
      %v218 = vld [vmem:[%s0 + $0x148] sm:$0xff]
      %v219 = vld [vmem:[%s0 + $0x150] sm:$0xff]
      %v220 = vld [vmem:[%s0 + $0x158] sm:$0xff]
      %v221 = vld [vmem:[%s0 + $0x160] sm:$0xff]
      %v222 = vld [vmem:[%s0 + $0x168] sm:$0xff]
      %v223 = vld [vmem:[%s0 + $0x170] sm:$0xff]
      %v224 = vld [vmem:[%s0 + $0x178] sm:$0xff]
      %v225 = vld [vmem:[%s0 + $0x180] sm:$0xff]
      %v226 = vld [vmem:[%s0 + $0x188] sm:$0xff]
      %v227 = vld [vmem:[%s0 + $0x190] sm:$0xff]
      %v228 = vld [vmem:[%s0 + $0x198] sm:$0xff]
      %v229 = vld [vmem:[%s0 + $0x1a0] sm:$0xff]
      %v230 = vld [vmem:[%s0 + $0x1a8] sm:$0xff]
      %v231 = vld [vmem:[%s0 + $0x1b0] sm:$0xff]
      %v232 = vld [vmem:[%s0 + $0x1b8] sm:$0xff]
      %v233 = vld [vmem:[%s0 + $0x1c0] sm:$0xff]
      %v234 = vld [vmem:[%s0 + $0x1c8] sm:$0xff]
      %v235 = vld [vmem:[%s0 + $0x1d0] sm:$0xff]
      %v236 = vld [vmem:[%s0 + $0x1d8] sm:$0xff]
      %v237 = vld [vmem:[%s0 + $0x1e0] sm:$0xff]
      %v238 = vld [vmem:[%s0 + $0x1e8] sm:$0xff]
      %v239 = vld [vmem:[%s0 + $0x1f0] sm:$0xff]
      %v240 = vld [vmem:[%s0 + $0x1f8] sm:$0xff]
      %v241 = vld [vmem:[%s0 + $0x200] sm:$0xff]
      %v242 = vld [vmem:[%s0 + $0x208] sm:$0xff]
      %v243 = vld [vmem:[%s0 + $0x210] sm:$0xff]
      %v244 = vld [vmem:[%s0 + $0x218] sm:$0xff]
      %v245 = vld [vmem:[%s0 + $0x220] sm:$0xff]
      %v246 = vld [vmem:[%s0 + $0x228] sm:$0xff]
      %v247 = vld [vmem:[%s0 + $0x230] sm:$0xff]
      %v248 = vld [vmem:[%s0 + $0x238] sm:$0xff]
      %v249 = vld [vmem:[%s0 + $0x240] sm:$0xff]
      %v250 = vld [vmem:[%s0 + $0x248] sm:$0xff]
      %v251 = vld [vmem:[%s0 + $0x250] sm:$0xff]
      %v252 = vld [vmem:[%s0 + $0x258] sm:$0xff]
      %v253 = vld [vmem:[%s0 + $0x260] sm:$0xff]
      %v254 = vld [vmem:[%s0 + $0x268] sm:$0xff]
      %v255 = vld [vmem:[%s0 + $0x270] sm:$0xff]
      %v256 = vld [vmem:[%s0 + $0x278] sm:$0xff]
      %v257 = vld [vmem:[%s0 + $0x280] sm:$0xff]
      %v258 = vld [vmem:[%s0 + $0x288] sm:$0xff]
      %v259 = vld [vmem:[%s0 + $0x290] sm:$0xff]
      %v260 = vld [vmem:[%s0 + $0x298] sm:$0xff]
      %v261 = vld [vmem:[%s0 + $0x2a0] sm:$0xff]
      %v262 = vld [vmem:[%s0 + $0x2a8] sm:$0xff]
      %v263 = vld [vmem:[%s0 + $0x2b0] sm:$0xff]
      %v264 = vld [vmem:[%s0 + $0x2b8] sm:$0xff]
      %v265 = vld [vmem:[%s0 + $0x2c0] sm:$0xff]
      %v266 = vld [vmem:[%s0 + $0x2c8] sm:$0xff]
      %v267 = vld [vmem:[%s0 + $0x2d0] sm:$0xff]
      %v268 = vld [vmem:[%s0 + $0x2d8] sm:$0xff]
      %v269 = vld [vmem:[%s0 + $0x2e0] sm:$0xff]
      %v270 = vld [vmem:[%s0 + $0x2e8] sm:$0xff]
      %v271 = vld [vmem:[%s0 + $0x2f0] sm:$0xff]
      %v272 = vld [vmem:[%s0 + $0x2f8] sm:$0xff]
      %v273 = vld [vmem:[%s0 + $0x300] sm:$0xff]
      %v274 = vld [vmem:[%s0 + $0x308] sm:$0xff]
      %v275 = vld [vmem:[%s0 + $0x310] sm:$0xff]
      %v276 = vld [vmem:[%s0 + $0x318] sm:$0xff]
      %v277 = vld [vmem:[%s0 + $0x320] sm:$0xff]
      %v278 = vld [vmem:[%s0 + $0x328] sm:$0xff]
      %v279 = vld [vmem:[%s0 + $0x330] sm:$0xff]
      %v280 = vld [vmem:[%s0 + $0x338] sm:$0xff]
      %v281 = vld [vmem:[%s0 + $0x340] sm:$0xff]
      %v282 = vld [vmem:[%s0 + $0x348] sm:$0xff]
      %v283 = vld [vmem:[%s0 + $0x350] sm:$0xff]
      %v284 = vld [vmem:[%s0 + $0x358] sm:$0xff]
      %v285 = vld [vmem:[%s0 + $0x360] sm:$0xff]
      %v286 = vld [vmem:[%s0 + $0x368] sm:$0xff]
      %v287 = vld [vmem:[%s0 + $0x370] sm:$0xff]
      %v288 = vld [vmem:[%s0 + $0x378] sm:$0xff]
      %v289 = vld [vmem:[%s0 + $0x380] sm:$0xff]
      %v290 = vld [vmem:[%s0 + $0x388] sm:$0xff]
      %v291 = vld [vmem:[%s0 + $0x390] sm:$0xff]
      %v292 = vld [vmem:[%s0 + $0x398] sm:$0xff]
      %v293 = vld [vmem:[%s0 + $0x3a0] sm:$0xff]
      %v294 = vld [vmem:[%s0 + $0x3a8] sm:$0xff]
      %v295 = vld [vmem:[%s0 + $0x3b0] sm:$0xff]
      %v296 = vld [vmem:[%s0 + $0x3b8] sm:$0xff]
      %v297 = vld [vmem:[%s0 + $0x3c0] sm:$0xff]
      %v298 = vld [vmem:[%s0 + $0x3c8] sm:$0xff]
      %v299 = vld [vmem:[%s0 + $0x3d0] sm:$0xff]
      %v300 = vld [vmem:[%s0 + $0x3d8] sm:$0xff]
      %v301 = vld [vmem:[%s0 + $0x3e0] sm:$0xff]
      %v302 = vld [vmem:[%s0 + $0x3e8] sm:$0xff]
      %v303 = vld [vmem:[%s0 + $0x3f0] sm:$0xff]
      %v304 = vld [vmem:[%s0 + $0x3f8] sm:$0xff]
      %v305 = vld [vmem:[%s0 + $0x400] sm:$0xff]
      %v306 = vld [vmem:[%s0 + $0x408] sm:$0xff]
      %v307 = vld [vmem:[%s0 + $0x410] sm:$0xff]
      %v308 = vld [vmem:[%s0 + $0x418] sm:$0xff]
      %v309 = vld [vmem:[%s0 + $0x420] sm:$0xff]
      %v310 = vld [vmem:[%s0 + $0x428] sm:$0xff]
      %v311 = vld [vmem:[%s0 + $0x430] sm:$0xff]
      %v312 = vld [vmem:[%s0 + $0x438] sm:$0xff]
      %v313 = vld [vmem:[%s0 + $0x440] sm:$0xff]
      %v314 = vld [vmem:[%s0 + $0x448] sm:$0xff]
      %v315 = vld [vmem:[%s0 + $0x450] sm:$0xff]
      %v316 = vld [vmem:[%s0 + $0x458] sm:$0xff]
      %v317 = vld [vmem:[%s0 + $0x460] sm:$0xff]
      %v318 = vld [vmem:[%s0 + $0x468] sm:$0xff]
      %v319 = vld [vmem:[%s0 + $0x470] sm:$0xff]
      %v320 = vld [vmem:[%s0 + $0x478] sm:$0xff]
      %v321 = vld [vmem:[%s0 + $0x480] sm:$0xff]
      %v322 = vld [vmem:[%s0 + $0x488] sm:$0xff]
      %v323 = vld [vmem:[%s0 + $0x490] sm:$0xff]
      %v324 = vld [vmem:[%s0 + $0x498] sm:$0xff]
      %v325 = vld [vmem:[%s0 + $0x4a0] sm:$0xff]
      %v326 = vld [vmem:[%s0 + $0x4a8] sm:$0xff]
      %v327 = vld [vmem:[%s0 + $0x4b0] sm:$0xff]
      %v328 = vld [vmem:[%s0 + $0x4b8] sm:$0xff]
      %v329 = vld [vmem:[%s0 + $0x4c0] sm:$0xff]
      %v330 = vld [vmem:[%s0 + $0x4c8] sm:$0xff]
      %v331 = vld [vmem:[%s0 + $0x4d0] sm:$0xff]
      %v332 = vld [vmem:[%s0 + $0x4d8] sm:$0xff]
      %v333 = vld [vmem:[%s0 + $0x4e0] sm:$0xff]
      %v334 = vld [vmem:[%s0 + $0x4e8] sm:$0xff]
      %v335 = vld [vmem:[%s0 + $0x4f0] sm:$0xff]
      %v336 = vld [vmem:[%s0 + $0x4f8] sm:$0xff]
      %v337 = vld [vmem:[%s0 + $0x500] sm:$0xff]
      %v338 = vld [vmem:[%s0 + $0x508] sm:$0xff]
      %v339 = vld [vmem:[%s0 + $0x510] sm:$0xff]
      %v340 = vld [vmem:[%s0 + $0x518] sm:$0xff]
      %v341 = vld [vmem:[%s0 + $0x520] sm:$0xff]
      %v342 = vld [vmem:[%s0 + $0x528] sm:$0xff]
      %v343 = vld [vmem:[%s0 + $0x530] sm:$0xff]
      %v344 = vld [vmem:[%s0 + $0x538] sm:$0xff]
      %v345 = vld [vmem:[%s0 + $0x540] sm:$0xff]
      %v346 = vld [vmem:[%s0 + $0x548] sm:$0xff]
      %v347 = vld [vmem:[%s0 + $0x550] sm:$0xff]
      %v348 = vld [vmem:[%s0 + $0x558] sm:$0xff]
      %v349 = vld [vmem:[%s0 + $0x560] sm:$0xff]
      %v350 = vld [vmem:[%s0 + $0x568] sm:$0xff]
      %v351 = vld [vmem:[%s0 + $0x570] sm:$0xff]
      %v352 = vld [vmem:[%s0 + $0x578] sm:$0xff]
      %v353 = vld [vmem:[%s0 + $0x580] sm:$0xff]
      %v354 = vld [vmem:[%s0 + $0x588] sm:$0xff]
      %v355 = vld [vmem:[%s0 + $0x590] sm:$0xff]
      %v356 = vld [vmem:[%s0 + $0x598] sm:$0xff]
      %v357 = vld [vmem:[%s0 + $0x5a0] sm:$0xff]
      %v358 = vld [vmem:[%s0 + $0x5a8] sm:$0xff]
      %v359 = vld [vmem:[%s0 + $0x5b0] sm:$0xff]
      %v360 = vld [vmem:[%s0 + $0x5b8] sm:$0xff]
      %v361 = vld [vmem:[%s0 + $0x5c0] sm:$0xff]
      %v362 = vld [vmem:[%s0 + $0x5c8] sm:$0xff]
      %v363 = vld [vmem:[%s0 + $0x5d0] sm:$0xff]
      %v364 = vld [vmem:[%s0 + $0x5d8] sm:$0xff]
      %v365 = vld [vmem:[%s0 + $0x5e0] sm:$0xff]
      %v366 = vld [vmem:[%s0 + $0x5e8] sm:$0xff]
      %v367 = vld [vmem:[%s0 + $0x5f0] sm:$0xff]
      %v368 = vld [vmem:[%s0 + $0x5f8] sm:$0xff]
      %v369 = vld [vmem:[%s0 + $0x600] sm:$0xff]
      %v370 = vld [vmem:[%s0 + $0x608] sm:$0xff]
      %v371 = vld [vmem:[%s0 + $0x610] sm:$0xff]
      %v372 = vld [vmem:[%s0 + $0x618] sm:$0xff]
      %v373 = vld [vmem:[%s0 + $0x620] sm:$0xff]
      %v374 = vld [vmem:[%s0 + $0x628] sm:$0xff]
      %v375 = vld [vmem:[%s0 + $0x630] sm:$0xff]
      %v376 = vld [vmem:[%s0 + $0x638] sm:$0xff]
      %v377 = vld [vmem:[%s0 + $0x640] sm:$0xff]
      %v378 = vld [vmem:[%s0 + $0x648] sm:$0xff]
      %v379 = vld [vmem:[%s0 + $0x650] sm:$0xff]
      %v380 = vld [vmem:[%s0 + $0x658] sm:$0xff]
      %v381 = vld [vmem:[%s0 + $0x660] sm:$0xff]
      %v382 = vld [vmem:[%s0 + $0x668] sm:$0xff]
      %v383 = vld [vmem:[%s0 + $0x670] sm:$0xff]
      %v384 = vld [vmem:[%s0 + $0x678] sm:$0xff]
      %v385 = vld [vmem:[%s0 + $0x680] sm:$0xff]
      %v386 = vld [vmem:[%s0 + $0x688] sm:$0xff]
      %v387 = vld [vmem:[%s0 + $0x690] sm:$0xff]
      %v388 = vld [vmem:[%s0 + $0x698] sm:$0xff]
      %v389 = vld [vmem:[%s0 + $0x6a0] sm:$0xff]
      %v390 = vld [vmem:[%s0 + $0x6a8] sm:$0xff]
      %v391 = vld [vmem:[%s0 + $0x6b0] sm:$0xff]
      %v392 = vld [vmem:[%s0 + $0x6b8] sm:$0xff]
      %v393 = vld [vmem:[%s0 + $0x6c0] sm:$0xff]
      %v394 = vld [vmem:[%s0 + $0x6c8] sm:$0xff]
      %v395 = vld [vmem:[%s0 + $0x6d0] sm:$0xff]
      %v396 = vld [vmem:[%s0 + $0x6d8] sm:$0xff]
      %v397 = vld [vmem:[%s0 + $0x6e0] sm:$0xff]
      %v398 = vld [vmem:[%s0 + $0x6e8] sm:$0xff]
      %v399 = vld [vmem:[%s0 + $0x6f0] sm:$0xff]
      %v400 = vld [vmem:[%s0 + $0x6f8] sm:$0xff]
      %v401 = vld [vmem:[%s0 + $0x700] sm:$0xff]
      %v402 = vld [vmem:[%s0 + $0x708] sm:$0xff]
      %v403 = vld [vmem:[%s0 + $0x710] sm:$0xff]
      %v404 = vld [vmem:[%s0 + $0x718] sm:$0xff]
      %v405 = vld [vmem:[%s0 + $0x720] sm:$0xff]
      %v406 = vld [vmem:[%s0 + $0x728] sm:$0xff]
      %v407 = vld [vmem:[%s0 + $0x730] sm:$0xff]
      %v408 = vld [vmem:[%s0 + $0x738] sm:$0xff]
      %v409 = vld [vmem:[%s0 + $0x740] sm:$0xff]
      %v410 = vld [vmem:[%s0 + $0x748] sm:$0xff]
      %v411 = vld [vmem:[%s0 + $0x750] sm:$0xff]
      %v412 = vld [vmem:[%s0 + $0x758] sm:$0xff]
      %v413 = vld [vmem:[%s0 + $0x760] sm:$0xff]
      %v414 = vld [vmem:[%s0 + $0x768] sm:$0xff]
      %v415 = vld [vmem:[%s0 + $0x770] sm:$0xff]
      %v416 = vld [vmem:[%s0 + $0x778] sm:$0xff]
      %v417 = vld [vmem:[%s0 + $0x780] sm:$0xff]
      %v418 = vld [vmem:[%s0 + $0x788] sm:$0xff]
      %v419 = vld [vmem:[%s0 + $0x790] sm:$0xff]
      %v420 = vld [vmem:[%s0 + $0x798] sm:$0xff]
      %v421 = vld [vmem:[%s0 + $0x7a0] sm:$0xff]
      %v422 = vld [vmem:[%s0 + $0x7a8] sm:$0xff]
      %v423 = vld [vmem:[%s0 + $0x7b0] sm:$0xff]
      %v424 = vld [vmem:[%s0 + $0x7b8] sm:$0xff]
      %v425 = vld [vmem:[%s0 + $0x7c0] sm:$0xff]
      %v426 = vld [vmem:[%s0 + $0x7c8] sm:$0xff]
      %v427 = vld [vmem:[%s0 + $0x7d0] sm:$0xff]
      %v428 = vld [vmem:[%s0 + $0x7d8] sm:$0xff]
      %v429 = vld [vmem:[%s0 + $0x7e0] sm:$0xff]
      %v430 = vld [vmem:[%s0 + $0x7e8] sm:$0xff]
      %v431 = vld [vmem:[%s0 + $0x7f0] sm:$0xff]
      %v432 = vld [vmem:[%s0 + $0x7f8] sm:$0xff]
      %v433 = vld [vmem:[%s0 + $0x800] sm:$0xff]
      %v434 = vld [vmem:[%s0 + $0x808] sm:$0xff]
      %v435 = vld [vmem:[%s0 + $0x810] sm:$0xff]
      %v436 = vld [vmem:[%s0 + $0x818] sm:$0xff]
      %v437 = vld [vmem:[%s0 + $0x820] sm:$0xff]
      %v438 = vld [vmem:[%s0 + $0x828] sm:$0xff]
      %v439 = vld [vmem:[%s0 + $0x830] sm:$0xff]
      %v440 = vld [vmem:[%s0 + $0x838] sm:$0xff]
      %v441 = vld [vmem:[%s0 + $0x840] sm:$0xff]
      %v442 = vld [vmem:[%s0 + $0x848] sm:$0xff]
      %v443 = vld [vmem:[%s0 + $0x850] sm:$0xff]
      %v444 = vld [vmem:[%s0 + $0x858] sm:$0xff]
      %v445 = vld [vmem:[%s0 + $0x860] sm:$0xff]
      %v446 = vld [vmem:[%s0 + $0x868] sm:$0xff]
      %v447 = vld [vmem:[%s0 + $0x870] sm:$0xff]
      %v448 = vld [vmem:[%s0 + $0x878] sm:$0xff]
      %v449 = vld [vmem:[%s0 + $0x880] sm:$0xff]
      %v450 = vld [vmem:[%s0 + $0x888] sm:$0xff]
      %v451 = vld [vmem:[%s0 + $0x890] sm:$0xff]
      %v452 = vld [vmem:[%s0 + $0x898] sm:$0xff]
      %v453 = vld [vmem:[%s0 + $0x8a0] sm:$0xff]
      %v454 = vld [vmem:[%s0 + $0x8a8] sm:$0xff]
      %v455 = vld [vmem:[%s0 + $0x8b0] sm:$0xff]
      %v456 = vld [vmem:[%s0 + $0x8b8] sm:$0xff]
      %v457 = vld [vmem:[%s0 + $0x8c0] sm:$0xff]
      %v458 = vld [vmem:[%s0 + $0x8c8] sm:$0xff]
      %v459 = vld [vmem:[%s0 + $0x8d0] sm:$0xff]
      %v460 = vld [vmem:[%s0 + $0x8d8] sm:$0xff]
      %v461 = vld [vmem:[%s0 + $0x8e0] sm:$0xff]
      %v462 = vld [vmem:[%s0 + $0x8e8] sm:$0xff]
      %v463 = vld [vmem:[%s0 + $0x8f0] sm:$0xff]
      %v464 = vld [vmem:[%s0 + $0x8f8] sm:$0xff]
      %v465 = vld [vmem:[%s1] sm:$0xff]
      %v466 = vld [vmem:[%s1 + $0x8] sm:$0xff]
      %v467 = vld [vmem:[%s1 + $0x10] sm:$0xff]
      %v468 = vld [vmem:[%s1 + $0x18] sm:$0xff]
      %v469 = vld [vmem:[%s1 + $0x20] sm:$0xff]
      %v470 = vld [vmem:[%s1 + $0x28] sm:$0xff]
      %v471 = vld [vmem:[%s1 + $0x30] sm:$0xff]
      %v472 = vld [vmem:[%s1 + $0x38] sm:$0xff]
      %v473 = vld [vmem:[%s1 + $0x40] sm:$0xff]
      %v474 = vld [vmem:[%s1 + $0x48] sm:$0xff]
      %v475 = vld [vmem:[%s1 + $0x50] sm:$0xff]
      %v476 = vld [vmem:[%s1 + $0x58] sm:$0xff]
      %v477 = vld [vmem:[%s1 + $0x60] sm:$0xff]
      %v478 = vld [vmem:[%s1 + $0x68] sm:$0xff]
      %v479 = vld [vmem:[%s1 + $0x70] sm:$0xff]
      %v480 = vld [vmem:[%s1 + $0x78] sm:$0xff]
      %v481 = vld [vmem:[%s1 + $0x80] sm:$0xff]
      %v482 = vld [vmem:[%s1 + $0x88] sm:$0xff]
      %v483 = vld [vmem:[%s1 + $0x90] sm:$0xff]
      %v484 = vld [vmem:[%s1 + $0x98] sm:$0xff]
      %v485 = vld [vmem:[%s1 + $0xa0] sm:$0xff]
      %v486 = vld [vmem:[%s1 + $0xa8] sm:$0xff]
      %v487 = vld [vmem:[%s1 + $0xb0] sm:$0xff]
      %v488 = vld [vmem:[%s1 + $0xb8] sm:$0xff]
      %v489 = vld [vmem:[%s1 + $0xc0] sm:$0xff]
      %v490 = vld [vmem:[%s1 + $0xc8] sm:$0xff]
      %v491 = vld [vmem:[%s1 + $0xd0] sm:$0xff]
      %v492 = vld [vmem:[%s1 + $0xd8] sm:$0xff]
      %v493 = vld [vmem:[%s1 + $0xe0] sm:$0xff]
      %v494 = vld [vmem:[%s1 + $0xe8] sm:$0xff]
      %v495 = vld [vmem:[%s1 + $0xf0] sm:$0xff]
      %v496 = vld [vmem:[%s1 + $0xf8] sm:$0xff]
      %v497 = vld [vmem:[%s1 + $0x100] sm:$0xff]
      %v498 = vld [vmem:[%s1 + $0x108] sm:$0xff]
      %v499 = vld [vmem:[%s1 + $0x110] sm:$0xff]
      %v500 = vld [vmem:[%s1 + $0x118] sm:$0xff]
      %v501 = vld [vmem:[%s1 + $0x120] sm:$0xff]
      %v502 = vld [vmem:[%s1 + $0x128] sm:$0xff]
      %v503 = vld [vmem:[%s1 + $0x130] sm:$0xff]
      %v504 = vld [vmem:[%s1 + $0x138] sm:$0xff]
      %v505 = vld [vmem:[%s1 + $0x140] sm:$0xff]
      %v506 = vld [vmem:[%s1 + $0x148] sm:$0xff]
      %v507 = vld [vmem:[%s1 + $0x150] sm:$0xff]
      %v508 = vld [vmem:[%s1 + $0x158] sm:$0xff]
      %v509 = vld [vmem:[%s1 + $0x160] sm:$0xff]
      %v510 = vld [vmem:[%s1 + $0x168] sm:$0xff]
      %v511 = vld [vmem:[%s1 + $0x170] sm:$0xff]
      %v512 = vld [vmem:[%s1 + $0x178] sm:$0xff]
      %v513 = vld [vmem:[%s1 + $0x180] sm:$0xff]
      %v514 = vld [vmem:[%s1 + $0x188] sm:$0xff]
      %v515 = vld [vmem:[%s1 + $0x190] sm:$0xff]
      %v516 = vld [vmem:[%s1 + $0x198] sm:$0xff]
      %v517 = vld [vmem:[%s1 + $0x1a0] sm:$0xff]
      %v518 = vld [vmem:[%s1 + $0x1a8] sm:$0xff]
      %v519 = vld [vmem:[%s1 + $0x1b0] sm:$0xff]
      %v520 = vld [vmem:[%s1 + $0x1b8] sm:$0xff]
      %v521 = vld [vmem:[%s1 + $0x1c0] sm:$0xff]
      %v522 = vld [vmem:[%s1 + $0x1c8] sm:$0xff]
      %v523 = vld [vmem:[%s1 + $0x1d0] sm:$0xff]
      %v524 = vld [vmem:[%s1 + $0x1d8] sm:$0xff]
      %v525 = vld [vmem:[%s1 + $0x1e0] sm:$0xff]
      %v526 = vld [vmem:[%s1 + $0x1e8] sm:$0xff]
      %v527 = vld [vmem:[%s1 + $0x1f0] sm:$0xff]
      %v528 = vld [vmem:[%s1 + $0x1f8] sm:$0xff]
      %v529 = vld [vmem:[%s1 + $0x200] sm:$0xff]
      %v530 = vld [vmem:[%s1 + $0x208] sm:$0xff]
      %v531 = vld [vmem:[%s1 + $0x210] sm:$0xff]
      %v532 = vld [vmem:[%s1 + $0x218] sm:$0xff]
      %v533 = vld [vmem:[%s1 + $0x220] sm:$0xff]
      %v534 = vld [vmem:[%s1 + $0x228] sm:$0xff]
      %v535 = vld [vmem:[%s1 + $0x230] sm:$0xff]
      %v536 = vld [vmem:[%s1 + $0x238] sm:$0xff]
      %v537 = vld [vmem:[%s1 + $0x240] sm:$0xff]
      %v538 = vld [vmem:[%s1 + $0x248] sm:$0xff]
      %v539 = vld [vmem:[%s1 + $0x250] sm:$0xff]
      %v540 = vld [vmem:[%s1 + $0x258] sm:$0xff]
      %v541 = vld [vmem:[%s1 + $0x260] sm:$0xff]
      %v542 = vld [vmem:[%s1 + $0x268] sm:$0xff]
      %v543 = vld [vmem:[%s1 + $0x270] sm:$0xff]
      %v544 = vld [vmem:[%s1 + $0x278] sm:$0xff]
      %v545 = vld [vmem:[%s1 + $0x280] sm:$0xff]
      %v546 = vld [vmem:[%s1 + $0x288] sm:$0xff]
      %v547 = vld [vmem:[%s1 + $0x290] sm:$0xff]
      %v548 = vld [vmem:[%s1 + $0x298] sm:$0xff]
      %v549 = vld [vmem:[%s1 + $0x2a0] sm:$0xff]
      %v550 = vld [vmem:[%s1 + $0x2a8] sm:$0xff]
      %v551 = vld [vmem:[%s1 + $0x2b0] sm:$0xff]
      %v552 = vld [vmem:[%s1 + $0x2b8] sm:$0xff]
      %v553 = vld [vmem:[%s1 + $0x2c0] sm:$0xff]
      %v554 = vld [vmem:[%s1 + $0x2c8] sm:$0xff]
      %v555 = vld [vmem:[%s1 + $0x2d0] sm:$0xff]
      %v556 = vld [vmem:[%s1 + $0x2d8] sm:$0xff]
      %v557 = vld [vmem:[%s1 + $0x2e0] sm:$0xff]
      %v558 = vld [vmem:[%s1 + $0x2e8] sm:$0xff]
      %v559 = vld [vmem:[%s1 + $0x2f0] sm:$0xff]
      %v560 = vld [vmem:[%s1 + $0x2f8] sm:$0xff]
      %v561 = vld [vmem:[%s1 + $0x300] sm:$0xff]
      %v562 = vld [vmem:[%s1 + $0x308] sm:$0xff]
      %v563 = vld [vmem:[%s1 + $0x310] sm:$0xff]
      %v564 = vld [vmem:[%s1 + $0x318] sm:$0xff]
      %v565 = vld [vmem:[%s1 + $0x320] sm:$0xff]
      %v566 = vld [vmem:[%s1 + $0x328] sm:$0xff]
      %v567 = vld [vmem:[%s1 + $0x330] sm:$0xff]
      %v568 = vld [vmem:[%s1 + $0x338] sm:$0xff]
      %v569 = vld [vmem:[%s1 + $0x340] sm:$0xff]
      %v570 = vld [vmem:[%s1 + $0x348] sm:$0xff]
      %v571 = vld [vmem:[%s1 + $0x350] sm:$0xff]
      %v572 = vld [vmem:[%s1 + $0x358] sm:$0xff]
      %v573 = vld [vmem:[%s1 + $0x360] sm:$0xff]
      %v574 = vld [vmem:[%s1 + $0x368] sm:$0xff]
      %v575 = vld [vmem:[%s1 + $0x370] sm:$0xff]
      %v576 = vld [vmem:[%s1 + $0x378] sm:$0xff]
      %v577 = vld [vmem:[%s1 + $0x380] sm:$0xff]
      %v578 = vld [vmem:[%s1 + $0x388] sm:$0xff]
      %v579 = vld [vmem:[%s1 + $0x390] sm:$0xff]
      %v580 = vld [vmem:[%s1 + $0x398] sm:$0xff]
      %v581 = vld [vmem:[%s1 + $0x3a0] sm:$0xff]
      %v582 = vld [vmem:[%s1 + $0x3a8] sm:$0xff]
      %v583 = vld [vmem:[%s1 + $0x3b0] sm:$0xff]
      %v584 = vld [vmem:[%s1 + $0x3b8] sm:$0xff]
      %v585 = vld [vmem:[%s1 + $0x3c0] sm:$0xff]
      %v586 = vld [vmem:[%s1 + $0x3c8] sm:$0xff]
      %v587 = vld [vmem:[%s1 + $0x3d0] sm:$0xff]
      %v588 = vld [vmem:[%s1 + $0x3d8] sm:$0xff]
      %v589 = vld [vmem:[%s1 + $0x3e0] sm:$0xff]
      %v590 = vld [vmem:[%s1 + $0x3e8] sm:$0xff]
      %v591 = vld [vmem:[%s1 + $0x3f0] sm:$0xff]
      %v592 = vld [vmem:[%s1 + $0x3f8] sm:$0xff]
      %v593 = vld [vmem:[%s1 + $0x400] sm:$0xff]
      %v594 = vld [vmem:[%s1 + $0x408] sm:$0xff]
      %v595 = vld [vmem:[%s1 + $0x410] sm:$0xff]
      %v596 = vld [vmem:[%s1 + $0x418] sm:$0xff]
      %v597 = vld [vmem:[%s1 + $0x420] sm:$0xff]
      %v598 = vld [vmem:[%s1 + $0x428] sm:$0xff]
      %v599 = vld [vmem:[%s1 + $0x430] sm:$0xff]
      %v600 = vld [vmem:[%s1 + $0x438] sm:$0xff]
      %v601 = vld [vmem:[%s1 + $0x440] sm:$0xff]
      %v602 = vld [vmem:[%s1 + $0x448] sm:$0xff]
      %v603 = vld [vmem:[%s1 + $0x450] sm:$0xff]
      %v604 = vld [vmem:[%s1 + $0x458] sm:$0xff]
      %v605 = vld [vmem:[%s1 + $0x460] sm:$0xff]
      %v606 = vld [vmem:[%s1 + $0x468] sm:$0xff]
      %v607 = vld [vmem:[%s1 + $0x470] sm:$0xff]
      %v608 = vld [vmem:[%s1 + $0x478] sm:$0xff]
      %v609 = vld [vmem:[%s1 + $0x480] sm:$0xff]
      %v610 = vld [vmem:[%s1 + $0x488] sm:$0xff]
      %v611 = vld [vmem:[%s1 + $0x490] sm:$0xff]
      %v612 = vld [vmem:[%s1 + $0x498] sm:$0xff]
      %v613 = vld [vmem:[%s1 + $0x4a0] sm:$0xff]
      %v614 = vld [vmem:[%s1 + $0x4a8] sm:$0xff]
      %v615 = vld [vmem:[%s1 + $0x4b0] sm:$0xff]
      %v616 = vld [vmem:[%s1 + $0x4b8] sm:$0xff]
      %v617 = vld [vmem:[%s1 + $0x4c0] sm:$0xff]
      %v618 = vld [vmem:[%s1 + $0x4c8] sm:$0xff]
      %v619 = vld [vmem:[%s1 + $0x4d0] sm:$0xff]
      %v620 = vld [vmem:[%s1 + $0x4d8] sm:$0xff]
      %v621 = vld [vmem:[%s1 + $0x4e0] sm:$0xff]
      %v622 = vld [vmem:[%s1 + $0x4e8] sm:$0xff]
      %v623 = vld [vmem:[%s1 + $0x4f0] sm:$0xff]
      %v624 = vld [vmem:[%s1 + $0x4f8] sm:$0xff]
      %v625 = vld [vmem:[%s1 + $0x500] sm:$0xff]
      %v626 = vld [vmem:[%s1 + $0x508] sm:$0xff]
      %v627 = vld [vmem:[%s1 + $0x510] sm:$0xff]
      %v628 = vld [vmem:[%s1 + $0x518] sm:$0xff]
      %v629 = vld [vmem:[%s1 + $0x520] sm:$0xff]
      %v630 = vld [vmem:[%s1 + $0x528] sm:$0xff]
      %v631 = vld [vmem:[%s1 + $0x530] sm:$0xff]
      %v632 = vld [vmem:[%s1 + $0x538] sm:$0xff]
      %v633 = vld [vmem:[%s1 + $0x540] sm:$0xff]
      %v634 = vld [vmem:[%s1 + $0x548] sm:$0xff]
      %v635 = vld [vmem:[%s1 + $0x550] sm:$0xff]
      %v636 = vld [vmem:[%s1 + $0x558] sm:$0xff]
      %v637 = vld [vmem:[%s1 + $0x560] sm:$0xff]
      %v638 = vld [vmem:[%s1 + $0x568] sm:$0xff]
      %v639 = vld [vmem:[%s1 + $0x570] sm:$0xff]
      %v640 = vld [vmem:[%s1 + $0x578] sm:$0xff]
      %v641 = vld [vmem:[%s1 + $0x580] sm:$0xff]
      %v642 = vld [vmem:[%s1 + $0x588] sm:$0xff]
      %v643 = vld [vmem:[%s1 + $0x590] sm:$0xff]
      %v644 = vld [vmem:[%s1 + $0x598] sm:$0xff]
      %v645 = vld [vmem:[%s1 + $0x5a0] sm:$0xff]
      %v646 = vld [vmem:[%s1 + $0x5a8] sm:$0xff]
      %v647 = vld [vmem:[%s1 + $0x5b0] sm:$0xff]
      %v648 = vld [vmem:[%s1 + $0x5b8] sm:$0xff]
      %v649 = vld [vmem:[%s1 + $0x5c0] sm:$0xff]
      %v650 = vld [vmem:[%s1 + $0x5c8] sm:$0xff]
      %v651 = vld [vmem:[%s1 + $0x5d0] sm:$0xff]
      %v652 = vld [vmem:[%s1 + $0x5d8] sm:$0xff]
      %v653 = vld [vmem:[%s1 + $0x5e0] sm:$0xff]
      %v654 = vld [vmem:[%s1 + $0x5e8] sm:$0xff]
      %v655 = vld [vmem:[%s1 + $0x5f0] sm:$0xff]
      %v656 = vld [vmem:[%s1 + $0x5f8] sm:$0xff]
      %v657 = vld [vmem:[%s1 + $0x600] sm:$0xff]
      %v658 = vld [vmem:[%s1 + $0x608] sm:$0xff]
      %v659 = vld [vmem:[%s1 + $0x610] sm:$0xff]
      %v660 = vld [vmem:[%s1 + $0x618] sm:$0xff]
      %v661 = vld [vmem:[%s1 + $0x620] sm:$0xff]
      %v662 = vld [vmem:[%s1 + $0x628] sm:$0xff]
      %v663 = vld [vmem:[%s1 + $0x630] sm:$0xff]
      %v664 = vld [vmem:[%s1 + $0x638] sm:$0xff]
      %v665 = vld [vmem:[%s1 + $0x640] sm:$0xff]
      %v666 = vld [vmem:[%s1 + $0x648] sm:$0xff]
      %v667 = vld [vmem:[%s1 + $0x650] sm:$0xff]
      %v668 = vld [vmem:[%s1 + $0x658] sm:$0xff]
      %v669 = vld [vmem:[%s1 + $0x660] sm:$0xff]
      %v670 = vld [vmem:[%s1 + $0x668] sm:$0xff]
      %v671 = vld [vmem:[%s1 + $0x670] sm:$0xff]
      %v672 = vld [vmem:[%s1 + $0x678] sm:$0xff]
      %v673 = vld [vmem:[%s1 + $0x680] sm:$0xff]
      %v674 = vld [vmem:[%s1 + $0x688] sm:$0xff]
      %v675 = vld [vmem:[%s1 + $0x690] sm:$0xff]
      %v676 = vld [vmem:[%s1 + $0x698] sm:$0xff]
      %v677 = vld [vmem:[%s1 + $0x6a0] sm:$0xff]
      %v678 = vld [vmem:[%s1 + $0x6a8] sm:$0xff]
      %v679 = vld [vmem:[%s1 + $0x6b0] sm:$0xff]
      %v680 = vld [vmem:[%s1 + $0x6b8] sm:$0xff]
      %v681 = vld [vmem:[%s1 + $0x6c0] sm:$0xff]
      %v682 = vld [vmem:[%s1 + $0x6c8] sm:$0xff]
      %v683 = vld [vmem:[%s1 + $0x6d0] sm:$0xff]
      %v684 = vld [vmem:[%s1 + $0x6d8] sm:$0xff]
      %v685 = vld [vmem:[%s1 + $0x6e0] sm:$0xff]
      %v686 = vld [vmem:[%s1 + $0x6e8] sm:$0xff]
      %v687 = vld [vmem:[%s1 + $0x6f0] sm:$0xff]
      %v688 = vld [vmem:[%s1 + $0x6f8] sm:$0xff]
      %v689 = vld [vmem:[%s1 + $0x700] sm:$0xff]
      %v690 = vld [vmem:[%s1 + $0x708] sm:$0xff]
      %v691 = vld [vmem:[%s1 + $0x710] sm:$0xff]
      %v692 = vld [vmem:[%s1 + $0x718] sm:$0xff]
      %v693 = vld [vmem:[%s1 + $0x720] sm:$0xff]
      %v694 = vld [vmem:[%s1 + $0x728] sm:$0xff]
      %v695 = vld [vmem:[%s1 + $0x730] sm:$0xff]
      %v696 = vld [vmem:[%s1 + $0x738] sm:$0xff]
      %v697 = vld [vmem:[%s1 + $0x740] sm:$0xff]
      %v698 = vld [vmem:[%s1 + $0x748] sm:$0xff]
      %v699 = vld [vmem:[%s1 + $0x750] sm:$0xff]
      %v700 = vld [vmem:[%s1 + $0x758] sm:$0xff]
      %v701 = vld [vmem:[%s1 + $0x760] sm:$0xff]
      %v702 = vld [vmem:[%s1 + $0x768] sm:$0xff]
      %v703 = vld [vmem:[%s1 + $0x770] sm:$0xff]
      %v704 = vld [vmem:[%s1 + $0x778] sm:$0xff]
      %v705 = vld [vmem:[%s1 + $0x780] sm:$0xff]
      %v706 = vld [vmem:[%s1 + $0x788] sm:$0xff]
      %v707 = vld [vmem:[%s1 + $0x790] sm:$0xff]
      %v708 = vld [vmem:[%s1 + $0x798] sm:$0xff]
      %v709 = vld [vmem:[%s1 + $0x7a0] sm:$0xff]
      %v710 = vld [vmem:[%s1 + $0x7a8] sm:$0xff]
      %v711 = vld [vmem:[%s1 + $0x7b0] sm:$0xff]
      %v712 = vld [vmem:[%s1 + $0x7b8] sm:$0xff]
      %v713 = vld [vmem:[%s1 + $0x7c0] sm:$0xff]
      %v714 = vld [vmem:[%s1 + $0x7c8] sm:$0xff]
      %v715 = vld [vmem:[%s1 + $0x7d0] sm:$0xff]
      %v716 = vld [vmem:[%s1 + $0x7d8] sm:$0xff]
      %v717 = vld [vmem:[%s1 + $0x7e0] sm:$0xff]
      %v718 = vld [vmem:[%s1 + $0x7e8] sm:$0xff]
      %v719 = vld [vmem:[%s1 + $0x7f0] sm:$0xff]
      %v720 = vld [vmem:[%s1 + $0x7f8] sm:$0xff]
      %v721 = vld [vmem:[%s1 + $0x800] sm:$0xff]
      %v722 = vld [vmem:[%s1 + $0x808] sm:$0xff]
      %v723 = vld [vmem:[%s1 + $0x810] sm:$0xff]
      %v724 = vld [vmem:[%s1 + $0x818] sm:$0xff]
      %v725 = vld [vmem:[%s1 + $0x820] sm:$0xff]
      %v726 = vld [vmem:[%s1 + $0x828] sm:$0xff]
      %v727 = vld [vmem:[%s1 + $0x830] sm:$0xff]
      %v728 = vld [vmem:[%s1 + $0x838] sm:$0xff]
      %v729 = vld [vmem:[%s1 + $0x840] sm:$0xff]
      %v730 = vld [vmem:[%s1 + $0x848] sm:$0xff]
      %v731 = vld [vmem:[%s1 + $0x850] sm:$0xff]
      %v732 = vld [vmem:[%s1 + $0x858] sm:$0xff]
      %v733 = vld [vmem:[%s1 + $0x860] sm:$0xff]
      %v734 = vld [vmem:[%s1 + $0x868] sm:$0xff]
      %v735 = vld [vmem:[%s1 + $0x870] sm:$0xff]
      %v736 = vld [vmem:[%s1 + $0x878] sm:$0xff]
      %v737 = vld [vmem:[%s1 + $0x880] sm:$0xff]
      %v738 = vld [vmem:[%s1 + $0x888] sm:$0xff]
      %v739 = vld [vmem:[%s1 + $0x890] sm:$0xff]
      %v740 = vld [vmem:[%s1 + $0x898] sm:$0xff]
      %v741 = vld [vmem:[%s1 + $0x8a0] sm:$0xff]
      %v742 = vld [vmem:[%s1 + $0x8a8] sm:$0xff]
      %v743 = vld [vmem:[%s1 + $0x8b0] sm:$0xff]
      %v744 = vld [vmem:[%s1 + $0x8b8] sm:$0xff]
      %v745 = vld [vmem:[%s1 + $0x8c0] sm:$0xff]
      %v746 = vld [vmem:[%s1 + $0x8c8] sm:$0xff]
      %v747 = vld [vmem:[%s1 + $0x8d0] sm:$0xff]
      %v748 = vld [vmem:[%s1 + $0x8d8] sm:$0xff]
      %v749 = vld [vmem:[%s1 + $0x8e0] sm:$0xff]
      %v750 = vld [vmem:[%s1 + $0x8e8] sm:$0xff]
      %v751 = vld [vmem:[%s1 + $0x8f0] sm:$0xff]
      %v752 = vld [vmem:[%s1 + $0x8f8] sm:$0xff]
      %754 = vset.pattern.permute.xlu0 0
      %755 = vperm.xlu0 %754, %v465
      %v756 = vpop.permute.xlu0 %755
      %759 = vset.pattern.permute.xlu0 0
      %760 = vperm.xlu0 %759, %v466
      %v761 = vpop.permute.xlu0 %760
      %764 = vset.pattern.permute.xlu0 0
      %765 = vperm.xlu0 %764, %v467
      %v766 = vpop.permute.xlu0 %765
      %769 = vset.pattern.permute.xlu0 0
      %770 = vperm.xlu0 %769, %v468
      %v771 = vpop.permute.xlu0 %770
      %774 = vset.pattern.permute.xlu0 0
      %775 = vperm.xlu0 %774, %v469
      %v776 = vpop.permute.xlu0 %775
      %779 = vset.pattern.permute.xlu0 0
      %780 = vperm.xlu0 %779, %v470
      %v781 = vpop.permute.xlu0 %780
      %784 = vset.pattern.permute.xlu0 0
      %785 = vperm.xlu0 %784, %v471
      %v786 = vpop.permute.xlu0 %785
      %789 = vset.pattern.permute.xlu0 0
      %790 = vperm.xlu0 %789, %v472
      %v791 = vpop.permute.xlu0 %790
      %794 = vset.pattern.permute.xlu0 0
      %795 = vperm.xlu0 %794, %v473
      %v796 = vpop.permute.xlu0 %795
      %799 = vset.pattern.permute.xlu0 0
      %800 = vperm.xlu0 %799, %v474
      %v801 = vpop.permute.xlu0 %800
      %804 = vset.pattern.permute.xlu0 0
      %805 = vperm.xlu0 %804, %v475
      %v806 = vpop.permute.xlu0 %805
      %809 = vset.pattern.permute.xlu0 0
      %810 = vperm.xlu0 %809, %v476
      %v811 = vpop.permute.xlu0 %810
      %814 = vset.pattern.permute.xlu0 0
      %815 = vperm.xlu0 %814, %v477
      %v816 = vpop.permute.xlu0 %815
      %819 = vset.pattern.permute.xlu0 0
      %820 = vperm.xlu0 %819, %v478
      %v821 = vpop.permute.xlu0 %820
      %824 = vset.pattern.permute.xlu0 0
      %825 = vperm.xlu0 %824, %v479
      %v826 = vpop.permute.xlu0 %825
      %829 = vset.pattern.permute.xlu0 0
      %830 = vperm.xlu0 %829, %v480
      %v831 = vpop.permute.xlu0 %830
      %834 = vset.pattern.permute.xlu0 0
      %835 = vperm.xlu0 %834, %v481
      %v836 = vpop.permute.xlu0 %835
      %839 = vset.pattern.permute.xlu0 0
      %840 = vperm.xlu0 %839, %v482
      %v841 = vpop.permute.xlu0 %840
      %844 = vset.pattern.permute.xlu0 0
      %845 = vperm.xlu0 %844, %v483
      %v846 = vpop.permute.xlu0 %845
      %849 = vset.pattern.permute.xlu0 0
      %850 = vperm.xlu0 %849, %v484
      %v851 = vpop.permute.xlu0 %850
      %854 = vset.pattern.permute.xlu0 0
      %855 = vperm.xlu0 %854, %v485
      %v856 = vpop.permute.xlu0 %855
      %859 = vset.pattern.permute.xlu0 0
      %860 = vperm.xlu0 %859, %v486
      %v861 = vpop.permute.xlu0 %860
      %864 = vset.pattern.permute.xlu0 0
      %865 = vperm.xlu0 %864, %v487
      %v866 = vpop.permute.xlu0 %865
      %869 = vset.pattern.permute.xlu0 0
      %870 = vperm.xlu0 %869, %v488
      %v871 = vpop.permute.xlu0 %870
      %874 = vset.pattern.permute.xlu0 0
      %875 = vperm.xlu0 %874, %v489
      %v876 = vpop.permute.xlu0 %875
      %879 = vset.pattern.permute.xlu0 0
      %880 = vperm.xlu0 %879, %v490
      %v881 = vpop.permute.xlu0 %880
      %884 = vset.pattern.permute.xlu0 0
      %885 = vperm.xlu0 %884, %v491
      %v886 = vpop.permute.xlu0 %885
      %889 = vset.pattern.permute.xlu0 0
      %890 = vperm.xlu0 %889, %v492
      %v891 = vpop.permute.xlu0 %890
      %894 = vset.pattern.permute.xlu0 0
      %895 = vperm.xlu0 %894, %v493
      %v896 = vpop.permute.xlu0 %895
      %899 = vset.pattern.permute.xlu0 0
      %900 = vperm.xlu0 %899, %v494
      %v901 = vpop.permute.xlu0 %900
      %904 = vset.pattern.permute.xlu0 0
      %905 = vperm.xlu0 %904, %v495
      %v906 = vpop.permute.xlu0 %905
      %909 = vset.pattern.permute.xlu0 0
      %910 = vperm.xlu0 %909, %v496
      %v911 = vpop.permute.xlu0 %910
      %914 = vset.pattern.permute.xlu0 0
      %915 = vperm.xlu0 %914, %v497
      %v916 = vpop.permute.xlu0 %915
      %919 = vset.pattern.permute.xlu0 0
      %920 = vperm.xlu0 %919, %v498
      %v921 = vpop.permute.xlu0 %920
      %924 = vset.pattern.permute.xlu0 0
      %925 = vperm.xlu0 %924, %v499
      %v926 = vpop.permute.xlu0 %925
      %929 = vset.pattern.permute.xlu0 0
      %930 = vperm.xlu0 %929, %v500
      %v931 = vpop.permute.xlu0 %930
      %934 = vset.pattern.permute.xlu0 0
      %935 = vperm.xlu0 %934, %v501
      %v936 = vpop.permute.xlu0 %935
      %939 = vset.pattern.permute.xlu0 0
      %940 = vperm.xlu0 %939, %v502
      %v941 = vpop.permute.xlu0 %940
      %944 = vset.pattern.permute.xlu0 0
      %945 = vperm.xlu0 %944, %v503
      %v946 = vpop.permute.xlu0 %945
      %949 = vset.pattern.permute.xlu0 0
      %950 = vperm.xlu0 %949, %v504
      %v951 = vpop.permute.xlu0 %950
      %954 = vset.pattern.permute.xlu0 0
      %955 = vperm.xlu0 %954, %v505
      %v956 = vpop.permute.xlu0 %955
      %959 = vset.pattern.permute.xlu0 0
      %960 = vperm.xlu0 %959, %v506
      %v961 = vpop.permute.xlu0 %960
      %964 = vset.pattern.permute.xlu0 0
      %965 = vperm.xlu0 %964, %v507
      %v966 = vpop.permute.xlu0 %965
      %969 = vset.pattern.permute.xlu0 0
      %970 = vperm.xlu0 %969, %v508
      %v971 = vpop.permute.xlu0 %970
      %974 = vset.pattern.permute.xlu0 0
      %975 = vperm.xlu0 %974, %v509
      %v976 = vpop.permute.xlu0 %975
      %979 = vset.pattern.permute.xlu0 0
      %980 = vperm.xlu0 %979, %v510
      %v981 = vpop.permute.xlu0 %980
      %984 = vset.pattern.permute.xlu0 0
      %985 = vperm.xlu0 %984, %v511
      %v986 = vpop.permute.xlu0 %985
      %989 = vset.pattern.permute.xlu0 0
      %990 = vperm.xlu0 %989, %v512
      %v991 = vpop.permute.xlu0 %990
      %994 = vset.pattern.permute.xlu0 0
      %995 = vperm.xlu0 %994, %v513
      %v996 = vpop.permute.xlu0 %995
      %999 = vset.pattern.permute.xlu0 0
      %1000 = vperm.xlu0 %999, %v514
      %v1001 = vpop.permute.xlu0 %1000
      %1004 = vset.pattern.permute.xlu0 0
      %1005 = vperm.xlu0 %1004, %v515
      %v1006 = vpop.permute.xlu0 %1005
      %1009 = vset.pattern.permute.xlu0 0
      %1010 = vperm.xlu0 %1009, %v516
      %v1011 = vpop.permute.xlu0 %1010
      %1014 = vset.pattern.permute.xlu0 0
      %1015 = vperm.xlu0 %1014, %v517
      %v1016 = vpop.permute.xlu0 %1015
      %1019 = vset.pattern.permute.xlu0 0
      %1020 = vperm.xlu0 %1019, %v518
      %v1021 = vpop.permute.xlu0 %1020
      %1024 = vset.pattern.permute.xlu0 0
      %1025 = vperm.xlu0 %1024, %v519
      %v1026 = vpop.permute.xlu0 %1025
      %1029 = vset.pattern.permute.xlu0 0
      %1030 = vperm.xlu0 %1029, %v520
      %v1031 = vpop.permute.xlu0 %1030
      %1034 = vset.pattern.permute.xlu0 0
      %1035 = vperm.xlu0 %1034, %v521
      %v1036 = vpop.permute.xlu0 %1035
      %1039 = vset.pattern.permute.xlu0 0
      %1040 = vperm.xlu0 %1039, %v522
      %v1041 = vpop.permute.xlu0 %1040
      %1044 = vset.pattern.permute.xlu0 0
      %1045 = vperm.xlu0 %1044, %v523
      %v1046 = vpop.permute.xlu0 %1045
      %1049 = vset.pattern.permute.xlu0 0
      %1050 = vperm.xlu0 %1049, %v524
      %v1051 = vpop.permute.xlu0 %1050
      %1054 = vset.pattern.permute.xlu0 0
      %1055 = vperm.xlu0 %1054, %v525
      %v1056 = vpop.permute.xlu0 %1055
      %1059 = vset.pattern.permute.xlu0 0
      %1060 = vperm.xlu0 %1059, %v526
      %v1061 = vpop.permute.xlu0 %1060
      %1064 = vset.pattern.permute.xlu0 0
      %1065 = vperm.xlu0 %1064, %v527
      %v1066 = vpop.permute.xlu0 %1065
      %1069 = vset.pattern.permute.xlu0 0
      %1070 = vperm.xlu0 %1069, %v528
      %v1071 = vpop.permute.xlu0 %1070
      %1074 = vset.pattern.permute.xlu0 0
      %1075 = vperm.xlu0 %1074, %v529
      %v1076 = vpop.permute.xlu0 %1075
      %1079 = vset.pattern.permute.xlu0 0
      %1080 = vperm.xlu0 %1079, %v530
      %v1081 = vpop.permute.xlu0 %1080
      %1084 = vset.pattern.permute.xlu0 0
      %1085 = vperm.xlu0 %1084, %v531
      %v1086 = vpop.permute.xlu0 %1085
      %1089 = vset.pattern.permute.xlu0 0
      %1090 = vperm.xlu0 %1089, %v532
      %v1091 = vpop.permute.xlu0 %1090
      %1094 = vset.pattern.permute.xlu0 0
      %1095 = vperm.xlu0 %1094, %v533
      %v1096 = vpop.permute.xlu0 %1095
      %1099 = vset.pattern.permute.xlu0 0
      %1100 = vperm.xlu0 %1099, %v534
      %v1101 = vpop.permute.xlu0 %1100
      %1104 = vset.pattern.permute.xlu0 0
      %1105 = vperm.xlu0 %1104, %v535
      %v1106 = vpop.permute.xlu0 %1105
      %1109 = vset.pattern.permute.xlu0 0
      %1110 = vperm.xlu0 %1109, %v536
      %v1111 = vpop.permute.xlu0 %1110
      %1114 = vset.pattern.permute.xlu0 0
      %1115 = vperm.xlu0 %1114, %v537
      %v1116 = vpop.permute.xlu0 %1115
      %1119 = vset.pattern.permute.xlu0 0
      %1120 = vperm.xlu0 %1119, %v538
      %v1121 = vpop.permute.xlu0 %1120
      %1124 = vset.pattern.permute.xlu0 0
      %1125 = vperm.xlu0 %1124, %v539
      %v1126 = vpop.permute.xlu0 %1125
      %1129 = vset.pattern.permute.xlu0 0
      %1130 = vperm.xlu0 %1129, %v540
      %v1131 = vpop.permute.xlu0 %1130
      %1134 = vset.pattern.permute.xlu0 0
      %1135 = vperm.xlu0 %1134, %v541
      %v1136 = vpop.permute.xlu0 %1135
      %1139 = vset.pattern.permute.xlu0 0
      %1140 = vperm.xlu0 %1139, %v542
      %v1141 = vpop.permute.xlu0 %1140
      %1144 = vset.pattern.permute.xlu0 0
      %1145 = vperm.xlu0 %1144, %v543
      %v1146 = vpop.permute.xlu0 %1145
      %1149 = vset.pattern.permute.xlu0 0
      %1150 = vperm.xlu0 %1149, %v544
      %v1151 = vpop.permute.xlu0 %1150
      %1154 = vset.pattern.permute.xlu0 0
      %1155 = vperm.xlu0 %1154, %v545
      %v1156 = vpop.permute.xlu0 %1155
      %1159 = vset.pattern.permute.xlu0 0
      %1160 = vperm.xlu0 %1159, %v546
      %v1161 = vpop.permute.xlu0 %1160
      %1164 = vset.pattern.permute.xlu0 0
      %1165 = vperm.xlu0 %1164, %v547
      %v1166 = vpop.permute.xlu0 %1165
      %1169 = vset.pattern.permute.xlu0 0
      %1170 = vperm.xlu0 %1169, %v548
      %v1171 = vpop.permute.xlu0 %1170
      %1174 = vset.pattern.permute.xlu0 0
      %1175 = vperm.xlu0 %1174, %v549
      %v1176 = vpop.permute.xlu0 %1175
      %1179 = vset.pattern.permute.xlu0 0
      %1180 = vperm.xlu0 %1179, %v550
      %v1181 = vpop.permute.xlu0 %1180
      %1184 = vset.pattern.permute.xlu0 0
      %1185 = vperm.xlu0 %1184, %v551
      %v1186 = vpop.permute.xlu0 %1185
      %1189 = vset.pattern.permute.xlu0 0
      %1190 = vperm.xlu0 %1189, %v552
      %v1191 = vpop.permute.xlu0 %1190
      %1194 = vset.pattern.permute.xlu0 0
      %1195 = vperm.xlu0 %1194, %v553
      %v1196 = vpop.permute.xlu0 %1195
      %1199 = vset.pattern.permute.xlu0 0
      %1200 = vperm.xlu0 %1199, %v554
      %v1201 = vpop.permute.xlu0 %1200
      %1204 = vset.pattern.permute.xlu0 0
      %1205 = vperm.xlu0 %1204, %v555
      %v1206 = vpop.permute.xlu0 %1205
      %1209 = vset.pattern.permute.xlu0 0
      %1210 = vperm.xlu0 %1209, %v556
      %v1211 = vpop.permute.xlu0 %1210
      %1214 = vset.pattern.permute.xlu0 0
      %1215 = vperm.xlu0 %1214, %v557
      %v1216 = vpop.permute.xlu0 %1215
      %1219 = vset.pattern.permute.xlu0 0
      %1220 = vperm.xlu0 %1219, %v558
      %v1221 = vpop.permute.xlu0 %1220
      %1224 = vset.pattern.permute.xlu0 0
      %1225 = vperm.xlu0 %1224, %v559
      %v1226 = vpop.permute.xlu0 %1225
      %1229 = vset.pattern.permute.xlu0 0
      %1230 = vperm.xlu0 %1229, %v560
      %v1231 = vpop.permute.xlu0 %1230
      %1234 = vset.pattern.permute.xlu0 0
      %1235 = vperm.xlu0 %1234, %v561
      %v1236 = vpop.permute.xlu0 %1235
      %1239 = vset.pattern.permute.xlu0 0
      %1240 = vperm.xlu0 %1239, %v562
      %v1241 = vpop.permute.xlu0 %1240
      %1244 = vset.pattern.permute.xlu0 0
      %1245 = vperm.xlu0 %1244, %v563
      %v1246 = vpop.permute.xlu0 %1245
      %1249 = vset.pattern.permute.xlu0 0
      %1250 = vperm.xlu0 %1249, %v564
      %v1251 = vpop.permute.xlu0 %1250
      %1254 = vset.pattern.permute.xlu0 0
      %1255 = vperm.xlu0 %1254, %v565
      %v1256 = vpop.permute.xlu0 %1255
      %1259 = vset.pattern.permute.xlu0 0
      %1260 = vperm.xlu0 %1259, %v566
      %v1261 = vpop.permute.xlu0 %1260
      %1264 = vset.pattern.permute.xlu0 0
      %1265 = vperm.xlu0 %1264, %v567
      %v1266 = vpop.permute.xlu0 %1265
      %1269 = vset.pattern.permute.xlu0 0
      %1270 = vperm.xlu0 %1269, %v568
      %v1271 = vpop.permute.xlu0 %1270
      %1274 = vset.pattern.permute.xlu0 0
      %1275 = vperm.xlu0 %1274, %v569
      %v1276 = vpop.permute.xlu0 %1275
      %1279 = vset.pattern.permute.xlu0 0
      %1280 = vperm.xlu0 %1279, %v570
      %v1281 = vpop.permute.xlu0 %1280
      %1284 = vset.pattern.permute.xlu0 0
      %1285 = vperm.xlu0 %1284, %v571
      %v1286 = vpop.permute.xlu0 %1285
      %1289 = vset.pattern.permute.xlu0 0
      %1290 = vperm.xlu0 %1289, %v572
      %v1291 = vpop.permute.xlu0 %1290
      %1294 = vset.pattern.permute.xlu0 0
      %1295 = vperm.xlu0 %1294, %v573
      %v1296 = vpop.permute.xlu0 %1295
      %1299 = vset.pattern.permute.xlu0 0
      %1300 = vperm.xlu0 %1299, %v574
      %v1301 = vpop.permute.xlu0 %1300
      %1304 = vset.pattern.permute.xlu0 0
      %1305 = vperm.xlu0 %1304, %v575
      %v1306 = vpop.permute.xlu0 %1305
      %1309 = vset.pattern.permute.xlu0 0
      %1310 = vperm.xlu0 %1309, %v576
      %v1311 = vpop.permute.xlu0 %1310
      %1314 = vset.pattern.permute.xlu0 0
      %1315 = vperm.xlu0 %1314, %v577
      %v1316 = vpop.permute.xlu0 %1315
      %1319 = vset.pattern.permute.xlu0 0
      %1320 = vperm.xlu0 %1319, %v578
      %v1321 = vpop.permute.xlu0 %1320
      %1324 = vset.pattern.permute.xlu0 0
      %1325 = vperm.xlu0 %1324, %v579
      %v1326 = vpop.permute.xlu0 %1325
      %1329 = vset.pattern.permute.xlu0 0
      %1330 = vperm.xlu0 %1329, %v580
      %v1331 = vpop.permute.xlu0 %1330
      %1334 = vset.pattern.permute.xlu0 0
      %1335 = vperm.xlu0 %1334, %v581
      %v1336 = vpop.permute.xlu0 %1335
      %1339 = vset.pattern.permute.xlu0 0
      %1340 = vperm.xlu0 %1339, %v582
      %v1341 = vpop.permute.xlu0 %1340
      %1344 = vset.pattern.permute.xlu0 0
      %1345 = vperm.xlu0 %1344, %v583
      %v1346 = vpop.permute.xlu0 %1345
      %1349 = vset.pattern.permute.xlu0 0
      %1350 = vperm.xlu0 %1349, %v584
      %v1351 = vpop.permute.xlu0 %1350
      %1354 = vset.pattern.permute.xlu0 0
      %1355 = vperm.xlu0 %1354, %v585
      %v1356 = vpop.permute.xlu0 %1355
      %1359 = vset.pattern.permute.xlu0 0
      %1360 = vperm.xlu0 %1359, %v586
      %v1361 = vpop.permute.xlu0 %1360
      %1364 = vset.pattern.permute.xlu0 0
      %1365 = vperm.xlu0 %1364, %v587
      %v1366 = vpop.permute.xlu0 %1365
      %1369 = vset.pattern.permute.xlu0 0
      %1370 = vperm.xlu0 %1369, %v588
      %v1371 = vpop.permute.xlu0 %1370
      %1374 = vset.pattern.permute.xlu0 0
      %1375 = vperm.xlu0 %1374, %v589
      %v1376 = vpop.permute.xlu0 %1375
      %1379 = vset.pattern.permute.xlu0 0
      %1380 = vperm.xlu0 %1379, %v590
      %v1381 = vpop.permute.xlu0 %1380
      %1384 = vset.pattern.permute.xlu0 0
      %1385 = vperm.xlu0 %1384, %v591
      %v1386 = vpop.permute.xlu0 %1385
      %1389 = vset.pattern.permute.xlu0 0
      %1390 = vperm.xlu0 %1389, %v592
      %v1391 = vpop.permute.xlu0 %1390
      %1394 = vset.pattern.permute.xlu0 0
      %1395 = vperm.xlu0 %1394, %v593
      %v1396 = vpop.permute.xlu0 %1395
      %1399 = vset.pattern.permute.xlu0 0
      %1400 = vperm.xlu0 %1399, %v594
      %v1401 = vpop.permute.xlu0 %1400
      %1404 = vset.pattern.permute.xlu0 0
      %1405 = vperm.xlu0 %1404, %v595
      %v1406 = vpop.permute.xlu0 %1405
      %1409 = vset.pattern.permute.xlu0 0
      %1410 = vperm.xlu0 %1409, %v596
      %v1411 = vpop.permute.xlu0 %1410
      %1414 = vset.pattern.permute.xlu0 0
      %1415 = vperm.xlu0 %1414, %v597
      %v1416 = vpop.permute.xlu0 %1415
      %1419 = vset.pattern.permute.xlu0 0
      %1420 = vperm.xlu0 %1419, %v598
      %v1421 = vpop.permute.xlu0 %1420
      %1424 = vset.pattern.permute.xlu0 0
      %1425 = vperm.xlu0 %1424, %v599
      %v1426 = vpop.permute.xlu0 %1425
      %1429 = vset.pattern.permute.xlu0 0
      %1430 = vperm.xlu0 %1429, %v600
      %v1431 = vpop.permute.xlu0 %1430
      %1434 = vset.pattern.permute.xlu0 0
      %1435 = vperm.xlu0 %1434, %v601
      %v1436 = vpop.permute.xlu0 %1435
      %1439 = vset.pattern.permute.xlu0 0
      %1440 = vperm.xlu0 %1439, %v602
      %v1441 = vpop.permute.xlu0 %1440
      %1444 = vset.pattern.permute.xlu0 0
      %1445 = vperm.xlu0 %1444, %v603
      %v1446 = vpop.permute.xlu0 %1445
      %1449 = vset.pattern.permute.xlu0 0
      %1450 = vperm.xlu0 %1449, %v604
      %v1451 = vpop.permute.xlu0 %1450
      %1454 = vset.pattern.permute.xlu0 0
      %1455 = vperm.xlu0 %1454, %v605
      %v1456 = vpop.permute.xlu0 %1455
      %1459 = vset.pattern.permute.xlu0 0
      %1460 = vperm.xlu0 %1459, %v606
      %v1461 = vpop.permute.xlu0 %1460
      %1464 = vset.pattern.permute.xlu0 0
      %1465 = vperm.xlu0 %1464, %v607
      %v1466 = vpop.permute.xlu0 %1465
      %1469 = vset.pattern.permute.xlu0 0
      %1470 = vperm.xlu0 %1469, %v608
      %v1471 = vpop.permute.xlu0 %1470
      %1474 = vset.pattern.permute.xlu0 0
      %1475 = vperm.xlu0 %1474, %v609
      %v1476 = vpop.permute.xlu0 %1475
      %1479 = vset.pattern.permute.xlu0 0
      %1480 = vperm.xlu0 %1479, %v610
      %v1481 = vpop.permute.xlu0 %1480
      %1484 = vset.pattern.permute.xlu0 0
      %1485 = vperm.xlu0 %1484, %v611
      %v1486 = vpop.permute.xlu0 %1485
      %1489 = vset.pattern.permute.xlu0 0
      %1490 = vperm.xlu0 %1489, %v612
      %v1491 = vpop.permute.xlu0 %1490
      %1494 = vset.pattern.permute.xlu0 0
      %1495 = vperm.xlu0 %1494, %v613
      %v1496 = vpop.permute.xlu0 %1495
      %1499 = vset.pattern.permute.xlu0 0
      %1500 = vperm.xlu0 %1499, %v614
      %v1501 = vpop.permute.xlu0 %1500
      %1504 = vset.pattern.permute.xlu0 0
      %1505 = vperm.xlu0 %1504, %v615
      %v1506 = vpop.permute.xlu0 %1505
      %1509 = vset.pattern.permute.xlu0 0
      %1510 = vperm.xlu0 %1509, %v616
      %v1511 = vpop.permute.xlu0 %1510
      %1514 = vset.pattern.permute.xlu0 0
      %1515 = vperm.xlu0 %1514, %v617
      %v1516 = vpop.permute.xlu0 %1515
      %1519 = vset.pattern.permute.xlu0 0
      %1520 = vperm.xlu0 %1519, %v618
      %v1521 = vpop.permute.xlu0 %1520
      %1524 = vset.pattern.permute.xlu0 0
      %1525 = vperm.xlu0 %1524, %v619
      %v1526 = vpop.permute.xlu0 %1525
      %1529 = vset.pattern.permute.xlu0 0
      %1530 = vperm.xlu0 %1529, %v620
      %v1531 = vpop.permute.xlu0 %1530
      %1534 = vset.pattern.permute.xlu0 0
      %1535 = vperm.xlu0 %1534, %v621
      %v1536 = vpop.permute.xlu0 %1535
      %1539 = vset.pattern.permute.xlu0 0
      %1540 = vperm.xlu0 %1539, %v622
      %v1541 = vpop.permute.xlu0 %1540
      %1544 = vset.pattern.permute.xlu0 0
      %1545 = vperm.xlu0 %1544, %v623
      %v1546 = vpop.permute.xlu0 %1545
      %1549 = vset.pattern.permute.xlu0 0
      %1550 = vperm.xlu0 %1549, %v624
      %v1551 = vpop.permute.xlu0 %1550
      %1554 = vset.pattern.permute.xlu0 0
      %1555 = vperm.xlu0 %1554, %v625
      %v1556 = vpop.permute.xlu0 %1555
      %1559 = vset.pattern.permute.xlu0 0
      %1560 = vperm.xlu0 %1559, %v626
      %v1561 = vpop.permute.xlu0 %1560
      %1564 = vset.pattern.permute.xlu0 0
      %1565 = vperm.xlu0 %1564, %v627
      %v1566 = vpop.permute.xlu0 %1565
      %1569 = vset.pattern.permute.xlu0 0
      %1570 = vperm.xlu0 %1569, %v628
      %v1571 = vpop.permute.xlu0 %1570
      %1574 = vset.pattern.permute.xlu0 0
      %1575 = vperm.xlu0 %1574, %v629
      %v1576 = vpop.permute.xlu0 %1575
      %1579 = vset.pattern.permute.xlu0 0
      %1580 = vperm.xlu0 %1579, %v630
      %v1581 = vpop.permute.xlu0 %1580
      %1584 = vset.pattern.permute.xlu0 0
      %1585 = vperm.xlu0 %1584, %v631
      %v1586 = vpop.permute.xlu0 %1585
      %1589 = vset.pattern.permute.xlu0 0
      %1590 = vperm.xlu0 %1589, %v632
      %v1591 = vpop.permute.xlu0 %1590
      %1594 = vset.pattern.permute.xlu0 0
      %1595 = vperm.xlu0 %1594, %v633
      %v1596 = vpop.permute.xlu0 %1595
      %1599 = vset.pattern.permute.xlu0 0
      %1600 = vperm.xlu0 %1599, %v634
      %v1601 = vpop.permute.xlu0 %1600
      %1604 = vset.pattern.permute.xlu0 0
      %1605 = vperm.xlu0 %1604, %v635
      %v1606 = vpop.permute.xlu0 %1605
      %1609 = vset.pattern.permute.xlu0 0
      %1610 = vperm.xlu0 %1609, %v636
      %v1611 = vpop.permute.xlu0 %1610
      %1614 = vset.pattern.permute.xlu0 0
      %1615 = vperm.xlu0 %1614, %v637
      %v1616 = vpop.permute.xlu0 %1615
      %1619 = vset.pattern.permute.xlu0 0
      %1620 = vperm.xlu0 %1619, %v638
      %v1621 = vpop.permute.xlu0 %1620
      %1624 = vset.pattern.permute.xlu0 0
      %1625 = vperm.xlu0 %1624, %v639
      %v1626 = vpop.permute.xlu0 %1625
      %1629 = vset.pattern.permute.xlu0 0
      %1630 = vperm.xlu0 %1629, %v640
      %v1631 = vpop.permute.xlu0 %1630
      %1634 = vset.pattern.permute.xlu0 0
      %1635 = vperm.xlu0 %1634, %v641
      %v1636 = vpop.permute.xlu0 %1635
      %1639 = vset.pattern.permute.xlu0 0
      %1640 = vperm.xlu0 %1639, %v642
      %v1641 = vpop.permute.xlu0 %1640
      %1644 = vset.pattern.permute.xlu0 0
      %1645 = vperm.xlu0 %1644, %v643
      %v1646 = vpop.permute.xlu0 %1645
      %1649 = vset.pattern.permute.xlu0 0
      %1650 = vperm.xlu0 %1649, %v644
      %v1651 = vpop.permute.xlu0 %1650
      %1654 = vset.pattern.permute.xlu0 0
      %1655 = vperm.xlu0 %1654, %v645
      %v1656 = vpop.permute.xlu0 %1655
      %1659 = vset.pattern.permute.xlu0 0
      %1660 = vperm.xlu0 %1659, %v646
      %v1661 = vpop.permute.xlu0 %1660
      %1664 = vset.pattern.permute.xlu0 0
      %1665 = vperm.xlu0 %1664, %v647
      %v1666 = vpop.permute.xlu0 %1665
      %1669 = vset.pattern.permute.xlu0 0
      %1670 = vperm.xlu0 %1669, %v648
      %v1671 = vpop.permute.xlu0 %1670
      %1674 = vset.pattern.permute.xlu0 0
      %1675 = vperm.xlu0 %1674, %v649
      %v1676 = vpop.permute.xlu0 %1675
      %1679 = vset.pattern.permute.xlu0 0
      %1680 = vperm.xlu0 %1679, %v650
      %v1681 = vpop.permute.xlu0 %1680
      %1684 = vset.pattern.permute.xlu0 0
      %1685 = vperm.xlu0 %1684, %v651
      %v1686 = vpop.permute.xlu0 %1685
      %1689 = vset.pattern.permute.xlu0 0
      %1690 = vperm.xlu0 %1689, %v652
      %v1691 = vpop.permute.xlu0 %1690
      %1694 = vset.pattern.permute.xlu0 0
      %1695 = vperm.xlu0 %1694, %v653
      %v1696 = vpop.permute.xlu0 %1695
      %1699 = vset.pattern.permute.xlu0 0
      %1700 = vperm.xlu0 %1699, %v654
      %v1701 = vpop.permute.xlu0 %1700
      %1704 = vset.pattern.permute.xlu0 0
      %1705 = vperm.xlu0 %1704, %v655
      %v1706 = vpop.permute.xlu0 %1705
      %1709 = vset.pattern.permute.xlu0 0
      %1710 = vperm.xlu0 %1709, %v656
      %v1711 = vpop.permute.xlu0 %1710
      %1714 = vset.pattern.permute.xlu0 0
      %1715 = vperm.xlu0 %1714, %v657
      %v1716 = vpop.permute.xlu0 %1715
      %1719 = vset.pattern.permute.xlu0 0
      %1720 = vperm.xlu0 %1719, %v658
      %v1721 = vpop.permute.xlu0 %1720
      %1724 = vset.pattern.permute.xlu0 0
      %1725 = vperm.xlu0 %1724, %v659
      %v1726 = vpop.permute.xlu0 %1725
      %1729 = vset.pattern.permute.xlu0 0
      %1730 = vperm.xlu0 %1729, %v660
      %v1731 = vpop.permute.xlu0 %1730
      %1734 = vset.pattern.permute.xlu0 0
      %1735 = vperm.xlu0 %1734, %v661
      %v1736 = vpop.permute.xlu0 %1735
      %1739 = vset.pattern.permute.xlu0 0
      %1740 = vperm.xlu0 %1739, %v662
      %v1741 = vpop.permute.xlu0 %1740
      %1744 = vset.pattern.permute.xlu0 0
      %1745 = vperm.xlu0 %1744, %v663
      %v1746 = vpop.permute.xlu0 %1745
      %1749 = vset.pattern.permute.xlu0 0
      %1750 = vperm.xlu0 %1749, %v664
      %v1751 = vpop.permute.xlu0 %1750
      %1754 = vset.pattern.permute.xlu0 0
      %1755 = vperm.xlu0 %1754, %v665
      %v1756 = vpop.permute.xlu0 %1755
      %1759 = vset.pattern.permute.xlu0 0
      %1760 = vperm.xlu0 %1759, %v666
      %v1761 = vpop.permute.xlu0 %1760
      %1764 = vset.pattern.permute.xlu0 0
      %1765 = vperm.xlu0 %1764, %v667
      %v1766 = vpop.permute.xlu0 %1765
      %1769 = vset.pattern.permute.xlu0 0
      %1770 = vperm.xlu0 %1769, %v668
      %v1771 = vpop.permute.xlu0 %1770
      %1774 = vset.pattern.permute.xlu0 0
      %1775 = vperm.xlu0 %1774, %v669
      %v1776 = vpop.permute.xlu0 %1775
      %1779 = vset.pattern.permute.xlu0 0
      %1780 = vperm.xlu0 %1779, %v670
      %v1781 = vpop.permute.xlu0 %1780
      %1784 = vset.pattern.permute.xlu0 0
      %1785 = vperm.xlu0 %1784, %v671
      %v1786 = vpop.permute.xlu0 %1785
      %1789 = vset.pattern.permute.xlu0 0
      %1790 = vperm.xlu0 %1789, %v672
      %v1791 = vpop.permute.xlu0 %1790
      %1794 = vset.pattern.permute.xlu0 0
      %1795 = vperm.xlu0 %1794, %v673
      %v1796 = vpop.permute.xlu0 %1795
      %1799 = vset.pattern.permute.xlu0 0
      %1800 = vperm.xlu0 %1799, %v674
      %v1801 = vpop.permute.xlu0 %1800
      %1804 = vset.pattern.permute.xlu0 0
      %1805 = vperm.xlu0 %1804, %v675
      %v1806 = vpop.permute.xlu0 %1805
      %1809 = vset.pattern.permute.xlu0 0
      %1810 = vperm.xlu0 %1809, %v676
      %v1811 = vpop.permute.xlu0 %1810
      %1814 = vset.pattern.permute.xlu0 0
      %1815 = vperm.xlu0 %1814, %v677
      %v1816 = vpop.permute.xlu0 %1815
      %1819 = vset.pattern.permute.xlu0 0
      %1820 = vperm.xlu0 %1819, %v678
      %v1821 = vpop.permute.xlu0 %1820
      %1824 = vset.pattern.permute.xlu0 0
      %1825 = vperm.xlu0 %1824, %v679
      %v1826 = vpop.permute.xlu0 %1825
      %1829 = vset.pattern.permute.xlu0 0
      %1830 = vperm.xlu0 %1829, %v680
      %v1831 = vpop.permute.xlu0 %1830
      %1834 = vset.pattern.permute.xlu0 0
      %1835 = vperm.xlu0 %1834, %v681
      %v1836 = vpop.permute.xlu0 %1835
      %1839 = vset.pattern.permute.xlu0 0
      %1840 = vperm.xlu0 %1839, %v682
      %v1841 = vpop.permute.xlu0 %1840
      %1844 = vset.pattern.permute.xlu0 0
      %1845 = vperm.xlu0 %1844, %v683
      %v1846 = vpop.permute.xlu0 %1845
      %1849 = vset.pattern.permute.xlu0 0
      %1850 = vperm.xlu0 %1849, %v684
      %v1851 = vpop.permute.xlu0 %1850
      %1854 = vset.pattern.permute.xlu0 0
      %1855 = vperm.xlu0 %1854, %v685
      %v1856 = vpop.permute.xlu0 %1855
      %1859 = vset.pattern.permute.xlu0 0
      %1860 = vperm.xlu0 %1859, %v686
      %v1861 = vpop.permute.xlu0 %1860
      %1864 = vset.pattern.permute.xlu0 0
      %1865 = vperm.xlu0 %1864, %v687
      %v1866 = vpop.permute.xlu0 %1865
      %1869 = vset.pattern.permute.xlu0 0
      %1870 = vperm.xlu0 %1869, %v688
      %v1871 = vpop.permute.xlu0 %1870
      %1874 = vset.pattern.permute.xlu0 0
      %1875 = vperm.xlu0 %1874, %v689
      %v1876 = vpop.permute.xlu0 %1875
      %1879 = vset.pattern.permute.xlu0 0
      %1880 = vperm.xlu0 %1879, %v690
      %v1881 = vpop.permute.xlu0 %1880
      %1884 = vset.pattern.permute.xlu0 0
      %1885 = vperm.xlu0 %1884, %v691
      %v1886 = vpop.permute.xlu0 %1885
      %1889 = vset.pattern.permute.xlu0 0
      %1890 = vperm.xlu0 %1889, %v692
      %v1891 = vpop.permute.xlu0 %1890
      %1894 = vset.pattern.permute.xlu0 0
      %1895 = vperm.xlu0 %1894, %v693
      %v1896 = vpop.permute.xlu0 %1895
      %1899 = vset.pattern.permute.xlu0 0
      %1900 = vperm.xlu0 %1899, %v694
      %v1901 = vpop.permute.xlu0 %1900
      %1904 = vset.pattern.permute.xlu0 0
      %1905 = vperm.xlu0 %1904, %v695
      %v1906 = vpop.permute.xlu0 %1905
      %1909 = vset.pattern.permute.xlu0 0
      %1910 = vperm.xlu0 %1909, %v696
      %v1911 = vpop.permute.xlu0 %1910
      %1914 = vset.pattern.permute.xlu0 0
      %1915 = vperm.xlu0 %1914, %v697
      %v1916 = vpop.permute.xlu0 %1915
      %1919 = vset.pattern.permute.xlu0 0
      %1920 = vperm.xlu0 %1919, %v698
      %v1921 = vpop.permute.xlu0 %1920
      %1924 = vset.pattern.permute.xlu0 0
      %1925 = vperm.xlu0 %1924, %v699
      %v1926 = vpop.permute.xlu0 %1925
      %1929 = vset.pattern.permute.xlu0 0
      %1930 = vperm.xlu0 %1929, %v700
      %v1931 = vpop.permute.xlu0 %1930
      %1934 = vset.pattern.permute.xlu0 0
      %1935 = vperm.xlu0 %1934, %v701
      %v1936 = vpop.permute.xlu0 %1935
      %1939 = vset.pattern.permute.xlu0 0
      %1940 = vperm.xlu0 %1939, %v702
      %v1941 = vpop.permute.xlu0 %1940
      %1944 = vset.pattern.permute.xlu0 0
      %1945 = vperm.xlu0 %1944, %v703
      %v1946 = vpop.permute.xlu0 %1945
      %1949 = vset.pattern.permute.xlu0 0
      %1950 = vperm.xlu0 %1949, %v704
      %v1951 = vpop.permute.xlu0 %1950
      %1954 = vset.pattern.permute.xlu0 0
      %1955 = vperm.xlu0 %1954, %v705
      %v1956 = vpop.permute.xlu0 %1955
      %1959 = vset.pattern.permute.xlu0 0
      %1960 = vperm.xlu0 %1959, %v706
      %v1961 = vpop.permute.xlu0 %1960
      %1964 = vset.pattern.permute.xlu0 0
      %1965 = vperm.xlu0 %1964, %v707
      %v1966 = vpop.permute.xlu0 %1965
      %1969 = vset.pattern.permute.xlu0 0
      %1970 = vperm.xlu0 %1969, %v708
      %v1971 = vpop.permute.xlu0 %1970
      %1974 = vset.pattern.permute.xlu0 0
      %1975 = vperm.xlu0 %1974, %v709
      %v1976 = vpop.permute.xlu0 %1975
      %1979 = vset.pattern.permute.xlu0 0
      %1980 = vperm.xlu0 %1979, %v710
      %v1981 = vpop.permute.xlu0 %1980
      %1984 = vset.pattern.permute.xlu0 0
      %1985 = vperm.xlu0 %1984, %v711
      %v1986 = vpop.permute.xlu0 %1985
      %1989 = vset.pattern.permute.xlu0 0
      %1990 = vperm.xlu0 %1989, %v712
      %v1991 = vpop.permute.xlu0 %1990
      %1994 = vset.pattern.permute.xlu0 0
      %1995 = vperm.xlu0 %1994, %v713
      %v1996 = vpop.permute.xlu0 %1995
      %1999 = vset.pattern.permute.xlu0 0
      %2000 = vperm.xlu0 %1999, %v714
      %v2001 = vpop.permute.xlu0 %2000
      %2004 = vset.pattern.permute.xlu0 0
      %2005 = vperm.xlu0 %2004, %v715
      %v2006 = vpop.permute.xlu0 %2005
      %2009 = vset.pattern.permute.xlu0 0
      %2010 = vperm.xlu0 %2009, %v716
      %v2011 = vpop.permute.xlu0 %2010
      %2014 = vset.pattern.permute.xlu0 0
      %2015 = vperm.xlu0 %2014, %v717
      %v2016 = vpop.permute.xlu0 %2015
      %2019 = vset.pattern.permute.xlu0 0
      %2020 = vperm.xlu0 %2019, %v718
      %v2021 = vpop.permute.xlu0 %2020
      %2024 = vset.pattern.permute.xlu0 0
      %2025 = vperm.xlu0 %2024, %v719
      %v2026 = vpop.permute.xlu0 %2025
      %2029 = vset.pattern.permute.xlu0 0
      %2030 = vperm.xlu0 %2029, %v720
      %v2031 = vpop.permute.xlu0 %2030
      %2034 = vset.pattern.permute.xlu0 0
      %2035 = vperm.xlu0 %2034, %v721
      %v2036 = vpop.permute.xlu0 %2035
      %2039 = vset.pattern.permute.xlu0 0
      %2040 = vperm.xlu0 %2039, %v722
      %v2041 = vpop.permute.xlu0 %2040
      %2044 = vset.pattern.permute.xlu0 0
      %2045 = vperm.xlu0 %2044, %v723
      %v2046 = vpop.permute.xlu0 %2045
      %2049 = vset.pattern.permute.xlu0 0
      %2050 = vperm.xlu0 %2049, %v724
      %v2051 = vpop.permute.xlu0 %2050
      %2054 = vset.pattern.permute.xlu0 0
      %2055 = vperm.xlu0 %2054, %v725
      %v2056 = vpop.permute.xlu0 %2055
      %2059 = vset.pattern.permute.xlu0 0
      %2060 = vperm.xlu0 %2059, %v726
      %v2061 = vpop.permute.xlu0 %2060
      %2064 = vset.pattern.permute.xlu0 0
      %2065 = vperm.xlu0 %2064, %v727
      %v2066 = vpop.permute.xlu0 %2065
      %2069 = vset.pattern.permute.xlu0 0
      %2070 = vperm.xlu0 %2069, %v728
      %v2071 = vpop.permute.xlu0 %2070
      %2074 = vset.pattern.permute.xlu0 0
      %2075 = vperm.xlu0 %2074, %v729
      %v2076 = vpop.permute.xlu0 %2075
      %2079 = vset.pattern.permute.xlu0 0
      %2080 = vperm.xlu0 %2079, %v730
      %v2081 = vpop.permute.xlu0 %2080
      %2084 = vset.pattern.permute.xlu0 0
      %2085 = vperm.xlu0 %2084, %v731
      %v2086 = vpop.permute.xlu0 %2085
      %2089 = vset.pattern.permute.xlu0 0
      %2090 = vperm.xlu0 %2089, %v732
      %v2091 = vpop.permute.xlu0 %2090
      %2094 = vset.pattern.permute.xlu0 0
      %2095 = vperm.xlu0 %2094, %v733
      %v2096 = vpop.permute.xlu0 %2095
      %2099 = vset.pattern.permute.xlu0 0
      %2100 = vperm.xlu0 %2099, %v734
      %v2101 = vpop.permute.xlu0 %2100
      %2104 = vset.pattern.permute.xlu0 0
      %2105 = vperm.xlu0 %2104, %v735
      %v2106 = vpop.permute.xlu0 %2105
      %2109 = vset.pattern.permute.xlu0 0
      %2110 = vperm.xlu0 %2109, %v736
      %v2111 = vpop.permute.xlu0 %2110
      %2114 = vset.pattern.permute.xlu0 0
      %2115 = vperm.xlu0 %2114, %v737
      %v2116 = vpop.permute.xlu0 %2115
      %2119 = vset.pattern.permute.xlu0 0
      %2120 = vperm.xlu0 %2119, %v738
      %v2121 = vpop.permute.xlu0 %2120
      %2124 = vset.pattern.permute.xlu0 0
      %2125 = vperm.xlu0 %2124, %v739
      %v2126 = vpop.permute.xlu0 %2125
      %2129 = vset.pattern.permute.xlu0 0
      %2130 = vperm.xlu0 %2129, %v740
      %v2131 = vpop.permute.xlu0 %2130
      %2134 = vset.pattern.permute.xlu0 0
      %2135 = vperm.xlu0 %2134, %v741
      %v2136 = vpop.permute.xlu0 %2135
      %2139 = vset.pattern.permute.xlu0 0
      %2140 = vperm.xlu0 %2139, %v742
      %v2141 = vpop.permute.xlu0 %2140
      %2144 = vset.pattern.permute.xlu0 0
      %2145 = vperm.xlu0 %2144, %v743
      %v2146 = vpop.permute.xlu0 %2145
      %2149 = vset.pattern.permute.xlu0 0
      %2150 = vperm.xlu0 %2149, %v744
      %v2151 = vpop.permute.xlu0 %2150
      %2154 = vset.pattern.permute.xlu0 0
      %2155 = vperm.xlu0 %2154, %v745
      %v2156 = vpop.permute.xlu0 %2155
      %2159 = vset.pattern.permute.xlu0 0
      %2160 = vperm.xlu0 %2159, %v746
      %v2161 = vpop.permute.xlu0 %2160
      %2164 = vset.pattern.permute.xlu0 0
      %2165 = vperm.xlu0 %2164, %v747
      %v2166 = vpop.permute.xlu0 %2165
      %2169 = vset.pattern.permute.xlu0 0
      %2170 = vperm.xlu0 %2169, %v748
      %v2171 = vpop.permute.xlu0 %2170
      %2174 = vset.pattern.permute.xlu0 0
      %2175 = vperm.xlu0 %2174, %v749
      %v2176 = vpop.permute.xlu0 %2175
      %2179 = vset.pattern.permute.xlu0 0
      %2180 = vperm.xlu0 %2179, %v750
      %v2181 = vpop.permute.xlu0 %2180
      %2184 = vset.pattern.permute.xlu0 0
      %2185 = vperm.xlu0 %2184, %v751
      %v2186 = vpop.permute.xlu0 %2185
      %2189 = vset.pattern.permute.xlu0 0
      %2190 = vperm.xlu0 %2189, %v752
      %v2191 = vpop.permute.xlu0 %2190
      %v2193 = vmul.f32 %v177, %v756
      %v2194 = vmul.f32 %v178, %v761
      %v2195 = vmul.f32 %v179, %v766
      %v2196 = vmul.f32 %v180, %v771
      %v2197 = vmul.f32 %v181, %v776
      %v2198 = vmul.f32 %v182, %v781
      %v2199 = vmul.f32 %v183, %v786
      %v2200 = vmul.f32 %v184, %v791
      %v2201 = vmul.f32 %v185, %v796
      %v2202 = vmul.f32 %v186, %v801
      %v2203 = vmul.f32 %v187, %v806
      %v2204 = vmul.f32 %v188, %v811
      %v2205 = vmul.f32 %v189, %v816
      %v2206 = vmul.f32 %v190, %v821
      %v2207 = vmul.f32 %v191, %v826
      %v2208 = vmul.f32 %v192, %v831
      %v2209 = vmul.f32 %v193, %v836
      %v2210 = vmul.f32 %v194, %v841
      %v2211 = vmul.f32 %v195, %v846
      %v2212 = vmul.f32 %v196, %v851
      %v2213 = vmul.f32 %v197, %v856
      %v2214 = vmul.f32 %v198, %v861
      %v2215 = vmul.f32 %v199, %v866
      %v2216 = vmul.f32 %v200, %v871
      %v2217 = vmul.f32 %v201, %v876
      %v2218 = vmul.f32 %v202, %v881
      %v2219 = vmul.f32 %v203, %v886
      %v2220 = vmul.f32 %v204, %v891
      %v2221 = vmul.f32 %v205, %v896
      %v2222 = vmul.f32 %v206, %v901
      %v2223 = vmul.f32 %v207, %v906
      %v2224 = vmul.f32 %v208, %v911
      %v2225 = vmul.f32 %v209, %v916
      %v2226 = vmul.f32 %v210, %v921
      %v2227 = vmul.f32 %v211, %v926
      %v2228 = vmul.f32 %v212, %v931
      %v2229 = vmul.f32 %v213, %v936
      %v2230 = vmul.f32 %v214, %v941
      %v2231 = vmul.f32 %v215, %v946
      %v2232 = vmul.f32 %v216, %v951
      %v2233 = vmul.f32 %v217, %v956
      %v2234 = vmul.f32 %v218, %v961
      %v2235 = vmul.f32 %v219, %v966
      %v2236 = vmul.f32 %v220, %v971
      %v2237 = vmul.f32 %v221, %v976
      %v2238 = vmul.f32 %v222, %v981
      %v2239 = vmul.f32 %v223, %v986
      %v2240 = vmul.f32 %v224, %v991
      %v2241 = vmul.f32 %v225, %v996
      %v2242 = vmul.f32 %v226, %v1001
      %v2243 = vmul.f32 %v227, %v1006
      %v2244 = vmul.f32 %v228, %v1011
      %v2245 = vmul.f32 %v229, %v1016
      %v2246 = vmul.f32 %v230, %v1021
      %v2247 = vmul.f32 %v231, %v1026
      %v2248 = vmul.f32 %v232, %v1031
      %v2249 = vmul.f32 %v233, %v1036
      %v2250 = vmul.f32 %v234, %v1041
      %v2251 = vmul.f32 %v235, %v1046
      %v2252 = vmul.f32 %v236, %v1051
      %v2253 = vmul.f32 %v237, %v1056
      %v2254 = vmul.f32 %v238, %v1061
      %v2255 = vmul.f32 %v239, %v1066
      %v2256 = vmul.f32 %v240, %v1071
      %v2257 = vmul.f32 %v241, %v1076
      %v2258 = vmul.f32 %v242, %v1081
      %v2259 = vmul.f32 %v243, %v1086
      %v2260 = vmul.f32 %v244, %v1091
      %v2261 = vmul.f32 %v245, %v1096
      %v2262 = vmul.f32 %v246, %v1101
      %v2263 = vmul.f32 %v247, %v1106
      %v2264 = vmul.f32 %v248, %v1111
      %v2265 = vmul.f32 %v249, %v1116
      %v2266 = vmul.f32 %v250, %v1121
      %v2267 = vmul.f32 %v251, %v1126
      %v2268 = vmul.f32 %v252, %v1131
      %v2269 = vmul.f32 %v253, %v1136
      %v2270 = vmul.f32 %v254, %v1141
      %v2271 = vmul.f32 %v255, %v1146
      %v2272 = vmul.f32 %v256, %v1151
      %v2273 = vmul.f32 %v257, %v1156
      %v2274 = vmul.f32 %v258, %v1161
      %v2275 = vmul.f32 %v259, %v1166
      %v2276 = vmul.f32 %v260, %v1171
      %v2277 = vmul.f32 %v261, %v1176
      %v2278 = vmul.f32 %v262, %v1181
      %v2279 = vmul.f32 %v263, %v1186
      %v2280 = vmul.f32 %v264, %v1191
      %v2281 = vmul.f32 %v265, %v1196
      %v2282 = vmul.f32 %v266, %v1201
      %v2283 = vmul.f32 %v267, %v1206
      %v2284 = vmul.f32 %v268, %v1211
      %v2285 = vmul.f32 %v269, %v1216
      %v2286 = vmul.f32 %v270, %v1221
      %v2287 = vmul.f32 %v271, %v1226
      %v2288 = vmul.f32 %v272, %v1231
      %v2289 = vmul.f32 %v273, %v1236
      %v2290 = vmul.f32 %v274, %v1241
      %v2291 = vmul.f32 %v275, %v1246
      %v2292 = vmul.f32 %v276, %v1251
      %v2293 = vmul.f32 %v277, %v1256
      %v2294 = vmul.f32 %v278, %v1261
      %v2295 = vmul.f32 %v279, %v1266
      %v2296 = vmul.f32 %v280, %v1271
      %v2297 = vmul.f32 %v281, %v1276
      %v2298 = vmul.f32 %v282, %v1281
      %v2299 = vmul.f32 %v283, %v1286
      %v2300 = vmul.f32 %v284, %v1291
      %v2301 = vmul.f32 %v285, %v1296
      %v2302 = vmul.f32 %v286, %v1301
      %v2303 = vmul.f32 %v287, %v1306
      %v2304 = vmul.f32 %v288, %v1311
      %v2305 = vmul.f32 %v289, %v1316
      %v2306 = vmul.f32 %v290, %v1321
      %v2307 = vmul.f32 %v291, %v1326
      %v2308 = vmul.f32 %v292, %v1331
      %v2309 = vmul.f32 %v293, %v1336
      %v2310 = vmul.f32 %v294, %v1341
      %v2311 = vmul.f32 %v295, %v1346
      %v2312 = vmul.f32 %v296, %v1351
      %v2313 = vmul.f32 %v297, %v1356
      %v2314 = vmul.f32 %v298, %v1361
      %v2315 = vmul.f32 %v299, %v1366
      %v2316 = vmul.f32 %v300, %v1371
      %v2317 = vmul.f32 %v301, %v1376
      %v2318 = vmul.f32 %v302, %v1381
      %v2319 = vmul.f32 %v303, %v1386
      %v2320 = vmul.f32 %v304, %v1391
      %v2321 = vmul.f32 %v305, %v1396
      %v2322 = vmul.f32 %v306, %v1401
      %v2323 = vmul.f32 %v307, %v1406
      %v2324 = vmul.f32 %v308, %v1411
      %v2325 = vmul.f32 %v309, %v1416
      %v2326 = vmul.f32 %v310, %v1421
      %v2327 = vmul.f32 %v311, %v1426
      %v2328 = vmul.f32 %v312, %v1431
      %v2329 = vmul.f32 %v313, %v1436
      %v2330 = vmul.f32 %v314, %v1441
      %v2331 = vmul.f32 %v315, %v1446
      %v2332 = vmul.f32 %v316, %v1451
      %v2333 = vmul.f32 %v317, %v1456
      %v2334 = vmul.f32 %v318, %v1461
      %v2335 = vmul.f32 %v319, %v1466
      %v2336 = vmul.f32 %v320, %v1471
      %v2337 = vmul.f32 %v321, %v1476
      %v2338 = vmul.f32 %v322, %v1481
      %v2339 = vmul.f32 %v323, %v1486
      %v2340 = vmul.f32 %v324, %v1491
      %v2341 = vmul.f32 %v325, %v1496
      %v2342 = vmul.f32 %v326, %v1501
      %v2343 = vmul.f32 %v327, %v1506
      %v2344 = vmul.f32 %v328, %v1511
      %v2345 = vmul.f32 %v329, %v1516
      %v2346 = vmul.f32 %v330, %v1521
      %v2347 = vmul.f32 %v331, %v1526
      %v2348 = vmul.f32 %v332, %v1531
      %v2349 = vmul.f32 %v333, %v1536
      %v2350 = vmul.f32 %v334, %v1541
      %v2351 = vmul.f32 %v335, %v1546
      %v2352 = vmul.f32 %v336, %v1551
      %v2353 = vmul.f32 %v337, %v1556
      %v2354 = vmul.f32 %v338, %v1561
      %v2355 = vmul.f32 %v339, %v1566
      %v2356 = vmul.f32 %v340, %v1571
      %v2357 = vmul.f32 %v341, %v1576
      %v2358 = vmul.f32 %v342, %v1581
      %v2359 = vmul.f32 %v343, %v1586
      %v2360 = vmul.f32 %v344, %v1591
      %v2361 = vmul.f32 %v345, %v1596
      %v2362 = vmul.f32 %v346, %v1601
      %v2363 = vmul.f32 %v347, %v1606
      %v2364 = vmul.f32 %v348, %v1611
      %v2365 = vmul.f32 %v349, %v1616
      %v2366 = vmul.f32 %v350, %v1621
      %v2367 = vmul.f32 %v351, %v1626
      %v2368 = vmul.f32 %v352, %v1631
      %v2369 = vmul.f32 %v353, %v1636
      %v2370 = vmul.f32 %v354, %v1641
      %v2371 = vmul.f32 %v355, %v1646
      %v2372 = vmul.f32 %v356, %v1651
      %v2373 = vmul.f32 %v357, %v1656
      %v2374 = vmul.f32 %v358, %v1661
      %v2375 = vmul.f32 %v359, %v1666
      %v2376 = vmul.f32 %v360, %v1671
      %v2377 = vmul.f32 %v361, %v1676
      %v2378 = vmul.f32 %v362, %v1681
      %v2379 = vmul.f32 %v363, %v1686
      %v2380 = vmul.f32 %v364, %v1691
      %v2381 = vmul.f32 %v365, %v1696
      %v2382 = vmul.f32 %v366, %v1701
      %v2383 = vmul.f32 %v367, %v1706
      %v2384 = vmul.f32 %v368, %v1711
      %v2385 = vmul.f32 %v369, %v1716
      %v2386 = vmul.f32 %v370, %v1721
      %v2387 = vmul.f32 %v371, %v1726
      %v2388 = vmul.f32 %v372, %v1731
      %v2389 = vmul.f32 %v373, %v1736
      %v2390 = vmul.f32 %v374, %v1741
      %v2391 = vmul.f32 %v375, %v1746
      %v2392 = vmul.f32 %v376, %v1751
      %v2393 = vmul.f32 %v377, %v1756
      %v2394 = vmul.f32 %v378, %v1761
      %v2395 = vmul.f32 %v379, %v1766
      %v2396 = vmul.f32 %v380, %v1771
      %v2397 = vmul.f32 %v381, %v1776
      %v2398 = vmul.f32 %v382, %v1781
      %v2399 = vmul.f32 %v383, %v1786
      %v2400 = vmul.f32 %v384, %v1791
      %v2401 = vmul.f32 %v385, %v1796
      %v2402 = vmul.f32 %v386, %v1801
      %v2403 = vmul.f32 %v387, %v1806
      %v2404 = vmul.f32 %v388, %v1811
      %v2405 = vmul.f32 %v389, %v1816
      %v2406 = vmul.f32 %v390, %v1821
      %v2407 = vmul.f32 %v391, %v1826
      %v2408 = vmul.f32 %v392, %v1831
      %v2409 = vmul.f32 %v393, %v1836
      %v2410 = vmul.f32 %v394, %v1841
      %v2411 = vmul.f32 %v395, %v1846
      %v2412 = vmul.f32 %v396, %v1851
      %v2413 = vmul.f32 %v397, %v1856
      %v2414 = vmul.f32 %v398, %v1861
      %v2415 = vmul.f32 %v399, %v1866
      %v2416 = vmul.f32 %v400, %v1871
      %v2417 = vmul.f32 %v401, %v1876
      %v2418 = vmul.f32 %v402, %v1881
      %v2419 = vmul.f32 %v403, %v1886
      %v2420 = vmul.f32 %v404, %v1891
      %v2421 = vmul.f32 %v405, %v1896
      %v2422 = vmul.f32 %v406, %v1901
      %v2423 = vmul.f32 %v407, %v1906
      %v2424 = vmul.f32 %v408, %v1911
      %v2425 = vmul.f32 %v409, %v1916
      %v2426 = vmul.f32 %v410, %v1921
      %v2427 = vmul.f32 %v411, %v1926
      %v2428 = vmul.f32 %v412, %v1931
      %v2429 = vmul.f32 %v413, %v1936
      %v2430 = vmul.f32 %v414, %v1941
      %v2431 = vmul.f32 %v415, %v1946
      %v2432 = vmul.f32 %v416, %v1951
      %v2433 = vmul.f32 %v417, %v1956
      %v2434 = vmul.f32 %v418, %v1961
      %v2435 = vmul.f32 %v419, %v1966
      %v2436 = vmul.f32 %v420, %v1971
      %v2437 = vmul.f32 %v421, %v1976
      %v2438 = vmul.f32 %v422, %v1981
      %v2439 = vmul.f32 %v423, %v1986
      %v2440 = vmul.f32 %v424, %v1991
      %v2441 = vmul.f32 %v425, %v1996
      %v2442 = vmul.f32 %v426, %v2001
      %v2443 = vmul.f32 %v427, %v2006
      %v2444 = vmul.f32 %v428, %v2011
      %v2445 = vmul.f32 %v429, %v2016
      %v2446 = vmul.f32 %v430, %v2021
      %v2447 = vmul.f32 %v431, %v2026
      %v2448 = vmul.f32 %v432, %v2031
      %v2449 = vmul.f32 %v433, %v2036
      %v2450 = vmul.f32 %v434, %v2041
      %v2451 = vmul.f32 %v435, %v2046
      %v2452 = vmul.f32 %v436, %v2051
      %v2453 = vmul.f32 %v437, %v2056
      %v2454 = vmul.f32 %v438, %v2061
      %v2455 = vmul.f32 %v439, %v2066
      %v2456 = vmul.f32 %v440, %v2071
      %v2457 = vmul.f32 %v441, %v2076
      %v2458 = vmul.f32 %v442, %v2081
      %v2459 = vmul.f32 %v443, %v2086
      %v2460 = vmul.f32 %v444, %v2091
      %v2461 = vmul.f32 %v445, %v2096
      %v2462 = vmul.f32 %v446, %v2101
      %v2463 = vmul.f32 %v447, %v2106
      %v2464 = vmul.f32 %v448, %v2111
      %v2465 = vmul.f32 %v449, %v2116
      %v2466 = vmul.f32 %v450, %v2121
      %v2467 = vmul.f32 %v451, %v2126
      %v2468 = vmul.f32 %v452, %v2131
      %v2469 = vmul.f32 %v453, %v2136
      %v2470 = vmul.f32 %v454, %v2141
      %v2471 = vmul.f32 %v455, %v2146
      %v2472 = vmul.f32 %v456, %v2151
      %v2473 = vmul.f32 %v457, %v2156
      %v2474 = vmul.f32 %v458, %v2161
      %v2475 = vmul.f32 %v459, %v2166
      %v2476 = vmul.f32 %v460, %v2171
      %v2477 = vmul.f32 %v461, %v2176
      %v2478 = vmul.f32 %v462, %v2181
      %v2479 = vmul.f32 %v463, %v2186
      %v2480 = vmul.f32 %v464, %v2191
      %v2481 = vld [vmem:[%s169] sm:$0xff]
      %v2482 = vld [vmem:[%s169 + $0x8] sm:$0xff]
      %v2483 = vld [vmem:[%s169 + $0x10] sm:$0xff]
      %v2484 = vld [vmem:[%s169 + $0x18] sm:$0xff]
      %v2485 = vld [vmem:[%s169 + $0x20] sm:$0xff]
      %v2486 = vld [vmem:[%s169 + $0x28] sm:$0xff]
      %v2487 = vld [vmem:[%s169 + $0x30] sm:$0xff]
      %v2488 = vld [vmem:[%s169 + $0x38] sm:$0xff]
      %v2489 = vld [vmem:[%s169 + $0x40] sm:$0xff]
      %v2490 = vld [vmem:[%s169 + $0x48] sm:$0xff]
      %v2491 = vld [vmem:[%s169 + $0x50] sm:$0xff]
      %v2492 = vld [vmem:[%s169 + $0x58] sm:$0xff]
      %v2493 = vld [vmem:[%s169 + $0x60] sm:$0xff]
      %v2494 = vld [vmem:[%s169 + $0x68] sm:$0xff]
      %v2495 = vld [vmem:[%s169 + $0x70] sm:$0xff]
      %v2496 = vld [vmem:[%s169 + $0x78] sm:$0xff]
      %v2497 = vld [vmem:[%s169 + $0x80] sm:$0xff]
      %v2498 = vld [vmem:[%s169 + $0x88] sm:$0xff]
      %v2499 = vld [vmem:[%s169 + $0x90] sm:$0xff]
      %v2500 = vld [vmem:[%s169 + $0x98] sm:$0xff]
      %v2501 = vld [vmem:[%s169 + $0xa0] sm:$0xff]
      %v2502 = vld [vmem:[%s169 + $0xa8] sm:$0xff]
      %v2503 = vld [vmem:[%s169 + $0xb0] sm:$0xff]
      %v2504 = vld [vmem:[%s169 + $0xb8] sm:$0xff]
      %v2505 = vld [vmem:[%s169 + $0xc0] sm:$0xff]
      %v2506 = vld [vmem:[%s169 + $0xc8] sm:$0xff]
      %v2507 = vld [vmem:[%s169 + $0xd0] sm:$0xff]
      %v2508 = vld [vmem:[%s169 + $0xd8] sm:$0xff]
      %v2509 = vld [vmem:[%s169 + $0xe0] sm:$0xff]
      %v2510 = vld [vmem:[%s169 + $0xe8] sm:$0xff]
      %v2511 = vld [vmem:[%s169 + $0xf0] sm:$0xff]
      %v2512 = vld [vmem:[%s169 + $0xf8] sm:$0xff]
      %v2513 = vld [vmem:[%s169 + $0x100] sm:$0xff]
      %v2514 = vld [vmem:[%s169 + $0x108] sm:$0xff]
      %v2515 = vld [vmem:[%s169 + $0x110] sm:$0xff]
      %v2516 = vld [vmem:[%s169 + $0x118] sm:$0xff]
      %v2517 = vld [vmem:[%s169 + $0x120] sm:$0xff]
      %v2518 = vld [vmem:[%s169 + $0x128] sm:$0xff]
      %v2519 = vld [vmem:[%s169 + $0x130] sm:$0xff]
      %v2520 = vld [vmem:[%s169 + $0x138] sm:$0xff]
      %v2521 = vld [vmem:[%s169 + $0x140] sm:$0xff]
      %v2522 = vld [vmem:[%s169 + $0x148] sm:$0xff]
      %v2523 = vld [vmem:[%s169 + $0x150] sm:$0xff]
      %v2524 = vld [vmem:[%s169 + $0x158] sm:$0xff]
      %v2525 = vld [vmem:[%s169 + $0x160] sm:$0xff]
      %v2526 = vld [vmem:[%s169 + $0x168] sm:$0xff]
      %v2527 = vld [vmem:[%s169 + $0x170] sm:$0xff]
      %v2528 = vld [vmem:[%s169 + $0x178] sm:$0xff]
      %v2529 = vld [vmem:[%s169 + $0x180] sm:$0xff]
      %v2530 = vld [vmem:[%s169 + $0x188] sm:$0xff]
      %v2531 = vld [vmem:[%s169 + $0x190] sm:$0xff]
      %v2532 = vld [vmem:[%s169 + $0x198] sm:$0xff]
      %v2533 = vld [vmem:[%s169 + $0x1a0] sm:$0xff]
      %v2534 = vld [vmem:[%s169 + $0x1a8] sm:$0xff]
      %v2535 = vld [vmem:[%s169 + $0x1b0] sm:$0xff]
      %v2536 = vld [vmem:[%s169 + $0x1b8] sm:$0xff]
      %v2537 = vld [vmem:[%s169 + $0x1c0] sm:$0xff]
      %v2538 = vld [vmem:[%s169 + $0x1c8] sm:$0xff]
      %v2539 = vld [vmem:[%s169 + $0x1d0] sm:$0xff]
      %v2540 = vld [vmem:[%s169 + $0x1d8] sm:$0xff]
      %v2541 = vld [vmem:[%s169 + $0x1e0] sm:$0xff]
      %v2542 = vld [vmem:[%s169 + $0x1e8] sm:$0xff]
      %v2543 = vld [vmem:[%s169 + $0x1f0] sm:$0xff]
      %v2544 = vld [vmem:[%s169 + $0x1f8] sm:$0xff]
      %v2545 = vld [vmem:[%s169 + $0x200] sm:$0xff]
      %v2546 = vld [vmem:[%s169 + $0x208] sm:$0xff]
      %v2547 = vld [vmem:[%s169 + $0x210] sm:$0xff]
      %v2548 = vld [vmem:[%s169 + $0x218] sm:$0xff]
      %v2549 = vld [vmem:[%s169 + $0x220] sm:$0xff]
      %v2550 = vld [vmem:[%s169 + $0x228] sm:$0xff]
      %v2551 = vld [vmem:[%s169 + $0x230] sm:$0xff]
      %v2552 = vld [vmem:[%s169 + $0x238] sm:$0xff]
      %v2553 = vld [vmem:[%s169 + $0x240] sm:$0xff]
      %v2554 = vld [vmem:[%s169 + $0x248] sm:$0xff]
      %v2555 = vld [vmem:[%s169 + $0x250] sm:$0xff]
      %v2556 = vld [vmem:[%s169 + $0x258] sm:$0xff]
      %v2557 = vld [vmem:[%s169 + $0x260] sm:$0xff]
      %v2558 = vld [vmem:[%s169 + $0x268] sm:$0xff]
      %v2559 = vld [vmem:[%s169 + $0x270] sm:$0xff]
      %v2560 = vld [vmem:[%s169 + $0x278] sm:$0xff]
      %v2561 = vld [vmem:[%s169 + $0x280] sm:$0xff]
      %v2562 = vld [vmem:[%s169 + $0x288] sm:$0xff]
      %v2563 = vld [vmem:[%s169 + $0x290] sm:$0xff]
      %v2564 = vld [vmem:[%s169 + $0x298] sm:$0xff]
      %v2565 = vld [vmem:[%s169 + $0x2a0] sm:$0xff]
      %v2566 = vld [vmem:[%s169 + $0x2a8] sm:$0xff]
      %v2567 = vld [vmem:[%s169 + $0x2b0] sm:$0xff]
      %v2568 = vld [vmem:[%s169 + $0x2b8] sm:$0xff]
      %v2569 = vld [vmem:[%s169 + $0x2c0] sm:$0xff]
      %v2570 = vld [vmem:[%s169 + $0x2c8] sm:$0xff]
      %v2571 = vld [vmem:[%s169 + $0x2d0] sm:$0xff]
      %v2572 = vld [vmem:[%s169 + $0x2d8] sm:$0xff]
      %v2573 = vld [vmem:[%s169 + $0x2e0] sm:$0xff]
      %v2574 = vld [vmem:[%s169 + $0x2e8] sm:$0xff]
      %v2575 = vld [vmem:[%s169 + $0x2f0] sm:$0xff]
      %v2576 = vld [vmem:[%s169 + $0x2f8] sm:$0xff]
      %v2577 = vld [vmem:[%s169 + $0x300] sm:$0xff]
      %v2578 = vld [vmem:[%s169 + $0x308] sm:$0xff]
      %v2579 = vld [vmem:[%s169 + $0x310] sm:$0xff]
      %v2580 = vld [vmem:[%s169 + $0x318] sm:$0xff]
      %v2581 = vld [vmem:[%s169 + $0x320] sm:$0xff]
      %v2582 = vld [vmem:[%s169 + $0x328] sm:$0xff]
      %v2583 = vld [vmem:[%s169 + $0x330] sm:$0xff]
      %v2584 = vld [vmem:[%s169 + $0x338] sm:$0xff]
      %v2585 = vld [vmem:[%s169 + $0x340] sm:$0xff]
      %v2586 = vld [vmem:[%s169 + $0x348] sm:$0xff]
      %v2587 = vld [vmem:[%s169 + $0x350] sm:$0xff]
      %v2588 = vld [vmem:[%s169 + $0x358] sm:$0xff]
      %v2589 = vld [vmem:[%s169 + $0x360] sm:$0xff]
      %v2590 = vld [vmem:[%s169 + $0x368] sm:$0xff]
      %v2591 = vld [vmem:[%s169 + $0x370] sm:$0xff]
      %v2592 = vld [vmem:[%s169 + $0x378] sm:$0xff]
      %v2593 = vld [vmem:[%s169 + $0x380] sm:$0xff]
      %v2594 = vld [vmem:[%s169 + $0x388] sm:$0xff]
      %v2595 = vld [vmem:[%s169 + $0x390] sm:$0xff]
      %v2596 = vld [vmem:[%s169 + $0x398] sm:$0xff]
      %v2597 = vld [vmem:[%s169 + $0x3a0] sm:$0xff]
      %v2598 = vld [vmem:[%s169 + $0x3a8] sm:$0xff]
      %v2599 = vld [vmem:[%s169 + $0x3b0] sm:$0xff]
      %v2600 = vld [vmem:[%s169 + $0x3b8] sm:$0xff]
      %v2601 = vld [vmem:[%s169 + $0x3c0] sm:$0xff]
      %v2602 = vld [vmem:[%s169 + $0x3c8] sm:$0xff]
      %v2603 = vld [vmem:[%s169 + $0x3d0] sm:$0xff]
      %v2604 = vld [vmem:[%s169 + $0x3d8] sm:$0xff]
      %v2605 = vld [vmem:[%s169 + $0x3e0] sm:$0xff]
      %v2606 = vld [vmem:[%s169 + $0x3e8] sm:$0xff]
      %v2607 = vld [vmem:[%s169 + $0x3f0] sm:$0xff]
      %v2608 = vld [vmem:[%s169 + $0x3f8] sm:$0xff]
      %v2609 = vld [vmem:[%s169 + $0x400] sm:$0xff]
      %v2610 = vld [vmem:[%s169 + $0x408] sm:$0xff]
      %v2611 = vld [vmem:[%s169 + $0x410] sm:$0xff]
      %v2612 = vld [vmem:[%s169 + $0x418] sm:$0xff]
      %v2613 = vld [vmem:[%s169 + $0x420] sm:$0xff]
      %v2614 = vld [vmem:[%s169 + $0x428] sm:$0xff]
      %v2615 = vld [vmem:[%s169 + $0x430] sm:$0xff]
      %v2616 = vld [vmem:[%s169 + $0x438] sm:$0xff]
      %v2617 = vld [vmem:[%s169 + $0x440] sm:$0xff]
      %v2618 = vld [vmem:[%s169 + $0x448] sm:$0xff]
      %v2619 = vld [vmem:[%s169 + $0x450] sm:$0xff]
      %v2620 = vld [vmem:[%s169 + $0x458] sm:$0xff]
      %v2621 = vld [vmem:[%s169 + $0x460] sm:$0xff]
      %v2622 = vld [vmem:[%s169 + $0x468] sm:$0xff]
      %v2623 = vld [vmem:[%s169 + $0x470] sm:$0xff]
      %v2624 = vld [vmem:[%s169 + $0x478] sm:$0xff]
      %v2625 = vld [vmem:[%s169 + $0x480] sm:$0xff]
      %v2626 = vld [vmem:[%s169 + $0x488] sm:$0xff]
      %v2627 = vld [vmem:[%s169 + $0x490] sm:$0xff]
      %v2628 = vld [vmem:[%s169 + $0x498] sm:$0xff]
      %v2629 = vld [vmem:[%s169 + $0x4a0] sm:$0xff]
      %v2630 = vld [vmem:[%s169 + $0x4a8] sm:$0xff]
      %v2631 = vld [vmem:[%s169 + $0x4b0] sm:$0xff]
      %v2632 = vld [vmem:[%s169 + $0x4b8] sm:$0xff]
      %v2633 = vld [vmem:[%s169 + $0x4c0] sm:$0xff]
      %v2634 = vld [vmem:[%s169 + $0x4c8] sm:$0xff]
      %v2635 = vld [vmem:[%s169 + $0x4d0] sm:$0xff]
      %v2636 = vld [vmem:[%s169 + $0x4d8] sm:$0xff]
      %v2637 = vld [vmem:[%s169 + $0x4e0] sm:$0xff]
      %v2638 = vld [vmem:[%s169 + $0x4e8] sm:$0xff]
      %v2639 = vld [vmem:[%s169 + $0x4f0] sm:$0xff]
      %v2640 = vld [vmem:[%s169 + $0x4f8] sm:$0xff]
      %v2641 = vld [vmem:[%s169 + $0x500] sm:$0xff]
      %v2642 = vld [vmem:[%s169 + $0x508] sm:$0xff]
      %v2643 = vld [vmem:[%s169 + $0x510] sm:$0xff]
      %v2644 = vld [vmem:[%s169 + $0x518] sm:$0xff]
      %v2645 = vld [vmem:[%s169 + $0x520] sm:$0xff]
      %v2646 = vld [vmem:[%s169 + $0x528] sm:$0xff]
      %v2647 = vld [vmem:[%s169 + $0x530] sm:$0xff]
      %v2648 = vld [vmem:[%s169 + $0x538] sm:$0xff]
      %v2649 = vld [vmem:[%s169 + $0x540] sm:$0xff]
      %v2650 = vld [vmem:[%s169 + $0x548] sm:$0xff]
      %v2651 = vld [vmem:[%s169 + $0x550] sm:$0xff]
      %v2652 = vld [vmem:[%s169 + $0x558] sm:$0xff]
      %v2653 = vld [vmem:[%s169 + $0x560] sm:$0xff]
      %v2654 = vld [vmem:[%s169 + $0x568] sm:$0xff]
      %v2655 = vld [vmem:[%s169 + $0x570] sm:$0xff]
      %v2656 = vld [vmem:[%s169 + $0x578] sm:$0xff]
      %v2657 = vld [vmem:[%s169 + $0x580] sm:$0xff]
      %v2658 = vld [vmem:[%s169 + $0x588] sm:$0xff]
      %v2659 = vld [vmem:[%s169 + $0x590] sm:$0xff]
      %v2660 = vld [vmem:[%s169 + $0x598] sm:$0xff]
      %v2661 = vld [vmem:[%s169 + $0x5a0] sm:$0xff]
      %v2662 = vld [vmem:[%s169 + $0x5a8] sm:$0xff]
      %v2663 = vld [vmem:[%s169 + $0x5b0] sm:$0xff]
      %v2664 = vld [vmem:[%s169 + $0x5b8] sm:$0xff]
      %v2665 = vld [vmem:[%s169 + $0x5c0] sm:$0xff]
      %v2666 = vld [vmem:[%s169 + $0x5c8] sm:$0xff]
      %v2667 = vld [vmem:[%s169 + $0x5d0] sm:$0xff]
      %v2668 = vld [vmem:[%s169 + $0x5d8] sm:$0xff]
      %v2669 = vld [vmem:[%s169 + $0x5e0] sm:$0xff]
      %v2670 = vld [vmem:[%s169 + $0x5e8] sm:$0xff]
      %v2671 = vld [vmem:[%s169 + $0x5f0] sm:$0xff]
      %v2672 = vld [vmem:[%s169 + $0x5f8] sm:$0xff]
      %v2673 = vld [vmem:[%s169 + $0x600] sm:$0xff]
      %v2674 = vld [vmem:[%s169 + $0x608] sm:$0xff]
      %v2675 = vld [vmem:[%s169 + $0x610] sm:$0xff]
      %v2676 = vld [vmem:[%s169 + $0x618] sm:$0xff]
      %v2677 = vld [vmem:[%s169 + $0x620] sm:$0xff]
      %v2678 = vld [vmem:[%s169 + $0x628] sm:$0xff]
      %v2679 = vld [vmem:[%s169 + $0x630] sm:$0xff]
      %v2680 = vld [vmem:[%s169 + $0x638] sm:$0xff]
      %v2681 = vld [vmem:[%s169 + $0x640] sm:$0xff]
      %v2682 = vld [vmem:[%s169 + $0x648] sm:$0xff]
      %v2683 = vld [vmem:[%s169 + $0x650] sm:$0xff]
      %v2684 = vld [vmem:[%s169 + $0x658] sm:$0xff]
      %v2685 = vld [vmem:[%s169 + $0x660] sm:$0xff]
      %v2686 = vld [vmem:[%s169 + $0x668] sm:$0xff]
      %v2687 = vld [vmem:[%s169 + $0x670] sm:$0xff]
      %v2688 = vld [vmem:[%s169 + $0x678] sm:$0xff]
      %v2689 = vld [vmem:[%s169 + $0x680] sm:$0xff]
      %v2690 = vld [vmem:[%s169 + $0x688] sm:$0xff]
      %v2691 = vld [vmem:[%s169 + $0x690] sm:$0xff]
      %v2692 = vld [vmem:[%s169 + $0x698] sm:$0xff]
      %v2693 = vld [vmem:[%s169 + $0x6a0] sm:$0xff]
      %v2694 = vld [vmem:[%s169 + $0x6a8] sm:$0xff]
      %v2695 = vld [vmem:[%s169 + $0x6b0] sm:$0xff]
      %v2696 = vld [vmem:[%s169 + $0x6b8] sm:$0xff]
      %2697 = vmatprep.subr.mxu0 0.0
      %2698 = vmatpush1.msra.mxu0 %v2193
      %2699 = vmatprep.subr.mxu0 0.0
      %2700 = vmatpush1.msra.mxu0 %v2194
      %2701 = vmatprep.subr.mxu0 0.0
      %2702 = vmatpush1.msra.mxu0 %v2195
      %2703 = vmatprep.subr.mxu0 0.0
      %2704 = vmatpush1.msra.mxu0 %v2196
      %2705 = vmatprep.subr.mxu0 0.0
      %2706 = vmatpush1.msra.mxu0 %v2197
      %2707 = vmatprep.subr.mxu0 0.0
      %2708 = vmatpush1.msra.mxu0 %v2198
      %2709 = vmatprep.subr.mxu0 0.0
      %2710 = vmatpush1.msra.mxu0 %v2199
      %2711 = vmatprep.subr.mxu0 0.0
      %2712 = vmatpush1.msra.mxu0 %v2200
      %2713 = vmatprep.subr.mxu0 0.0
      %2714 = vmatpush1.msra.mxu0 %v2201
      %2715 = vmatprep.subr.mxu0 0.0
      %2716 = vmatpush1.msra.mxu0 %v2202
      %2717 = vmatprep.subr.mxu0 0.0
      %2718 = vmatpush1.msra.mxu0 %v2203
      %2719 = vmatprep.subr.mxu0 0.0
      %2720 = vmatpush1.msra.mxu0 %v2204
      %2721 = vmatprep.subr.mxu0 0.0
      %2722 = vmatpush1.msra.mxu0 %v2205
      %2723 = vmatprep.subr.mxu0 0.0
      %2724 = vmatpush1.msra.mxu0 %v2206
      %2725 = vmatprep.subr.mxu0 0.0
      %2726 = vmatpush1.msra.mxu0 %v2207
      %2727 = vmatprep.subr.mxu0 0.0
      %2728 = vmatpush1.msra.mxu0 %v2208
      %2729 = vmatprep.subr.mxu0 0.0
      %2730 = vmatpush1.msra.mxu0 %v2209
      %2731 = vmatprep.subr.mxu0 0.0
      %2732 = vmatpush1.msra.mxu0 %v2210
      %2733 = vmatprep.subr.mxu0 0.0
      %2734 = vmatpush1.msra.mxu0 %v2211
      %2735 = vmatprep.subr.mxu0 0.0
      %2736 = vmatpush1.msra.mxu0 %v2212
      %2737 = vmatprep.subr.mxu0 0.0
      %2738 = vmatpush1.msra.mxu0 %v2213
      %2739 = vmatprep.subr.mxu0 0.0
      %2740 = vmatpush1.msra.mxu0 %v2214
      %2741 = vmatprep.subr.mxu0 0.0
      %2742 = vmatpush1.msra.mxu0 %v2215
      %2743 = vmatprep.subr.mxu0 0.0
      %2744 = vmatpush1.msra.mxu0 %v2216
      %2745 = vmatprep.subr.mxu0 0.0
      %2746 = vmatpush1.msra.mxu0 %v2217
      %2747 = vmatprep.subr.mxu0 0.0
      %2748 = vmatpush1.msra.mxu0 %v2218
      %2749 = vmatprep.subr.mxu0 0.0
      %2750 = vmatpush1.msra.mxu0 %v2219
      %2751 = vmatprep.subr.mxu0 0.0
      %2752 = vmatpush1.msra.mxu0 %v2220
      %2753 = vmatprep.subr.mxu0 0.0
      %2754 = vmatpush1.msra.mxu0 %v2221
      %2755 = vmatprep.subr.mxu0 0.0
      %2756 = vmatpush1.msra.mxu0 %v2222
      %2757 = vmatprep.subr.mxu0 0.0
      %2758 = vmatpush1.msra.mxu0 %v2223
      %2759 = vmatprep.subr.mxu0 0.0
      %2760 = vmatpush1.msra.mxu0 %v2224
      %2761 = vmatprep.mubr.f32.mxu0 %v2482
      %2762 = vmatmul.mubr.f32.gmra.mrb[0].mxu0 %v2481
      %v2763 = vpop.f32.mrb[0].mxu0
      %v2764 = vadd.f32 0.0, %v2763
      %v2765 = vpop.f32.mrb[0].mxu0
      %2766 = vmatprep.mubr.f32.mxu0 %v2500
      %2767 = vmatmul.mubr.f32.gmra.mrb[0].mxu0 %v2499
      %v2768 = vpop.f32.mrb[0].mxu0
      %v2769 = vadd.f32 0.0, %v2768
      %v2770 = vpop.f32.mrb[0].mxu0
      %2771 = vmatprep.mubr.f32.mxu0 %v2518
      %2772 = vmatmul.mubr.f32.gmra.mrb[0].mxu0 %v2517
      %v2773 = vpop.f32.mrb[0].mxu0
      %v2774 = vadd.f32 0.0, %v2773
      %v2775 = vpop.f32.mrb[0].mxu0
      %2776 = vmatprep.mubr.f32.mxu0 %v2536
      %2777 = vmatmul.mubr.f32.gmra.mrb[0].mxu0 %v2535
      %v2778 = vpop.f32.mrb[0].mxu0
      %v2779 = vadd.f32 0.0, %v2778
      %v2780 = vpop.f32.mrb[0].mxu0
      %2781 = vmatprep.mubr.f32.mxu0 %v2554
      %2782 = vmatmul.mubr.f32.gmra.mrb[0].mxu0 %v2553
      %v2783 = vpop.f32.mrb[0].mxu0
      %v2784 = vadd.f32 0.0, %v2783
      %v2785 = vpop.f32.mrb[0].mxu0
      %2786 = vmatprep.mubr.f32.mxu0 %v2572
      %2787 = vmatmul.mubr.f32.gmra.mrb[0].mxu0 %v2571
      %v2788 = vpop.f32.mrb[0].mxu0
      %v2789 = vadd.f32 0.0, %v2788
      %v2790 = vpop.f32.mrb[0].mxu0
      %2791 = vmatprep.mubr.f32.mxu0 %v2590
      %2792 = vmatmul.mubr.f32.gmra.mrb[0].mxu0 %v2589
      %v2793 = vpop.f32.mrb[0].mxu0
      %v2794 = vadd.f32 0.0, %v2793
      %v2795 = vpop.f32.mrb[0].mxu0
      %2796 = vmatprep.mubr.f32.mxu0 %v2608
      %2797 = vmatmul.mubr.f32.gmra.mrb[0].mxu0 %v2607
      %v2798 = vpop.f32.mrb[0].mxu0
      %v2799 = vadd.f32 0.0, %v2798
      %v2800 = vpop.f32.mrb[0].mxu0
      %2801 = vmatprep.mubr.f32.mxu0 %v2626
      %2802 = vmatmul.mubr.f32.gmra.mrb[0].mxu0 %v2625
      %v2803 = vpop.f32.mrb[0].mxu0
      %v2804 = vadd.f32 0.0, %v2803
      %v2805 = vpop.f32.mrb[0].mxu0
      %2806 = vmatprep.mubr.f32.mxu0 %v2644
      %2807 = vmatmul.mubr.f32.gmra.mrb[0].mxu0 %v2643
      %v2808 = vpop.f32.mrb[0].mxu0
      %v2809 = vadd.f32 0.0, %v2808
      %v2810 = vpop.f32.mrb[0].mxu0
      %2811 = vmatprep.mubr.f32.mxu0 %v2662
      %2812 = vmatmul.mubr.f32.gmra.mrb[0].mxu0 %v2661
      %v2813 = vpop.f32.mrb[0].mxu0
      %v2814 = vadd.f32 0.0, %v2813
      %v2815 = vpop.f32.mrb[0].mxu0
      %2816 = vmatprep.mubr.f32.mxu0 %v2680
      %2817 = vmatmul.mubr.f32.gmra.mrb[0].mxu0 %v2679
      %v2818 = vpop.f32.mrb[0].mxu0
      %v2819 = vadd.f32 0.0, %v2818
      %v2820 = vpop.f32.mrb[0].mxu0
      %2821 = vdwg.mxu0
      %2822 = vmatprep.subr.mxu0 0.0
      %2823 = vmatpush1.msra.mxu0 %v2225
      %2824 = vmatprep.subr.mxu0 0.0
      %2825 = vmatpush1.msra.mxu0 %v2226
      %2826 = vmatprep.subr.mxu0 0.0
      %2827 = vmatpush1.msra.mxu0 %v2227
      %2828 = vmatprep.subr.mxu0 0.0
      %2829 = vmatpush1.msra.mxu0 %v2228
      %2830 = vmatprep.subr.mxu0 0.0
      %2831 = vmatpush1.msra.mxu0 %v2229
      %2832 = vmatprep.subr.mxu0 0.0
      %2833 = vmatpush1.msra.mxu0 %v2230
      %2834 = vmatprep.subr.mxu0 0.0
      %2835 = vmatpush1.msra.mxu0 %v2231
      %2836 = vmatprep.subr.mxu0 0.0
      %2837 = vmatpush1.msra.mxu0 %v2232
      %2838 = vmatprep.subr.mxu0 0.0
      %2839 = vmatpush1.msra.mxu0 %v2233
      %2840 = vmatprep.subr.mxu0 0.0
      %2841 = vmatpush1.msra.mxu0 %v2234
      %2842 = vmatprep.subr.mxu0 0.0
      %2843 = vmatpush1.msra.mxu0 %v2235
      %2844 = vmatprep.subr.mxu0 0.0
      %2845 = vmatpush1.msra.mxu0 %v2236
      %2846 = vmatprep.subr.mxu0 0.0
      %2847 = vmatpush1.msra.mxu0 %v2237
      %2848 = vmatprep.subr.mxu0 0.0
      %2849 = vmatpush1.msra.mxu0 %v2238
      %2850 = vmatprep.subr.mxu0 0.0
      %2851 = vmatpush1.msra.mxu0 %v2239
      %2852 = vmatprep.subr.mxu0 0.0
      %2853 = vmatpush1.msra.mxu0 %v2240
      %2854 = vmatprep.subr.mxu0 0.0
      %2855 = vmatpush1.msra.mxu0 %v2241
      %2856 = vmatprep.subr.mxu0 0.0
      %2857 = vmatpush1.msra.mxu0 %v2242
      %2858 = vmatprep.subr.mxu0 0.0
      %2859 = vmatpush1.msra.mxu0 %v2243
      %2860 = vmatprep.subr.mxu0 0.0
      %2861 = vmatpush1.msra.mxu0 %v2244
      %2862 = vmatprep.subr.mxu0 0.0
      %2863 = vmatpush1.msra.mxu0 %v2245
      %2864 = vmatprep.subr.mxu0 0.0
      %2865 = vmatpush1.msra.mxu0 %v2246
      %2866 = vmatprep.subr.mxu0 0.0
      %2867 = vmatpush1.msra.mxu0 %v2247
      %2868 = vmatprep.subr.mxu0 0.0
      %2869 = vmatpush1.msra.mxu0 %v2248
      %2870 = vmatprep.subr.mxu0 0.0
      %2871 = vmatpush1.msra.mxu0 %v2249
      %2872 = vmatprep.subr.mxu0 0.0
      %2873 = vmatpush1.msra.mxu0 %v2250
      %2874 = vmatprep.subr.mxu0 0.0
      %2875 = vmatpush1.msra.mxu0 %v2251
      %2876 = vmatprep.subr.mxu0 0.0
      %2877 = vmatpush1.msra.mxu0 %v2252
      %2878 = vmatprep.subr.mxu0 0.0
      %2879 = vmatpush1.msra.mxu0 %v2253
      %2880 = vmatprep.subr.mxu0 0.0
      %2881 = vmatpush1.msra.mxu0 %v2254
      %2882 = vmatprep.subr.mxu0 0.0
      %2883 = vmatpush1.msra.mxu0 %v2255
      %2884 = vmatprep.subr.mxu0 0.0
      %2885 = vmatpush1.msra.mxu0 %v2256
      %2886 = vmatprep.mubr.f32.mxu0 %v2484
      %2887 = vmatmul.mubr.f32.gmra.mrb[0].mxu0 %v2483
      %v2888 = vpop.f32.mrb[0].mxu0
      %v2889 = vadd.f32 %v2764, %v2888
      %v2890 = vpop.f32.mrb[0].mxu0
      %2891 = vmatprep.mubr.f32.mxu0 %v2502
      %2892 = vmatmul.mubr.f32.gmra.mrb[0].mxu0 %v2501
      %v2893 = vpop.f32.mrb[0].mxu0
      %v2894 = vadd.f32 %v2769, %v2893
      %v2895 = vpop.f32.mrb[0].mxu0
      %2896 = vmatprep.mubr.f32.mxu0 %v2520
      %2897 = vmatmul.mubr.f32.gmra.mrb[0].mxu0 %v2519
      %v2898 = vpop.f32.mrb[0].mxu0
      %v2899 = vadd.f32 %v2774, %v2898
      %v2900 = vpop.f32.mrb[0].mxu0
      %2901 = vmatprep.mubr.f32.mxu0 %v2538
      %2902 = vmatmul.mubr.f32.gmra.mrb[0].mxu0 %v2537
      %v2903 = vpop.f32.mrb[0].mxu0
      %v2904 = vadd.f32 %v2779, %v2903
      %v2905 = vpop.f32.mrb[0].mxu0
      %2906 = vmatprep.mubr.f32.mxu0 %v2556
      %2907 = vmatmul.mubr.f32.gmra.mrb[0].mxu0 %v2555
      %v2908 = vpop.f32.mrb[0].mxu0
      %v2909 = vadd.f32 %v2784, %v2908
      %v2910 = vpop.f32.mrb[0].mxu0
      %2911 = vmatprep.mubr.f32.mxu0 %v2574
      %2912 = vmatmul.mubr.f32.gmra.mrb[0].mxu0 %v2573
      %v2913 = vpop.f32.mrb[0].mxu0
      %v2914 = vadd.f32 %v2789, %v2913
      %v2915 = vpop.f32.mrb[0].mxu0
      %2916 = vmatprep.mubr.f32.mxu0 %v2592
      %2917 = vmatmul.mubr.f32.gmra.mrb[0].mxu0 %v2591
      %v2918 = vpop.f32.mrb[0].mxu0
      %v2919 = vadd.f32 %v2794, %v2918
      %v2920 = vpop.f32.mrb[0].mxu0
      %2921 = vmatprep.mubr.f32.mxu0 %v2610
      %2922 = vmatmul.mubr.f32.gmra.mrb[0].mxu0 %v2609
      %v2923 = vpop.f32.mrb[0].mxu0
      %v2924 = vadd.f32 %v2799, %v2923
      %v2925 = vpop.f32.mrb[0].mxu0
      %2926 = vmatprep.mubr.f32.mxu0 %v2628
      %2927 = vmatmul.mubr.f32.gmra.mrb[0].mxu0 %v2627
      %v2928 = vpop.f32.mrb[0].mxu0
      %v2929 = vadd.f32 %v2804, %v2928
      %v2930 = vpop.f32.mrb[0].mxu0
      %2931 = vmatprep.mubr.f32.mxu0 %v2646
      %2932 = vmatmul.mubr.f32.gmra.mrb[0].mxu0 %v2645
      %v2933 = vpop.f32.mrb[0].mxu0
      %v2934 = vadd.f32 %v2809, %v2933
      %v2935 = vpop.f32.mrb[0].mxu0
      %2936 = vmatprep.mubr.f32.mxu0 %v2664
      %2937 = vmatmul.mubr.f32.gmra.mrb[0].mxu0 %v2663
      %v2938 = vpop.f32.mrb[0].mxu0
      %v2939 = vadd.f32 %v2814, %v2938
      %v2940 = vpop.f32.mrb[0].mxu0
      %2941 = vmatprep.mubr.f32.mxu0 %v2682
      %2942 = vmatmul.mubr.f32.gmra.mrb[0].mxu0 %v2681
      %v2943 = vpop.f32.mrb[0].mxu0
      %v2944 = vadd.f32 %v2819, %v2943
      %v2945 = vpop.f32.mrb[0].mxu0
      %2946 = vdwg.mxu0
      %2947 = vmatprep.subr.mxu0 0.0
      %2948 = vmatpush1.msra.mxu0 %v2257
      %2949 = vmatprep.subr.mxu0 0.0
      %2950 = vmatpush1.msra.mxu0 %v2258
      %2951 = vmatprep.subr.mxu0 0.0
      %2952 = vmatpush1.msra.mxu0 %v2259
      %2953 = vmatprep.subr.mxu0 0.0
      %2954 = vmatpush1.msra.mxu0 %v2260
      %2955 = vmatprep.subr.mxu0 0.0
      %2956 = vmatpush1.msra.mxu0 %v2261
      %2957 = vmatprep.subr.mxu0 0.0
      %2958 = vmatpush1.msra.mxu0 %v2262
      %2959 = vmatprep.subr.mxu0 0.0
      %2960 = vmatpush1.msra.mxu0 %v2263
      %2961 = vmatprep.subr.mxu0 0.0
      %2962 = vmatpush1.msra.mxu0 %v2264
      %2963 = vmatprep.subr.mxu0 0.0
      %2964 = vmatpush1.msra.mxu0 %v2265
      %2965 = vmatprep.subr.mxu0 0.0
      %2966 = vmatpush1.msra.mxu0 %v2266
      %2967 = vmatprep.subr.mxu0 0.0
      %2968 = vmatpush1.msra.mxu0 %v2267
      %2969 = vmatprep.subr.mxu0 0.0
      %2970 = vmatpush1.msra.mxu0 %v2268
      %2971 = vmatprep.subr.mxu0 0.0
      %2972 = vmatpush1.msra.mxu0 %v2269
      %2973 = vmatprep.subr.mxu0 0.0
      %2974 = vmatpush1.msra.mxu0 %v2270
      %2975 = vmatprep.subr.mxu0 0.0
      %2976 = vmatpush1.msra.mxu0 %v2271
      %2977 = vmatprep.subr.mxu0 0.0
      %2978 = vmatpush1.msra.mxu0 %v2272
      %2979 = vmatprep.subr.mxu0 0.0
      %2980 = vmatpush1.msra.mxu0 %v2273
      %2981 = vmatprep.subr.mxu0 0.0
      %2982 = vmatpush1.msra.mxu0 %v2274
      %2983 = vmatprep.subr.mxu0 0.0
      %2984 = vmatpush1.msra.mxu0 %v2275
      %2985 = vmatprep.subr.mxu0 0.0
      %2986 = vmatpush1.msra.mxu0 %v2276
      %2987 = vmatprep.subr.mxu0 0.0
      %2988 = vmatpush1.msra.mxu0 %v2277
      %2989 = vmatprep.subr.mxu0 0.0
      %2990 = vmatpush1.msra.mxu0 %v2278
      %2991 = vmatprep.subr.mxu0 0.0
      %2992 = vmatpush1.msra.mxu0 %v2279
      %2993 = vmatprep.subr.mxu0 0.0
      %2994 = vmatpush1.msra.mxu0 %v2280
      %2995 = vmatprep.subr.mxu0 0.0
      %2996 = vmatpush1.msra.mxu0 %v2281
      %2997 = vmatprep.subr.mxu0 0.0
      %2998 = vmatpush1.msra.mxu0 %v2282
      %2999 = vmatprep.subr.mxu0 0.0
      %3000 = vmatpush1.msra.mxu0 %v2283
      %3001 = vmatprep.subr.mxu0 0.0
      %3002 = vmatpush1.msra.mxu0 %v2284
      %3003 = vmatprep.subr.mxu0 0.0
      %3004 = vmatpush1.msra.mxu0 %v2285
      %3005 = vmatprep.subr.mxu0 0.0
      %3006 = vmatpush1.msra.mxu0 %v2286
      %3007 = vmatprep.subr.mxu0 0.0
      %3008 = vmatpush1.msra.mxu0 %v2287
      %3009 = vmatprep.subr.mxu0 0.0
      %3010 = vmatpush1.msra.mxu0 %v2288
      %3011 = vmatprep.mubr.f32.mxu0 %v2486
      %3012 = vmatmul.mubr.f32.gmra.mrb[0].mxu0 %v2485
      %v3013 = vpop.f32.mrb[0].mxu0
      %v3014 = vadd.f32 %v2889, %v3013
      %v3015 = vpop.f32.mrb[0].mxu0
      %3016 = vmatprep.mubr.f32.mxu0 %v2504
      %3017 = vmatmul.mubr.f32.gmra.mrb[0].mxu0 %v2503
      %v3018 = vpop.f32.mrb[0].mxu0
      %v3019 = vadd.f32 %v2894, %v3018
      %v3020 = vpop.f32.mrb[0].mxu0
      %3021 = vmatprep.mubr.f32.mxu0 %v2522
      %3022 = vmatmul.mubr.f32.gmra.mrb[0].mxu0 %v2521
      %v3023 = vpop.f32.mrb[0].mxu0
      %v3024 = vadd.f32 %v2899, %v3023
      %v3025 = vpop.f32.mrb[0].mxu0
      %3026 = vmatprep.mubr.f32.mxu0 %v2540
      %3027 = vmatmul.mubr.f32.gmra.mrb[0].mxu0 %v2539
      %v3028 = vpop.f32.mrb[0].mxu0
      %v3029 = vadd.f32 %v2904, %v3028
      %v3030 = vpop.f32.mrb[0].mxu0
      %3031 = vmatprep.mubr.f32.mxu0 %v2558
      %3032 = vmatmul.mubr.f32.gmra.mrb[0].mxu0 %v2557
      %v3033 = vpop.f32.mrb[0].mxu0
      %v3034 = vadd.f32 %v2909, %v3033
      %v3035 = vpop.f32.mrb[0].mxu0
      %3036 = vmatprep.mubr.f32.mxu0 %v2576
      %3037 = vmatmul.mubr.f32.gmra.mrb[0].mxu0 %v2575
      %v3038 = vpop.f32.mrb[0].mxu0
      %v3039 = vadd.f32 %v2914, %v3038
      %v3040 = vpop.f32.mrb[0].mxu0
      %3041 = vmatprep.mubr.f32.mxu0 %v2594
      %3042 = vmatmul.mubr.f32.gmra.mrb[0].mxu0 %v2593
      %v3043 = vpop.f32.mrb[0].mxu0
      %v3044 = vadd.f32 %v2919, %v3043
      %v3045 = vpop.f32.mrb[0].mxu0
      %3046 = vmatprep.mubr.f32.mxu0 %v2612
      %3047 = vmatmul.mubr.f32.gmra.mrb[0].mxu0 %v2611
      %v3048 = vpop.f32.mrb[0].mxu0
      %v3049 = vadd.f32 %v2924, %v3048
      %v3050 = vpop.f32.mrb[0].mxu0
      %3051 = vmatprep.mubr.f32.mxu0 %v2630
      %3052 = vmatmul.mubr.f32.gmra.mrb[0].mxu0 %v2629
      %v3053 = vpop.f32.mrb[0].mxu0
      %v3054 = vadd.f32 %v2929, %v3053
      %v3055 = vpop.f32.mrb[0].mxu0
      %3056 = vmatprep.mubr.f32.mxu0 %v2648
      %3057 = vmatmul.mubr.f32.gmra.mrb[0].mxu0 %v2647
      %v3058 = vpop.f32.mrb[0].mxu0
      %v3059 = vadd.f32 %v2934, %v3058
      %v3060 = vpop.f32.mrb[0].mxu0
      %3061 = vmatprep.mubr.f32.mxu0 %v2666
      %3062 = vmatmul.mubr.f32.gmra.mrb[0].mxu0 %v2665
      %v3063 = vpop.f32.mrb[0].mxu0
      %v3064 = vadd.f32 %v2939, %v3063
      %v3065 = vpop.f32.mrb[0].mxu0
      %3066 = vmatprep.mubr.f32.mxu0 %v2684
      %3067 = vmatmul.mubr.f32.gmra.mrb[0].mxu0 %v2683
      %v3068 = vpop.f32.mrb[0].mxu0
      %v3069 = vadd.f32 %v2944, %v3068
      %v3070 = vpop.f32.mrb[0].mxu0
      %3071 = vdwg.mxu0
      %3072 = vmatprep.subr.mxu0 0.0
      %3073 = vmatpush1.msra.mxu0 %v2289
      %3074 = vmatprep.subr.mxu0 0.0
      %3075 = vmatpush1.msra.mxu0 %v2290
      %3076 = vmatprep.subr.mxu0 0.0
      %3077 = vmatpush1.msra.mxu0 %v2291
      %3078 = vmatprep.subr.mxu0 0.0
      %3079 = vmatpush1.msra.mxu0 %v2292
      %3080 = vmatprep.subr.mxu0 0.0
      %3081 = vmatpush1.msra.mxu0 %v2293
      %3082 = vmatprep.subr.mxu0 0.0
      %3083 = vmatpush1.msra.mxu0 %v2294
      %3084 = vmatprep.subr.mxu0 0.0
      %3085 = vmatpush1.msra.mxu0 %v2295
      %3086 = vmatprep.subr.mxu0 0.0
      %3087 = vmatpush1.msra.mxu0 %v2296
      %3088 = vmatprep.subr.mxu0 0.0
      %3089 = vmatpush1.msra.mxu0 %v2297
      %3090 = vmatprep.subr.mxu0 0.0
      %3091 = vmatpush1.msra.mxu0 %v2298
      %3092 = vmatprep.subr.mxu0 0.0
      %3093 = vmatpush1.msra.mxu0 %v2299
      %3094 = vmatprep.subr.mxu0 0.0
      %3095 = vmatpush1.msra.mxu0 %v2300
      %3096 = vmatprep.subr.mxu0 0.0
      %3097 = vmatpush1.msra.mxu0 %v2301
      %3098 = vmatprep.subr.mxu0 0.0
      %3099 = vmatpush1.msra.mxu0 %v2302
      %3100 = vmatprep.subr.mxu0 0.0
      %3101 = vmatpush1.msra.mxu0 %v2303
      %3102 = vmatprep.subr.mxu0 0.0
      %3103 = vmatpush1.msra.mxu0 %v2304
      %3104 = vmatprep.subr.mxu0 0.0
      %3105 = vmatpush1.msra.mxu0 %v2305
      %3106 = vmatprep.subr.mxu0 0.0
      %3107 = vmatpush1.msra.mxu0 %v2306
      %3108 = vmatprep.subr.mxu0 0.0
      %3109 = vmatpush1.msra.mxu0 %v2307
      %3110 = vmatprep.subr.mxu0 0.0
      %3111 = vmatpush1.msra.mxu0 %v2308
      %3112 = vmatprep.subr.mxu0 0.0
      %3113 = vmatpush1.msra.mxu0 %v2309
      %3114 = vmatprep.subr.mxu0 0.0
      %3115 = vmatpush1.msra.mxu0 %v2310
      %3116 = vmatprep.subr.mxu0 0.0
      %3117 = vmatpush1.msra.mxu0 %v2311
      %3118 = vmatprep.subr.mxu0 0.0
      %3119 = vmatpush1.msra.mxu0 %v2312
      %3120 = vmatprep.subr.mxu0 0.0
      %3121 = vmatpush1.msra.mxu0 %v2313
      %3122 = vmatprep.subr.mxu0 0.0
      %3123 = vmatpush1.msra.mxu0 %v2314
      %3124 = vmatprep.subr.mxu0 0.0
      %3125 = vmatpush1.msra.mxu0 %v2315
      %3126 = vmatprep.subr.mxu0 0.0
      %3127 = vmatpush1.msra.mxu0 %v2316
      %3128 = vmatprep.subr.mxu0 0.0
      %3129 = vmatpush1.msra.mxu0 %v2317
      %3130 = vmatprep.subr.mxu0 0.0
      %3131 = vmatpush1.msra.mxu0 %v2318
      %3132 = vmatprep.subr.mxu0 0.0
      %3133 = vmatpush1.msra.mxu0 %v2319
      %3134 = vmatprep.subr.mxu0 0.0
      %3135 = vmatpush1.msra.mxu0 %v2320
      %3136 = vmatprep.mubr.f32.mxu0 %v2488
      %3137 = vmatmul.mubr.f32.gmra.mrb[0].mxu0 %v2487
      %v3138 = vpop.f32.mrb[0].mxu0
      %v3139 = vadd.f32 %v3014, %v3138
      %v3140 = vpop.f32.mrb[0].mxu0
      %3141 = vmatprep.mubr.f32.mxu0 %v2506
      %3142 = vmatmul.mubr.f32.gmra.mrb[0].mxu0 %v2505
      %v3143 = vpop.f32.mrb[0].mxu0
      %v3144 = vadd.f32 %v3019, %v3143
      %v3145 = vpop.f32.mrb[0].mxu0
      %3146 = vmatprep.mubr.f32.mxu0 %v2524
      %3147 = vmatmul.mubr.f32.gmra.mrb[0].mxu0 %v2523
      %v3148 = vpop.f32.mrb[0].mxu0
      %v3149 = vadd.f32 %v3024, %v3148
      %v3150 = vpop.f32.mrb[0].mxu0
      %3151 = vmatprep.mubr.f32.mxu0 %v2542
      %3152 = vmatmul.mubr.f32.gmra.mrb[0].mxu0 %v2541
      %v3153 = vpop.f32.mrb[0].mxu0
      %v3154 = vadd.f32 %v3029, %v3153
      %v3155 = vpop.f32.mrb[0].mxu0
      %3156 = vmatprep.mubr.f32.mxu0 %v2560
      %3157 = vmatmul.mubr.f32.gmra.mrb[0].mxu0 %v2559
      %v3158 = vpop.f32.mrb[0].mxu0
      %v3159 = vadd.f32 %v3034, %v3158
      %v3160 = vpop.f32.mrb[0].mxu0
      %3161 = vmatprep.mubr.f32.mxu0 %v2578
      %3162 = vmatmul.mubr.f32.gmra.mrb[0].mxu0 %v2577
      %v3163 = vpop.f32.mrb[0].mxu0
      %v3164 = vadd.f32 %v3039, %v3163
      %v3165 = vpop.f32.mrb[0].mxu0
      %3166 = vmatprep.mubr.f32.mxu0 %v2596
      %3167 = vmatmul.mubr.f32.gmra.mrb[0].mxu0 %v2595
      %v3168 = vpop.f32.mrb[0].mxu0
      %v3169 = vadd.f32 %v3044, %v3168
      %v3170 = vpop.f32.mrb[0].mxu0
      %3171 = vmatprep.mubr.f32.mxu0 %v2614
      %3172 = vmatmul.mubr.f32.gmra.mrb[0].mxu0 %v2613
      %v3173 = vpop.f32.mrb[0].mxu0
      %v3174 = vadd.f32 %v3049, %v3173
      %v3175 = vpop.f32.mrb[0].mxu0
      %3176 = vmatprep.mubr.f32.mxu0 %v2632
      %3177 = vmatmul.mubr.f32.gmra.mrb[0].mxu0 %v2631
      %v3178 = vpop.f32.mrb[0].mxu0
      %v3179 = vadd.f32 %v3054, %v3178
      %v3180 = vpop.f32.mrb[0].mxu0
      %3181 = vmatprep.mubr.f32.mxu0 %v2650
      %3182 = vmatmul.mubr.f32.gmra.mrb[0].mxu0 %v2649
      %v3183 = vpop.f32.mrb[0].mxu0
      %v3184 = vadd.f32 %v3059, %v3183
      %v3185 = vpop.f32.mrb[0].mxu0
      %3186 = vmatprep.mubr.f32.mxu0 %v2668
      %3187 = vmatmul.mubr.f32.gmra.mrb[0].mxu0 %v2667
      %v3188 = vpop.f32.mrb[0].mxu0
      %v3189 = vadd.f32 %v3064, %v3188
      %v3190 = vpop.f32.mrb[0].mxu0
      %3191 = vmatprep.mubr.f32.mxu0 %v2686
      %3192 = vmatmul.mubr.f32.gmra.mrb[0].mxu0 %v2685
      %v3193 = vpop.f32.mrb[0].mxu0
      %v3194 = vadd.f32 %v3069, %v3193
      %v3195 = vpop.f32.mrb[0].mxu0
      %3196 = vdwg.mxu0
      %3197 = vmatprep.subr.mxu0 0.0
      %3198 = vmatpush1.msra.mxu0 %v2321
      %3199 = vmatprep.subr.mxu0 0.0
      %3200 = vmatpush1.msra.mxu0 %v2322
      %3201 = vmatprep.subr.mxu0 0.0
      %3202 = vmatpush1.msra.mxu0 %v2323
      %3203 = vmatprep.subr.mxu0 0.0
      %3204 = vmatpush1.msra.mxu0 %v2324
      %3205 = vmatprep.subr.mxu0 0.0
      %3206 = vmatpush1.msra.mxu0 %v2325
      %3207 = vmatprep.subr.mxu0 0.0
      %3208 = vmatpush1.msra.mxu0 %v2326
      %3209 = vmatprep.subr.mxu0 0.0
      %3210 = vmatpush1.msra.mxu0 %v2327
      %3211 = vmatprep.subr.mxu0 0.0
      %3212 = vmatpush1.msra.mxu0 %v2328
      %3213 = vmatprep.subr.mxu0 0.0
      %3214 = vmatpush1.msra.mxu0 %v2329
      %3215 = vmatprep.subr.mxu0 0.0
      %3216 = vmatpush1.msra.mxu0 %v2330
      %3217 = vmatprep.subr.mxu0 0.0
      %3218 = vmatpush1.msra.mxu0 %v2331
      %3219 = vmatprep.subr.mxu0 0.0
      %3220 = vmatpush1.msra.mxu0 %v2332
      %3221 = vmatprep.subr.mxu0 0.0
      %3222 = vmatpush1.msra.mxu0 %v2333
      %3223 = vmatprep.subr.mxu0 0.0
      %3224 = vmatpush1.msra.mxu0 %v2334
      %3225 = vmatprep.subr.mxu0 0.0
      %3226 = vmatpush1.msra.mxu0 %v2335
      %3227 = vmatprep.subr.mxu0 0.0
      %3228 = vmatpush1.msra.mxu0 %v2336
      %3229 = vmatprep.subr.mxu0 0.0
      %3230 = vmatpush1.msra.mxu0 %v2337
      %3231 = vmatprep.subr.mxu0 0.0
      %3232 = vmatpush1.msra.mxu0 %v2338
      %3233 = vmatprep.subr.mxu0 0.0
      %3234 = vmatpush1.msra.mxu0 %v2339
      %3235 = vmatprep.subr.mxu0 0.0
      %3236 = vmatpush1.msra.mxu0 %v2340
      %3237 = vmatprep.subr.mxu0 0.0
      %3238 = vmatpush1.msra.mxu0 %v2341
      %3239 = vmatprep.subr.mxu0 0.0
      %3240 = vmatpush1.msra.mxu0 %v2342
      %3241 = vmatprep.subr.mxu0 0.0
      %3242 = vmatpush1.msra.mxu0 %v2343
      %3243 = vmatprep.subr.mxu0 0.0
      %3244 = vmatpush1.msra.mxu0 %v2344
      %3245 = vmatprep.subr.mxu0 0.0
      %3246 = vmatpush1.msra.mxu0 %v2345
      %3247 = vmatprep.subr.mxu0 0.0
      %3248 = vmatpush1.msra.mxu0 %v2346
      %3249 = vmatprep.subr.mxu0 0.0
      %3250 = vmatpush1.msra.mxu0 %v2347
      %3251 = vmatprep.subr.mxu0 0.0
      %3252 = vmatpush1.msra.mxu0 %v2348
      %3253 = vmatprep.subr.mxu0 0.0
      %3254 = vmatpush1.msra.mxu0 %v2349
      %3255 = vmatprep.subr.mxu0 0.0
      %3256 = vmatpush1.msra.mxu0 %v2350
      %3257 = vmatprep.subr.mxu0 0.0
      %3258 = vmatpush1.msra.mxu0 %v2351
      %3259 = vmatprep.subr.mxu0 0.0
      %3260 = vmatpush1.msra.mxu0 %v2352
      %3261 = vmatprep.mubr.f32.mxu0 %v2490
      %3262 = vmatmul.mubr.f32.gmra.mrb[0].mxu0 %v2489
      %v3263 = vpop.f32.mrb[0].mxu0
      %v3264 = vadd.f32 %v3139, %v3263
      %v3265 = vpop.f32.mrb[0].mxu0
      %3266 = vmatprep.mubr.f32.mxu0 %v2508
      %3267 = vmatmul.mubr.f32.gmra.mrb[0].mxu0 %v2507
      %v3268 = vpop.f32.mrb[0].mxu0
      %v3269 = vadd.f32 %v3144, %v3268
      %v3270 = vpop.f32.mrb[0].mxu0
      %3271 = vmatprep.mubr.f32.mxu0 %v2526
      %3272 = vmatmul.mubr.f32.gmra.mrb[0].mxu0 %v2525
      %v3273 = vpop.f32.mrb[0].mxu0
      %v3274 = vadd.f32 %v3149, %v3273
      %v3275 = vpop.f32.mrb[0].mxu0
      %3276 = vmatprep.mubr.f32.mxu0 %v2544
      %3277 = vmatmul.mubr.f32.gmra.mrb[0].mxu0 %v2543
      %v3278 = vpop.f32.mrb[0].mxu0
      %v3279 = vadd.f32 %v3154, %v3278
      %v3280 = vpop.f32.mrb[0].mxu0
      %3281 = vmatprep.mubr.f32.mxu0 %v2562
      %3282 = vmatmul.mubr.f32.gmra.mrb[0].mxu0 %v2561
      %v3283 = vpop.f32.mrb[0].mxu0
      %v3284 = vadd.f32 %v3159, %v3283
      %v3285 = vpop.f32.mrb[0].mxu0
      %3286 = vmatprep.mubr.f32.mxu0 %v2580
      %3287 = vmatmul.mubr.f32.gmra.mrb[0].mxu0 %v2579
      %v3288 = vpop.f32.mrb[0].mxu0
      %v3289 = vadd.f32 %v3164, %v3288
      %v3290 = vpop.f32.mrb[0].mxu0
      %3291 = vmatprep.mubr.f32.mxu0 %v2598
      %3292 = vmatmul.mubr.f32.gmra.mrb[0].mxu0 %v2597
      %v3293 = vpop.f32.mrb[0].mxu0
      %v3294 = vadd.f32 %v3169, %v3293
      %v3295 = vpop.f32.mrb[0].mxu0
      %3296 = vmatprep.mubr.f32.mxu0 %v2616
      %3297 = vmatmul.mubr.f32.gmra.mrb[0].mxu0 %v2615
      %v3298 = vpop.f32.mrb[0].mxu0
      %v3299 = vadd.f32 %v3174, %v3298
      %v3300 = vpop.f32.mrb[0].mxu0
      %3301 = vmatprep.mubr.f32.mxu0 %v2634
      %3302 = vmatmul.mubr.f32.gmra.mrb[0].mxu0 %v2633
      %v3303 = vpop.f32.mrb[0].mxu0
      %v3304 = vadd.f32 %v3179, %v3303
      %v3305 = vpop.f32.mrb[0].mxu0
      %3306 = vmatprep.mubr.f32.mxu0 %v2652
      %3307 = vmatmul.mubr.f32.gmra.mrb[0].mxu0 %v2651
      %v3308 = vpop.f32.mrb[0].mxu0
      %v3309 = vadd.f32 %v3184, %v3308
      %v3310 = vpop.f32.mrb[0].mxu0
      %3311 = vmatprep.mubr.f32.mxu0 %v2670
      %3312 = vmatmul.mubr.f32.gmra.mrb[0].mxu0 %v2669
      %v3313 = vpop.f32.mrb[0].mxu0
      %v3314 = vadd.f32 %v3189, %v3313
      %v3315 = vpop.f32.mrb[0].mxu0
      %3316 = vmatprep.mubr.f32.mxu0 %v2688
      %3317 = vmatmul.mubr.f32.gmra.mrb[0].mxu0 %v2687
      %v3318 = vpop.f32.mrb[0].mxu0
      %v3319 = vadd.f32 %v3194, %v3318
      %v3320 = vpop.f32.mrb[0].mxu0
      %3321 = vdwg.mxu0
      %3322 = vmatprep.subr.mxu0 0.0
      %3323 = vmatpush1.msra.mxu0 %v2353
      %3324 = vmatprep.subr.mxu0 0.0
      %3325 = vmatpush1.msra.mxu0 %v2354
      %3326 = vmatprep.subr.mxu0 0.0
      %3327 = vmatpush1.msra.mxu0 %v2355
      %3328 = vmatprep.subr.mxu0 0.0
      %3329 = vmatpush1.msra.mxu0 %v2356
      %3330 = vmatprep.subr.mxu0 0.0
      %3331 = vmatpush1.msra.mxu0 %v2357
      %3332 = vmatprep.subr.mxu0 0.0
      %3333 = vmatpush1.msra.mxu0 %v2358
      %3334 = vmatprep.subr.mxu0 0.0
      %3335 = vmatpush1.msra.mxu0 %v2359
      %3336 = vmatprep.subr.mxu0 0.0
      %3337 = vmatpush1.msra.mxu0 %v2360
      %3338 = vmatprep.subr.mxu0 0.0
      %3339 = vmatpush1.msra.mxu0 %v2361
      %3340 = vmatprep.subr.mxu0 0.0
      %3341 = vmatpush1.msra.mxu0 %v2362
      %3342 = vmatprep.subr.mxu0 0.0
      %3343 = vmatpush1.msra.mxu0 %v2363
      %3344 = vmatprep.subr.mxu0 0.0
      %3345 = vmatpush1.msra.mxu0 %v2364
      %3346 = vmatprep.subr.mxu0 0.0
      %3347 = vmatpush1.msra.mxu0 %v2365
      %3348 = vmatprep.subr.mxu0 0.0
      %3349 = vmatpush1.msra.mxu0 %v2366
      %3350 = vmatprep.subr.mxu0 0.0
      %3351 = vmatpush1.msra.mxu0 %v2367
      %3352 = vmatprep.subr.mxu0 0.0
      %3353 = vmatpush1.msra.mxu0 %v2368
      %3354 = vmatprep.subr.mxu0 0.0
      %3355 = vmatpush1.msra.mxu0 %v2369
      %3356 = vmatprep.subr.mxu0 0.0
      %3357 = vmatpush1.msra.mxu0 %v2370
      %3358 = vmatprep.subr.mxu0 0.0
      %3359 = vmatpush1.msra.mxu0 %v2371
      %3360 = vmatprep.subr.mxu0 0.0
      %3361 = vmatpush1.msra.mxu0 %v2372
      %3362 = vmatprep.subr.mxu0 0.0
      %3363 = vmatpush1.msra.mxu0 %v2373
      %3364 = vmatprep.subr.mxu0 0.0
      %3365 = vmatpush1.msra.mxu0 %v2374
      %3366 = vmatprep.subr.mxu0 0.0
      %3367 = vmatpush1.msra.mxu0 %v2375
      %3368 = vmatprep.subr.mxu0 0.0
      %3369 = vmatpush1.msra.mxu0 %v2376
      %3370 = vmatprep.subr.mxu0 0.0
      %3371 = vmatpush1.msra.mxu0 %v2377
      %3372 = vmatprep.subr.mxu0 0.0
      %3373 = vmatpush1.msra.mxu0 %v2378
      %3374 = vmatprep.subr.mxu0 0.0
      %3375 = vmatpush1.msra.mxu0 %v2379
      %3376 = vmatprep.subr.mxu0 0.0
      %3377 = vmatpush1.msra.mxu0 %v2380
      %3378 = vmatprep.subr.mxu0 0.0
      %3379 = vmatpush1.msra.mxu0 %v2381
      %3380 = vmatprep.subr.mxu0 0.0
      %3381 = vmatpush1.msra.mxu0 %v2382
      %3382 = vmatprep.subr.mxu0 0.0
      %3383 = vmatpush1.msra.mxu0 %v2383
      %3384 = vmatprep.subr.mxu0 0.0
      %3385 = vmatpush1.msra.mxu0 %v2384
      %3386 = vmatprep.mubr.f32.mxu0 %v2492
      %3387 = vmatmul.mubr.f32.gmra.mrb[0].mxu0 %v2491
      %v3388 = vpop.f32.mrb[0].mxu0
      %v3389 = vadd.f32 %v3264, %v3388
      %v3390 = vpop.f32.mrb[0].mxu0
      %3391 = vmatprep.mubr.f32.mxu0 %v2510
      %3392 = vmatmul.mubr.f32.gmra.mrb[0].mxu0 %v2509
      %v3393 = vpop.f32.mrb[0].mxu0
      %v3394 = vadd.f32 %v3269, %v3393
      %v3395 = vpop.f32.mrb[0].mxu0
      %3396 = vmatprep.mubr.f32.mxu0 %v2528
      %3397 = vmatmul.mubr.f32.gmra.mrb[0].mxu0 %v2527
      %v3398 = vpop.f32.mrb[0].mxu0
      %v3399 = vadd.f32 %v3274, %v3398
      %v3400 = vpop.f32.mrb[0].mxu0
      %3401 = vmatprep.mubr.f32.mxu0 %v2546
      %3402 = vmatmul.mubr.f32.gmra.mrb[0].mxu0 %v2545
      %v3403 = vpop.f32.mrb[0].mxu0
      %v3404 = vadd.f32 %v3279, %v3403
      %v3405 = vpop.f32.mrb[0].mxu0
      %3406 = vmatprep.mubr.f32.mxu0 %v2564
      %3407 = vmatmul.mubr.f32.gmra.mrb[0].mxu0 %v2563
      %v3408 = vpop.f32.mrb[0].mxu0
      %v3409 = vadd.f32 %v3284, %v3408
      %v3410 = vpop.f32.mrb[0].mxu0
      %3411 = vmatprep.mubr.f32.mxu0 %v2582
      %3412 = vmatmul.mubr.f32.gmra.mrb[0].mxu0 %v2581
      %v3413 = vpop.f32.mrb[0].mxu0
      %v3414 = vadd.f32 %v3289, %v3413
      %v3415 = vpop.f32.mrb[0].mxu0
      %3416 = vmatprep.mubr.f32.mxu0 %v2600
      %3417 = vmatmul.mubr.f32.gmra.mrb[0].mxu0 %v2599
      %v3418 = vpop.f32.mrb[0].mxu0
      %v3419 = vadd.f32 %v3294, %v3418
      %v3420 = vpop.f32.mrb[0].mxu0
      %3421 = vmatprep.mubr.f32.mxu0 %v2618
      %3422 = vmatmul.mubr.f32.gmra.mrb[0].mxu0 %v2617
      %v3423 = vpop.f32.mrb[0].mxu0
      %v3424 = vadd.f32 %v3299, %v3423
      %v3425 = vpop.f32.mrb[0].mxu0
      %3426 = vmatprep.mubr.f32.mxu0 %v2636
      %3427 = vmatmul.mubr.f32.gmra.mrb[0].mxu0 %v2635
      %v3428 = vpop.f32.mrb[0].mxu0
      %v3429 = vadd.f32 %v3304, %v3428
      %v3430 = vpop.f32.mrb[0].mxu0
      %3431 = vmatprep.mubr.f32.mxu0 %v2654
      %3432 = vmatmul.mubr.f32.gmra.mrb[0].mxu0 %v2653
      %v3433 = vpop.f32.mrb[0].mxu0
      %v3434 = vadd.f32 %v3309, %v3433
      %v3435 = vpop.f32.mrb[0].mxu0
      %3436 = vmatprep.mubr.f32.mxu0 %v2672
      %3437 = vmatmul.mubr.f32.gmra.mrb[0].mxu0 %v2671
      %v3438 = vpop.f32.mrb[0].mxu0
      %v3439 = vadd.f32 %v3314, %v3438
      %v3440 = vpop.f32.mrb[0].mxu0
      %3441 = vmatprep.mubr.f32.mxu0 %v2690
      %3442 = vmatmul.mubr.f32.gmra.mrb[0].mxu0 %v2689
      %v3443 = vpop.f32.mrb[0].mxu0
      %v3444 = vadd.f32 %v3319, %v3443
      %v3445 = vpop.f32.mrb[0].mxu0
      %3446 = vdwg.mxu0
      %3447 = vmatprep.subr.mxu0 0.0
      %3448 = vmatpush1.msra.mxu0 %v2385
      %3449 = vmatprep.subr.mxu0 0.0
      %3450 = vmatpush1.msra.mxu0 %v2386
      %3451 = vmatprep.subr.mxu0 0.0
      %3452 = vmatpush1.msra.mxu0 %v2387
      %3453 = vmatprep.subr.mxu0 0.0
      %3454 = vmatpush1.msra.mxu0 %v2388
      %3455 = vmatprep.subr.mxu0 0.0
      %3456 = vmatpush1.msra.mxu0 %v2389
      %3457 = vmatprep.subr.mxu0 0.0
      %3458 = vmatpush1.msra.mxu0 %v2390
      %3459 = vmatprep.subr.mxu0 0.0
      %3460 = vmatpush1.msra.mxu0 %v2391
      %3461 = vmatprep.subr.mxu0 0.0
      %3462 = vmatpush1.msra.mxu0 %v2392
      %3463 = vmatprep.subr.mxu0 0.0
      %3464 = vmatpush1.msra.mxu0 %v2393
      %3465 = vmatprep.subr.mxu0 0.0
      %3466 = vmatpush1.msra.mxu0 %v2394
      %3467 = vmatprep.subr.mxu0 0.0
      %3468 = vmatpush1.msra.mxu0 %v2395
      %3469 = vmatprep.subr.mxu0 0.0
      %3470 = vmatpush1.msra.mxu0 %v2396
      %3471 = vmatprep.subr.mxu0 0.0
      %3472 = vmatpush1.msra.mxu0 %v2397
      %3473 = vmatprep.subr.mxu0 0.0
      %3474 = vmatpush1.msra.mxu0 %v2398
      %3475 = vmatprep.subr.mxu0 0.0
      %3476 = vmatpush1.msra.mxu0 %v2399
      %3477 = vmatprep.subr.mxu0 0.0
      %3478 = vmatpush1.msra.mxu0 %v2400
      %3479 = vmatprep.subr.mxu0 0.0
      %3480 = vmatpush1.msra.mxu0 %v2401
      %3481 = vmatprep.subr.mxu0 0.0
      %3482 = vmatpush1.msra.mxu0 %v2402
      %3483 = vmatprep.subr.mxu0 0.0
      %3484 = vmatpush1.msra.mxu0 %v2403
      %3485 = vmatprep.subr.mxu0 0.0
      %3486 = vmatpush1.msra.mxu0 %v2404
      %3487 = vmatprep.subr.mxu0 0.0
      %3488 = vmatpush1.msra.mxu0 %v2405
      %3489 = vmatprep.subr.mxu0 0.0
      %3490 = vmatpush1.msra.mxu0 %v2406
      %3491 = vmatprep.subr.mxu0 0.0
      %3492 = vmatpush1.msra.mxu0 %v2407
      %3493 = vmatprep.subr.mxu0 0.0
      %3494 = vmatpush1.msra.mxu0 %v2408
      %3495 = vmatprep.subr.mxu0 0.0
      %3496 = vmatpush1.msra.mxu0 %v2409
      %3497 = vmatprep.subr.mxu0 0.0
      %3498 = vmatpush1.msra.mxu0 %v2410
      %3499 = vmatprep.subr.mxu0 0.0
      %3500 = vmatpush1.msra.mxu0 %v2411
      %3501 = vmatprep.subr.mxu0 0.0
      %3502 = vmatpush1.msra.mxu0 %v2412
      %3503 = vmatprep.subr.mxu0 0.0
      %3504 = vmatpush1.msra.mxu0 %v2413
      %3505 = vmatprep.subr.mxu0 0.0
      %3506 = vmatpush1.msra.mxu0 %v2414
      %3507 = vmatprep.subr.mxu0 0.0
      %3508 = vmatpush1.msra.mxu0 %v2415
      %3509 = vmatprep.subr.mxu0 0.0
      %3510 = vmatpush1.msra.mxu0 %v2416
      %3511 = vmatprep.mubr.f32.mxu0 %v2494
      %3512 = vmatmul.mubr.f32.gmra.mrb[0].mxu0 %v2493
      %v3513 = vpop.f32.mrb[0].mxu0
      %v3514 = vadd.f32 %v3389, %v3513
      %v3515 = vpop.f32.mrb[0].mxu0
      %3516 = vmatprep.mubr.f32.mxu0 %v2512
      %3517 = vmatmul.mubr.f32.gmra.mrb[0].mxu0 %v2511
      %v3518 = vpop.f32.mrb[0].mxu0
      %v3519 = vadd.f32 %v3394, %v3518
      %v3520 = vpop.f32.mrb[0].mxu0
      %3521 = vmatprep.mubr.f32.mxu0 %v2530
      %3522 = vmatmul.mubr.f32.gmra.mrb[0].mxu0 %v2529
      %v3523 = vpop.f32.mrb[0].mxu0
      %v3524 = vadd.f32 %v3399, %v3523
      %v3525 = vpop.f32.mrb[0].mxu0
      %3526 = vmatprep.mubr.f32.mxu0 %v2548
      %3527 = vmatmul.mubr.f32.gmra.mrb[0].mxu0 %v2547
      %v3528 = vpop.f32.mrb[0].mxu0
      %v3529 = vadd.f32 %v3404, %v3528
      %v3530 = vpop.f32.mrb[0].mxu0
      %3531 = vmatprep.mubr.f32.mxu0 %v2566
      %3532 = vmatmul.mubr.f32.gmra.mrb[0].mxu0 %v2565
      %v3533 = vpop.f32.mrb[0].mxu0
      %v3534 = vadd.f32 %v3409, %v3533
      %v3535 = vpop.f32.mrb[0].mxu0
      %3536 = vmatprep.mubr.f32.mxu0 %v2584
      %3537 = vmatmul.mubr.f32.gmra.mrb[0].mxu0 %v2583
      %v3538 = vpop.f32.mrb[0].mxu0
      %v3539 = vadd.f32 %v3414, %v3538
      %v3540 = vpop.f32.mrb[0].mxu0
      %3541 = vmatprep.mubr.f32.mxu0 %v2602
      %3542 = vmatmul.mubr.f32.gmra.mrb[0].mxu0 %v2601
      %v3543 = vpop.f32.mrb[0].mxu0
      %v3544 = vadd.f32 %v3419, %v3543
      %v3545 = vpop.f32.mrb[0].mxu0
      %3546 = vmatprep.mubr.f32.mxu0 %v2620
      %3547 = vmatmul.mubr.f32.gmra.mrb[0].mxu0 %v2619
      %v3548 = vpop.f32.mrb[0].mxu0
      %v3549 = vadd.f32 %v3424, %v3548
      %v3550 = vpop.f32.mrb[0].mxu0
      %3551 = vmatprep.mubr.f32.mxu0 %v2638
      %3552 = vmatmul.mubr.f32.gmra.mrb[0].mxu0 %v2637
      %v3553 = vpop.f32.mrb[0].mxu0
      %v3554 = vadd.f32 %v3429, %v3553
      %v3555 = vpop.f32.mrb[0].mxu0
      %3556 = vmatprep.mubr.f32.mxu0 %v2656
      %3557 = vmatmul.mubr.f32.gmra.mrb[0].mxu0 %v2655
      %v3558 = vpop.f32.mrb[0].mxu0
      %v3559 = vadd.f32 %v3434, %v3558
      %v3560 = vpop.f32.mrb[0].mxu0
      %3561 = vmatprep.mubr.f32.mxu0 %v2674
      %3562 = vmatmul.mubr.f32.gmra.mrb[0].mxu0 %v2673
      %v3563 = vpop.f32.mrb[0].mxu0
      %v3564 = vadd.f32 %v3439, %v3563
      %v3565 = vpop.f32.mrb[0].mxu0
      %3566 = vmatprep.mubr.f32.mxu0 %v2692
      %3567 = vmatmul.mubr.f32.gmra.mrb[0].mxu0 %v2691
      %v3568 = vpop.f32.mrb[0].mxu0
      %v3569 = vadd.f32 %v3444, %v3568
      %v3570 = vpop.f32.mrb[0].mxu0
      %3571 = vdwg.mxu0
      %3572 = vmatprep.subr.mxu0 0.0
      %3573 = vmatpush1.msra.mxu0 %v2417
      %3574 = vmatprep.subr.mxu0 0.0
      %3575 = vmatpush1.msra.mxu0 %v2418
      %3576 = vmatprep.subr.mxu0 0.0
      %3577 = vmatpush1.msra.mxu0 %v2419
      %3578 = vmatprep.subr.mxu0 0.0
      %3579 = vmatpush1.msra.mxu0 %v2420
      %3580 = vmatprep.subr.mxu0 0.0
      %3581 = vmatpush1.msra.mxu0 %v2421
      %3582 = vmatprep.subr.mxu0 0.0
      %3583 = vmatpush1.msra.mxu0 %v2422
      %3584 = vmatprep.subr.mxu0 0.0
      %3585 = vmatpush1.msra.mxu0 %v2423
      %3586 = vmatprep.subr.mxu0 0.0
      %3587 = vmatpush1.msra.mxu0 %v2424
      %3588 = vmatprep.subr.mxu0 0.0
      %3589 = vmatpush1.msra.mxu0 %v2425
      %3590 = vmatprep.subr.mxu0 0.0
      %3591 = vmatpush1.msra.mxu0 %v2426
      %3592 = vmatprep.subr.mxu0 0.0
      %3593 = vmatpush1.msra.mxu0 %v2427
      %3594 = vmatprep.subr.mxu0 0.0
      %3595 = vmatpush1.msra.mxu0 %v2428
      %3596 = vmatprep.subr.mxu0 0.0
      %3597 = vmatpush1.msra.mxu0 %v2429
      %3598 = vmatprep.subr.mxu0 0.0
      %3599 = vmatpush1.msra.mxu0 %v2430
      %3600 = vmatprep.subr.mxu0 0.0
      %3601 = vmatpush1.msra.mxu0 %v2431
      %3602 = vmatprep.subr.mxu0 0.0
      %3603 = vmatpush1.msra.mxu0 %v2432
      %3604 = vmatprep.subr.mxu0 0.0
      %3605 = vmatpush1.msra.mxu0 %v2433
      %3606 = vmatprep.subr.mxu0 0.0
      %3607 = vmatpush1.msra.mxu0 %v2434
      %3608 = vmatprep.subr.mxu0 0.0
      %3609 = vmatpush1.msra.mxu0 %v2435
      %3610 = vmatprep.subr.mxu0 0.0
      %3611 = vmatpush1.msra.mxu0 %v2436
      %3612 = vmatprep.subr.mxu0 0.0
      %3613 = vmatpush1.msra.mxu0 %v2437
      %3614 = vmatprep.subr.mxu0 0.0
      %3615 = vmatpush1.msra.mxu0 %v2438
      %3616 = vmatprep.subr.mxu0 0.0
      %3617 = vmatpush1.msra.mxu0 %v2439
      %3618 = vmatprep.subr.mxu0 0.0
      %3619 = vmatpush1.msra.mxu0 %v2440
      %3620 = vmatprep.subr.mxu0 0.0
      %3621 = vmatpush1.msra.mxu0 %v2441
      %3622 = vmatprep.subr.mxu0 0.0
      %3623 = vmatpush1.msra.mxu0 %v2442
      %3624 = vmatprep.subr.mxu0 0.0
      %3625 = vmatpush1.msra.mxu0 %v2443
      %3626 = vmatprep.subr.mxu0 0.0
      %3627 = vmatpush1.msra.mxu0 %v2444
      %3628 = vmatprep.subr.mxu0 0.0
      %3629 = vmatpush1.msra.mxu0 %v2445
      %3630 = vmatprep.subr.mxu0 0.0
      %3631 = vmatpush1.msra.mxu0 %v2446
      %3632 = vmatprep.subr.mxu0 0.0
      %3633 = vmatpush1.msra.mxu0 %v2447
      %3634 = vmatprep.subr.mxu0 0.0
      %3635 = vmatpush1.msra.mxu0 %v2448
      %3636 = vmatprep.mubr.f32.mxu0 %v2496
      %3637 = vmatmul.mubr.f32.gmra.mrb[0].mxu0 %v2495
      %v3638 = vpop.f32.mrb[0].mxu0
      %v3639 = vadd.f32 %v3514, %v3638
      %v3640 = vpop.f32.mrb[0].mxu0
      %3641 = vmatprep.mubr.f32.mxu0 %v2514
      %3642 = vmatmul.mubr.f32.gmra.mrb[0].mxu0 %v2513
      %v3643 = vpop.f32.mrb[0].mxu0
      %v3644 = vadd.f32 %v3519, %v3643
      %v3645 = vpop.f32.mrb[0].mxu0
      %3646 = vmatprep.mubr.f32.mxu0 %v2532
      %3647 = vmatmul.mubr.f32.gmra.mrb[0].mxu0 %v2531
      %v3648 = vpop.f32.mrb[0].mxu0
      %v3649 = vadd.f32 %v3524, %v3648
      %v3650 = vpop.f32.mrb[0].mxu0
      %3651 = vmatprep.mubr.f32.mxu0 %v2550
      %3652 = vmatmul.mubr.f32.gmra.mrb[0].mxu0 %v2549
      %v3653 = vpop.f32.mrb[0].mxu0
      %v3654 = vadd.f32 %v3529, %v3653
      %v3655 = vpop.f32.mrb[0].mxu0
      %3656 = vmatprep.mubr.f32.mxu0 %v2568
      %3657 = vmatmul.mubr.f32.gmra.mrb[0].mxu0 %v2567
      %v3658 = vpop.f32.mrb[0].mxu0
      %v3659 = vadd.f32 %v3534, %v3658
      %v3660 = vpop.f32.mrb[0].mxu0
      %3661 = vmatprep.mubr.f32.mxu0 %v2586
      %3662 = vmatmul.mubr.f32.gmra.mrb[0].mxu0 %v2585
      %v3663 = vpop.f32.mrb[0].mxu0
      %v3664 = vadd.f32 %v3539, %v3663
      %v3665 = vpop.f32.mrb[0].mxu0
      %3666 = vmatprep.mubr.f32.mxu0 %v2604
      %3667 = vmatmul.mubr.f32.gmra.mrb[0].mxu0 %v2603
      %v3668 = vpop.f32.mrb[0].mxu0
      %v3669 = vadd.f32 %v3544, %v3668
      %v3670 = vpop.f32.mrb[0].mxu0
      %3671 = vmatprep.mubr.f32.mxu0 %v2622
      %3672 = vmatmul.mubr.f32.gmra.mrb[0].mxu0 %v2621
      %v3673 = vpop.f32.mrb[0].mxu0
      %v3674 = vadd.f32 %v3549, %v3673
      %v3675 = vpop.f32.mrb[0].mxu0
      %3676 = vmatprep.mubr.f32.mxu0 %v2640
      %3677 = vmatmul.mubr.f32.gmra.mrb[0].mxu0 %v2639
      %v3678 = vpop.f32.mrb[0].mxu0
      %v3679 = vadd.f32 %v3554, %v3678
      %v3680 = vpop.f32.mrb[0].mxu0
      %3681 = vmatprep.mubr.f32.mxu0 %v2658
      %3682 = vmatmul.mubr.f32.gmra.mrb[0].mxu0 %v2657
      %v3683 = vpop.f32.mrb[0].mxu0
      %v3684 = vadd.f32 %v3559, %v3683
      %v3685 = vpop.f32.mrb[0].mxu0
      %3686 = vmatprep.mubr.f32.mxu0 %v2676
      %3687 = vmatmul.mubr.f32.gmra.mrb[0].mxu0 %v2675
      %v3688 = vpop.f32.mrb[0].mxu0
      %v3689 = vadd.f32 %v3564, %v3688
      %v3690 = vpop.f32.mrb[0].mxu0
      %3691 = vmatprep.mubr.f32.mxu0 %v2694
      %3692 = vmatmul.mubr.f32.gmra.mrb[0].mxu0 %v2693
      %v3693 = vpop.f32.mrb[0].mxu0
      %v3694 = vadd.f32 %v3569, %v3693
      %v3695 = vpop.f32.mrb[0].mxu0
      %3696 = vdwg.mxu0
      %3697 = vmatprep.subr.mxu0 0.0
      %3698 = vmatpush1.msra.mxu0 %v2449
      %3699 = vmatprep.subr.mxu0 0.0
      %3700 = vmatpush1.msra.mxu0 %v2450
      %3701 = vmatprep.subr.mxu0 0.0
      %3702 = vmatpush1.msra.mxu0 %v2451
      %3703 = vmatprep.subr.mxu0 0.0
      %3704 = vmatpush1.msra.mxu0 %v2452
      %3705 = vmatprep.subr.mxu0 0.0
      %3706 = vmatpush1.msra.mxu0 %v2453
      %3707 = vmatprep.subr.mxu0 0.0
      %3708 = vmatpush1.msra.mxu0 %v2454
      %3709 = vmatprep.subr.mxu0 0.0
      %3710 = vmatpush1.msra.mxu0 %v2455
      %3711 = vmatprep.subr.mxu0 0.0
      %3712 = vmatpush1.msra.mxu0 %v2456
      %3713 = vmatprep.subr.mxu0 0.0
      %3714 = vmatpush1.msra.mxu0 %v2457
      %3715 = vmatprep.subr.mxu0 0.0
      %3716 = vmatpush1.msra.mxu0 %v2458
      %3717 = vmatprep.subr.mxu0 0.0
      %3718 = vmatpush1.msra.mxu0 %v2459
      %3719 = vmatprep.subr.mxu0 0.0
      %3720 = vmatpush1.msra.mxu0 %v2460
      %3721 = vmatprep.subr.mxu0 0.0
      %3722 = vmatpush1.msra.mxu0 %v2461
      %3723 = vmatprep.subr.mxu0 0.0
      %3724 = vmatpush1.msra.mxu0 %v2462
      %3725 = vmatprep.subr.mxu0 0.0
      %3726 = vmatpush1.msra.mxu0 %v2463
      %3727 = vmatprep.subr.mxu0 0.0
      %3728 = vmatpush1.msra.mxu0 %v2464
      %3729 = vmatprep.subr.mxu0 0.0
      %3730 = vmatpush1.msra.mxu0 %v2465
      %3731 = vmatprep.subr.mxu0 0.0
      %3732 = vmatpush1.msra.mxu0 %v2466
      %3733 = vmatprep.subr.mxu0 0.0
      %3734 = vmatpush1.msra.mxu0 %v2467
      %3735 = vmatprep.subr.mxu0 0.0
      %3736 = vmatpush1.msra.mxu0 %v2468
      %3737 = vmatprep.subr.mxu0 0.0
      %3738 = vmatpush1.msra.mxu0 %v2469
      %3739 = vmatprep.subr.mxu0 0.0
      %3740 = vmatpush1.msra.mxu0 %v2470
      %3741 = vmatprep.subr.mxu0 0.0
      %3742 = vmatpush1.msra.mxu0 %v2471
      %3743 = vmatprep.subr.mxu0 0.0
      %3744 = vmatpush1.msra.mxu0 %v2472
      %3745 = vmatprep.subr.mxu0 0.0
      %3746 = vmatpush1.msra.mxu0 %v2473
      %3747 = vmatprep.subr.mxu0 0.0
      %3748 = vmatpush1.msra.mxu0 %v2474
      %3749 = vmatprep.subr.mxu0 0.0
      %3750 = vmatpush1.msra.mxu0 %v2475
      %3751 = vmatprep.subr.mxu0 0.0
      %3752 = vmatpush1.msra.mxu0 %v2476
      %3753 = vmatprep.subr.mxu0 0.0
      %3754 = vmatpush1.msra.mxu0 %v2477
      %3755 = vmatprep.subr.mxu0 0.0
      %3756 = vmatpush1.msra.mxu0 %v2478
      %3757 = vmatprep.subr.mxu0 0.0
      %3758 = vmatpush1.msra.mxu0 %v2479
      %3759 = vmatprep.subr.mxu0 0.0
      %3760 = vmatpush1.msra.mxu0 %v2480
      %3761 = vmatprep.mubr.f32.mxu0 %v2498
      %3762 = vmatmul.mubr.f32.gmra.mrb[0].mxu0 %v2497
      %v3763 = vpop.f32.mrb[0].mxu0
      %v3764 = vadd.f32 %v3639, %v3763
      %v3765 = vpop.f32.mrb[0].mxu0
      %3766 = vmatprep.mubr.f32.mxu0 %v2516
      %3767 = vmatmul.mubr.f32.gmra.mrb[0].mxu0 %v2515
      %v3768 = vpop.f32.mrb[0].mxu0
      %v3769 = vadd.f32 %v3644, %v3768
      %v3770 = vpop.f32.mrb[0].mxu0
      %3771 = vmatprep.mubr.f32.mxu0 %v2534
      %3772 = vmatmul.mubr.f32.gmra.mrb[0].mxu0 %v2533
      %v3773 = vpop.f32.mrb[0].mxu0
      %v3774 = vadd.f32 %v3649, %v3773
      %v3775 = vpop.f32.mrb[0].mxu0
      %3776 = vmatprep.mubr.f32.mxu0 %v2552
      %3777 = vmatmul.mubr.f32.gmra.mrb[0].mxu0 %v2551
      %v3778 = vpop.f32.mrb[0].mxu0
      %v3779 = vadd.f32 %v3654, %v3778
      %v3780 = vpop.f32.mrb[0].mxu0
      %3781 = vmatprep.mubr.f32.mxu0 %v2570
      %3782 = vmatmul.mubr.f32.gmra.mrb[0].mxu0 %v2569
      %v3783 = vpop.f32.mrb[0].mxu0
      %v3784 = vadd.f32 %v3659, %v3783
      %v3785 = vpop.f32.mrb[0].mxu0
      %3786 = vmatprep.mubr.f32.mxu0 %v2588
      %3787 = vmatmul.mubr.f32.gmra.mrb[0].mxu0 %v2587
      %v3788 = vpop.f32.mrb[0].mxu0
      %v3789 = vadd.f32 %v3664, %v3788
      %v3790 = vpop.f32.mrb[0].mxu0
      %3791 = vmatprep.mubr.f32.mxu0 %v2606
      %3792 = vmatmul.mubr.f32.gmra.mrb[0].mxu0 %v2605
      %v3793 = vpop.f32.mrb[0].mxu0
      %v3794 = vadd.f32 %v3669, %v3793
      %v3795 = vpop.f32.mrb[0].mxu0
      %3796 = vmatprep.mubr.f32.mxu0 %v2624
      %3797 = vmatmul.mubr.f32.gmra.mrb[0].mxu0 %v2623
      %v3798 = vpop.f32.mrb[0].mxu0
      %v3799 = vadd.f32 %v3674, %v3798
      %v3800 = vpop.f32.mrb[0].mxu0
      %3801 = vmatprep.mubr.f32.mxu0 %v2642
      %3802 = vmatmul.mubr.f32.gmra.mrb[0].mxu0 %v2641
      %v3803 = vpop.f32.mrb[0].mxu0
      %v3804 = vadd.f32 %v3679, %v3803
      %v3805 = vpop.f32.mrb[0].mxu0
      %3806 = vmatprep.mubr.f32.mxu0 %v2660
      %3807 = vmatmul.mubr.f32.gmra.mrb[0].mxu0 %v2659
      %v3808 = vpop.f32.mrb[0].mxu0
      %v3809 = vadd.f32 %v3684, %v3808
      %v3810 = vpop.f32.mrb[0].mxu0
      %3811 = vmatprep.mubr.f32.mxu0 %v2678
      %3812 = vmatmul.mubr.f32.gmra.mrb[0].mxu0 %v2677
      %v3813 = vpop.f32.mrb[0].mxu0
      %v3814 = vadd.f32 %v3689, %v3813
      %v3815 = vpop.f32.mrb[0].mxu0
      %3816 = vmatprep.mubr.f32.mxu0 %v2696
      %3817 = vmatmul.mubr.f32.gmra.mrb[0].mxu0 %v2695
      %v3818 = vpop.f32.mrb[0].mxu0
      %v3819 = vadd.f32 %v3694, %v3818
      %v3820 = vpop.f32.mrb[0].mxu0
      %3821 = vdwg.mxu0
      %vm3822 = vcmask 400384
      %3823 = vst.msk [vmem:[%s175] sm:$0xff] %vm3822, %v3764
      %3824 = vst.msk [vmem:[%s175 + $0x8] sm:$0xff] %vm3822, %v3769
      %3825 = vst.msk [vmem:[%s175 + $0x10] sm:$0xff] %vm3822, %v3774
      %3826 = vst.msk [vmem:[%s175 + $0x18] sm:$0xff] %vm3822, %v3779
      %3827 = vst.msk [vmem:[%s175 + $0x20] sm:$0xff] %vm3822, %v3784
      %3828 = vst.msk [vmem:[%s175 + $0x28] sm:$0xff] %vm3822, %v3789
      %3829 = vst.msk [vmem:[%s175 + $0x30] sm:$0xff] %vm3822, %v3794
      %3830 = vst.msk [vmem:[%s175 + $0x38] sm:$0xff] %vm3822, %v3799
      %3831 = vst.msk [vmem:[%s175 + $0x40] sm:$0xff] %vm3822, %v3804
      %3832 = vst.msk [vmem:[%s175 + $0x48] sm:$0xff] %vm3822, %v3809
      %3833 = vst.msk [vmem:[%s175 + $0x50] sm:$0xff] %vm3822, %v3814
      %3834 = vst.msk [vmem:[%s175 + $0x58] sm:$0xff] %vm3822, %v3819
      %s3835 = smul.u32 12, %s14
      %p3836 = scmp.lt.s32.totalorder %s3835, 47
      %s3837 = scalar_select %p3836, %s3835, 47
      %s3838 = smul.addr %s3837, 8
      %s3839 = scalar_lea.vmem %s3, %s3838
      // Predicated region
      $region33: #{mul_conv1x1.1} parent=31 // pred_check
        %p3840 = pneg %p100
      $region34: #{mul_conv1x1.1} parent=31 // pred_check_branch
        %3842 = sbr.rel (%p3840) target = $region36
      $region35: #{mul_conv1x1.1} parent=31 // pred_region
        %s3843 = smul.u32 12, %s14
      $region36: #{mul_conv1x1.1} parent=31 // pred_fallthru
        _
    $region32: #{mul_conv1x1.1} parent=5 // pred_fallthru
      _
    %p3844 = scmp.le.s32.totalorder 2, %s9
    // Predicated region
    $region37: #{mul_conv1x1.1} parent=5 // pred_check
      %p3845 = pneg %p3844
    $region38: #{mul_conv1x1.1} parent=5 // pred_check_branch
      %3847 = sbr.rel (%p3845) target = $region40
    $region39: #{mul_conv1x1.1} parent=5 // pred_region
      %s3848 = ssub.s32 %s9, 2
      // Predicated region
      $region41: #{mul_conv1x1.1} parent=39 // pred_check
        %p3849 = pneg %p106
      $region42: #{mul_conv1x1.1} parent=39 // pred_check_branch
        %3851 = sbr.rel (%p3849) target = $region44
      $region43: #{mul_conv1x1.1} parent=39 // pred_region
        %s3852 = smul.u32 12, %s15
        %p3853 = scmp.lt.s32.totalorder %s3852, 47
        %s3854 = scalar_select %p3853, %s3852, 47
        %s3855 = smul.addr %s3854, 8
        %s3856 = scalar_lea.vmem %s3, %s3855
      $region44: #{mul_conv1x1.1} parent=39 // pred_fallthru
        _
    $region40: #{mul_conv1x1.1} parent=5 // pred_fallthru
      _
  $region6: #{mul_conv1x1.1} parent=0 // loop_footer
    %s13 = sadd.s32 1, %s9
  $region7: #{mul_conv1x1.1} parent=0 // loop_footer_branch
    %8 = sbr.rel target = $region3
  $region8: #{mul_conv1x1.1} parent=0 // loop_exit
    _

</llo_original>
